<compile_context>
chip_gen: v6e
topology: v6e:2x2x1
jax: 0.10.0
libtpu: 0.0.40
codegen_flags: <defaults>
</compile_context>

<pallas_src>
import jax
import jax.numpy as jnp
from jax.experimental import pallas as pl
from jax.experimental.pallas import tpu as pltpu

_MEAN = (0.485, 0.456, 0.406)
_STD = (0.229, 0.224, 0.225)

_LOWRES_MAX_TILE_P = 16384       # low-res pixels per grid step (lane axis)
_FULLRES_TARGET_PIXELS = 65536   # full-res pixels per grid step
_FULLRES_MAX_TW = 2048


def _round_up(x, m):
    return (x + m - 1) // m * m


def _is_v7x():
    try:
        kind = jax.devices()[0].device_kind.lower()
        return ("v7" in kind) or ("7x" in kind)
    except Exception:  # pragma: no cover
        return False


def _choose_tile(dim, align, cap):
    """Largest multiple of `align` that divides `dim` and is <= cap; else dim."""
    best = None
    d = align
    limit = min(dim, cap)
    while d <= limit:
        if dim % d == 0:
            best = d
        d += align
    return best if best is not None else dim


# --------------------------- low-res fused kernel ---------------------------
def _lowres_kernel(x_ref, we_ref, be_ref, wh_ref, bh_ref,
                   img_out_ref, params_out_ref, attn_out_ref):
    """Channel-major: x (4, T); outputs (3, T), (12, T), (1, T)."""
    x = x_ref[...]                                   # (4, T): image(3) + mask(1)
    img = x[0:3, :]                                  # (3, T)

    # Backbone stand-in (1x1-conv encoder -> ReLU -> 32-ch latent); wide-N MXU.
    latent = jnp.dot(we_ref[...], x, preferred_element_type=jnp.float32)
    latent = jnp.maximum(latent + be_ref[...], 0.0)  # (32, T)

    # Fused heads: rows 0..11 = get_params (1x1 conv 32->12), row 12 = attention.
    head = (jnp.dot(wh_ref[...], latent, preferred_element_type=jnp.float32)
            + bh_ref[...])                           # (13, T)
    params = head[0:12, :]                           # (12, T)
    attn = 1.0 / (1.0 + jnp.exp(-head[12:13, :]))    # (1, T)  sigmoid

    params_out_ref[...] = params
    attn_out_ref[...] = attn

    # PCT linear-affine transform + attention blend.  mean/std are Python
    # scalars (nothing captured).
    xn = tuple((img[k:k + 1, :] - _MEAN[k]) * (1.0 / _STD[k]) for k in range(3))
    one_m_attn = 1.0 - attn
    for c in range(3):
        acc = params[9 + c:10 + c, :]                # bias b[c]
        for k in range(3):
            acc = acc + params[3 * c + k:3 * c + k + 1, :] * xn[k]
        acc = acc * _STD[c] + _MEAN[c]               # denormalize
        acc = jnp.clip(acc, 0.0, 1.0)                # clamp=True
        img_out_ref[c:c + 1, :] = acc * attn + img[c:c + 1, :] * one_m_attn


def _fused_lowres(x_cm, we, be, wh, bh):
    c_in, p = x_cm.shape
    p_aligned = _round_up(p, 128)
    tile = min(_LOWRES_MAX_TILE_P, p_aligned)
    if _is_v7x() and tile == p_aligned and p_aligned >= 256:
        # Only v7x has 2 TensorCores to shard the parallel grid axis across.
        tile = _round_up(p_aligned // 2, 128)
    p_pad = _round_up(p, tile)
    if p_pad != p:
        x_cm = jnp.pad(x_cm, ((0, 0), (0, p_pad - p)))
    grid = (p_pad // tile,)

    def const_spec(shape):
        return pl.BlockSpec(shape, lambda i: (0, 0))

    out_shapes = (
        jax.ShapeDtypeStruct((3, p_pad), jnp.float32),
        jax.ShapeDtypeStruct((12, p_pad), jnp.float32),
        jax.ShapeDtypeStruct((1, p_pad), jnp.float32),
    )
    out, params, attn = pl.pallas_call(
        _lowres_kernel,
        out_shape=out_shapes,
        grid_spec=pltpu.PrefetchScalarGridSpec(
            num_scalar_prefetch=0,
            grid=grid,
            in_specs=[
                pl.BlockSpec((c_in, tile), lambda i: (0, i)),
                const_spec((32, 4)), const_spec((32, 1)),
                const_spec((13, 32)), const_spec((13, 1)),
            ],
            out_specs=[
                pl.BlockSpec((3, tile), lambda i: (0, i)),
                pl.BlockSpec((12, tile), lambda i: (0, i)),
                pl.BlockSpec((1, tile), lambda i: (0, i)),
            ],
        ),
        compiler_params=pltpu.CompilerParams(dimension_semantics=("parallel",)),
    )(x_cm, we, be, wh, bh)
    if p_pad != p:
        out, params, attn = out[:, :p], params[:, :p], attn[:, :p]
    return out, params, attn


# ------------------ PyTorch-convention bicubic weight matrix ----------------
def _pt_bicubic_weights(in_size, out_size):
    """(out_size, in_size) weights matching F.interpolate(mode='bicubic',
    align_corners=False): A=-0.75, half-pixel centers, border replication."""
    a = -0.75
    scale = in_size / out_size
    dst = jnp.arange(out_size, dtype=jnp.float32)
    src = (dst + 0.5) * scale - 0.5
    fl = jnp.floor(src)
    t = src - fl

    def cc1(x):  # |x| <= 1
        return ((a + 2.0) * x - (a + 3.0)) * x * x + 1.0

    def cc2(x):  # 1 < |x| < 2
        return ((a * x - 5.0 * a) * x + 8.0 * a) * x - 4.0 * a

    coeffs = jnp.stack([cc2(t + 1.0), cc1(t), cc1(1.0 - t), cc2(2.0 - t)],
                       axis=1)                                   # (out, 4)
    base = fl.astype(jnp.int32) - 1
    idx = jnp.clip(base[:, None] + jnp.arange(4)[None, :], 0, in_size - 1)
    onehot = jax.nn.one_hot(idx, in_size, dtype=jnp.float32)     # (out, 4, in)
    return jnp.sum(coeffs[:, :, None] * onehot, axis=1)          # (out, in)


# ----------------------------- full-res kernel ------------------------------
def _fullres_kernel(img_ref, plow_ref, rw_ref, cw_ref, out_img_ref, out_prm_ref):
    """Fused bicubic upsample (separable, via MXU) + PCT affine + attn blend.

    img_ref:  (1, 3, TH, TW)   full-res image tile
    plow_ref: (1, 13, H, W)    low-res params(12) + attention(1), VMEM-resident
    rw_ref:   (TH, H)          bicubic row weights for this row tile
    cw_ref:   (W, TW)          bicubic col weights for this col tile
    out_img_ref: (1, 3, TH, TW)
    out_prm_ref: (1, 12, TH, TW)
    """
    rw = rw_ref[...]
    cw = cw_ref[...]

    def interp(c):
        t = jnp.dot(rw, plow_ref[0, c], preferred_element_type=jnp.float32)
        return jnp.dot(t, cw, preferred_element_type=jnp.float32)  # (TH, TW)

    # Interpolated params go straight to the output ref (kept in VMEM, re-read
    # below) so we don't hold 13 (TH,TW) temporaries live across the blend.
    for c in range(12):
        out_prm_ref[0, c] = interp(c)
    attn = interp(12)
    one_m_attn = 1.0 - attn

    for c in range(3):
        acc = out_prm_ref[0, 9 + c]                  # bias b[c]
        for k in range(3):
            xn = (img_ref[0, k] - _MEAN[k]) * (1.0 / _STD[k])
            acc = acc + out_prm_ref[0, 3 * c + k] * xn
        acc = acc * _STD[c] + _MEAN[c]
        acc = jnp.clip(acc, 0.0, 1.0)
        out_img_ref[0, c] = acc * attn + img_ref[0, c] * one_m_attn


def _fused_fullres(image_fullres, plow):
    """image_fullres: (N,3,Hf,Wf); plow: (N,13,H,W) = [params(12), attn(1)]."""
    n, _, hf, wf = image_fullres.shape
    _, c13, h, w = plow.shape

    rw = _pt_bicubic_weights(h, hf)        # (Hf, H)
    cw = _pt_bicubic_weights(w, wf).T      # (W, Wf)

    # Pad Hf to a multiple of 8 (no whole-image fallback block).
    hf_pad = _round_up(hf, 8)
    if hf_pad != hf:
        image_fullres = jnp.pad(
            image_fullres, ((0, 0), (0, 0), (0, hf_pad - hf), (0, 0)))
        rw = jnp.pad(rw, ((0, hf_pad - hf), (0, 0)))

    tw = _choose_tile(wf, 128, _FULLRES_MAX_TW)          # lane-dense or full-W
    max_th = max(8, (_FULLRES_TARGET_PIXELS // max(tw, 1)) // 8 * 8)
    th = _choose_tile(hf_pad, 8, max_th)                 # always a multiple of 8
    grid = (n, hf_pad // th, wf // tw)

    out_img, out_prm = pl.pallas_call(
        _fullres_kernel,
        out_shape=(
            jax.ShapeDtypeStruct((n, 3, hf_pad, wf), jnp.float32),
            jax.ShapeDtypeStruct((n, 12, hf_pad, wf), jnp.float32),
        ),
        grid_spec=pltpu.PrefetchScalarGridSpec(
            num_scalar_prefetch=0,
            grid=grid,
            in_specs=[
                pl.BlockSpec((1, 3, th, tw), lambda b, i, j: (b, 0, i, j)),
                pl.BlockSpec((1, c13, h, w), lambda b, i, j: (b, 0, 0, 0)),
                pl.BlockSpec((th, h), lambda b, i, j: (i, 0)),
                pl.BlockSpec((w, tw), lambda b, i, j: (0, j)),
            ],
            out_specs=[
                pl.BlockSpec((1, 3, th, tw), lambda b, i, j: (b, 0, i, j)),
                pl.BlockSpec((1, 12, th, tw), lambda b, i, j: (b, 0, i, j)),
            ],
        ),
        compiler_params=pltpu.CompilerParams(
            dimension_semantics=("parallel", "parallel", "parallel"),
            vmem_limit_bytes=40 * 1024 * 1024),
    )(image_fullres, plow, rw, cw)

    if hf_pad != hf:
        out_img = out_img[:, :, :hf, :]
        out_prm = out_prm[:, :, :hf, :]
    return out_img, out_prm


# ---------------- layout glue (NCHW <-> channel-major (C, P)) ---------------
def _nchw_to_cm(x):
    n, c, h, w = x.shape
    return jnp.transpose(x, (1, 0, 2, 3)).reshape(c, n * h * w)


def _cm_to_nchw(x, n, h, w):
    c = x.shape[0]
    return jnp.transpose(x.reshape(c, n, h, w), (1, 0, 2, 3))


def init_params(key):
    k1, k2, k3 = jax.random.split(key, 3)
    w_enc = 0.1 * jax.random.normal(k1, (32, 4), jnp.float32)
    b_enc = jnp.zeros((32, 1), jnp.float32)
    w_attn = 0.1 * jax.random.normal(k2, (1, 32), jnp.float32)
    b_attn = jnp.zeros((1, 1), jnp.float32)
    w_p = 0.01 * jax.random.normal(k3, (12, 32), jnp.float32)
    # bias params near identity transform: A = I, b = 0
    b_p = jnp.array([1, 0, 0, 0, 1, 0, 0, 0, 1, 0, 0, 0],
                    jnp.float32).reshape(12, 1)
    return dict(w_enc=w_enc, b_enc=b_enc, w_attn=w_attn, b_attn=b_attn,
                w_p=w_p, b_p=b_p)


@jax.jit
def pct_net_forward(image, image_fullres, mask, mask_fullres, p):
    """image: (N,3,H,W), mask: (N,1,H,W); image_fullres: (N,3,Hf,Wf)."""
    n, _, h, w = image.shape

    # x = torch.cat((image, mask), dim=1)  in channel-major (C, P) layout.
    x_cm = jnp.concatenate([_nchw_to_cm(image), _nchw_to_cm(mask)], axis=0)

    # Fuse the params head and attention head into one (13,32) matmul.
    w_head = jnp.concatenate([p["w_p"], p["w_attn"]], axis=0)   # (13, 32)
    b_head = jnp.concatenate([p["b_p"], p["b_attn"]], axis=0)   # (13, 1)

    out_cm, params_cm, attn_cm = _fused_lowres(
        x_cm, p["w_enc"], p["b_enc"], w_head, b_head)

    output_lowres = _cm_to_nchw(out_cm, n, h, w)     # (N, 3, H, W)
    params = _cm_to_nchw(params_cm, n, h, w)         # (N, 12, H, W)
    attention = _cm_to_nchw(attn_cm, n, h, w)        # (N, 1, H, W)

    # Full-res: fused bicubic upsample (PyTorch convention) + PCT + attn blend.
    plow = jnp.concatenate([params, attention], axis=1)         # (N, 13, H, W)
    output_fullres, params_fullres = _fused_fullres(image_fullres, plow)

    # TODO(synk): mask_fullres is unused because use_attn=True in the reference
    # forward; the no-attn mask-blend branch is not implemented.
    del mask_fullres

    return {
        "images": output_lowres,
        "params": params,
        "attention": attention,
        "images_fullres": output_fullres,
        "params_fullres": params_fullres,
    }


if __name__ == "__main__":
    key = jax.random.PRNGKey(0)
    k_img, k_mask, k_params = jax.random.split(key, 3)

    N, H, W = 2, 16, 16
    HF, WF = 32, 32

    image = jax.random.uniform(k_img, (N, 3, H, W), jnp.float32)
    mask = (jax.random.uniform(k_mask, (N, 1, H, W), jnp.float32) > 0.5
            ).astype(jnp.float32)
    # full-resolution versions (batched-tensor branch of the forward)
    image_fullres = jax.image.resize(image, (N, 3, HF, WF), method="bilinear")
    mask_fullres = jax.image.resize(mask, (N, 1, HF, WF), method="nearest")

    params = init_params(k_params)

    outputs = pct_net_forward(image, image_fullres, mask, mask_fullres, params)
    jax.block_until_ready(outputs)

    assert outputs["images"].shape == (N, 3, H, W)
    assert outputs["params"].shape == (N, 12, H, W)
    assert outputs["attention"].shape == (N, 1, H, W)
    assert outputs["images_fullres"].shape == (N, 3, HF, WF)
    assert outputs["params_fullres"].shape == (N, 12, HF, WF)
    assert bool(jnp.all(jnp.isfinite(outputs["images"])))
    assert bool(jnp.all(jnp.isfinite(outputs["images_fullres"])))
    assert bool(jnp.all(jnp.isfinite(outputs["params_fullres"])))

    print("KERNEL_OK")
</pallas_src>

<mosaic_0001>
module attributes {stable_mosaic.version = 11 : i64} {
  func.func @_lowres_kernel(%arg0: i32, %arg1: memref<4x512xf32, #tpu.memory_space<vmem>>, %arg2: memref<32x4xf32, #tpu.memory_space<vmem>>, %arg3: memref<32x1xf32, #tpu.memory_space<vmem>>, %arg4: memref<13x32xf32, #tpu.memory_space<vmem>>, %arg5: memref<13x1xf32, #tpu.memory_space<vmem>>, %arg6: memref<3x512xf32, #tpu.memory_space<vmem>>, %arg7: memref<12x512xf32, #tpu.memory_space<vmem>>, %arg8: memref<1x512xf32, #tpu.memory_space<vmem>>) attributes {dimension_semantics = [#tpu.dimension_semantics<parallel>], iteration_bounds = array<i64: 1>, scalar_prefetch = 0 : i64, scratch_operands = 0 : i64, tpu.core_type = #tpu.core_type<tc>, window_params = [{transform_indices = @transform_0, window_bounds = array<i64: 4, 512>}, {pipeline_mode = #tpu.pipeline_mode<synchronous>, transform_indices = @transform_1, window_bounds = array<i64: 32, 4>}, {pipeline_mode = #tpu.pipeline_mode<synchronous>, transform_indices = @transform_2, window_bounds = array<i64: 32, 1>}, {pipeline_mode = #tpu.pipeline_mode<synchronous>, transform_indices = @transform_3, window_bounds = array<i64: 13, 32>}, {pipeline_mode = #tpu.pipeline_mode<synchronous>, transform_indices = @transform_4, window_bounds = array<i64: 13, 1>}, {transform_indices = @transform_5, window_bounds = array<i64: 3, 512>}, {transform_indices = @transform_6, window_bounds = array<i64: 12, 512>}, {transform_indices = @transform_7, window_bounds = array<i64: 1, 512>}]} {
    %c0 = arith.constant 0 : index
    %c0_0 = arith.constant 0 : index
    %0 = vector.load %arg1[%c0, %c0_0] : memref<4x512xf32, #tpu.memory_space<vmem>>, vector<4x512xf32>
    %1 = vector.extract_strided_slice %0 {offsets = [0, 0], sizes = [3, 512], strides = [1, 1]} : vector<4x512xf32> to vector<3x512xf32>
    %c0_1 = arith.constant 0 : index
    %c0_2 = arith.constant 0 : index
    %2 = vector.load %arg2[%c0_1, %c0_2] : memref<32x4xf32, #tpu.memory_space<vmem>>, vector<32x4xf32>
    %cst = arith.constant dense<0.000000e+00> : vector<32x512xf32>
    %3 = tpu.matmul %2, %0, %cst {dimension_numbers = #tpu.dot_dimension_numbers<[1], [0], [0], [1], [0, 0, 1, 1], [], []>} : vector<32x4xf32>, vector<4x512xf32>, vector<32x512xf32> -> vector<32x512xf32>
    %c0_3 = arith.constant 0 : index
    %c0_4 = arith.constant 0 : index
    %4 = vector.load %arg3[%c0_3, %c0_4] : memref<32x1xf32, #tpu.memory_space<vmem>>, vector<32x1xf32>
    %5 = vector.broadcast %4 : vector<32x1xf32> to vector<32x512xf32>
    %6 = arith.addf %3, %5 : vector<32x512xf32>
    %cst_5 = arith.constant 0.000000e+00 : f32
    %7 = vector.broadcast %cst_5 : f32 to vector<32x512xf32>
    %8 = arith.maximumf %6, %7 : vector<32x512xf32>
    %c0_6 = arith.constant 0 : index
    %c0_7 = arith.constant 0 : index
    %9 = vector.load %arg4[%c0_6, %c0_7] : memref<13x32xf32, #tpu.memory_space<vmem>>, vector<13x32xf32>
    %cst_8 = arith.constant dense<0.000000e+00> : vector<13x512xf32>
    %10 = tpu.matmul %9, %8, %cst_8 {dimension_numbers = #tpu.dot_dimension_numbers<[1], [0], [0], [1], [0, 0, 1, 1], [], []>} : vector<13x32xf32>, vector<32x512xf32>, vector<13x512xf32> -> vector<13x512xf32>
    %c0_9 = arith.constant 0 : index
    %c0_10 = arith.constant 0 : index
    %11 = vector.load %arg5[%c0_9, %c0_10] : memref<13x1xf32, #tpu.memory_space<vmem>>, vector<13x1xf32>
    %12 = vector.broadcast %11 : vector<13x1xf32> to vector<13x512xf32>
    %13 = arith.addf %10, %12 : vector<13x512xf32>
    %14 = vector.extract_strided_slice %13 {offsets = [0, 0], sizes = [12, 512], strides = [1, 1]} : vector<13x512xf32> to vector<12x512xf32>
    %15 = vector.extract_strided_slice %13 {offsets = [12, 0], sizes = [1, 512], strides = [1, 1]} : vector<13x512xf32> to vector<1x512xf32>
    %cst_11 = arith.constant 0.000000e+00 : f32
    %16 = vector.broadcast %cst_11 : f32 to vector<1x512xf32>
    %17 = arith.subf %16, %15 : vector<1x512xf32>
    %18 = math.exp %17 : vector<1x512xf32>
    %cst_12 = arith.constant 1.000000e+00 : f32
    %19 = vector.broadcast %cst_12 : f32 to vector<1x512xf32>
    %20 = arith.addf %19, %18 : vector<1x512xf32>
    %cst_13 = arith.constant 1.000000e+00 : f32
    %21 = vector.broadcast %cst_13 : f32 to vector<1x512xf32>
    %22 = arith.divf %21, %20 : vector<1x512xf32>
    %c0_14 = arith.constant 0 : index
    %c0_15 = arith.constant 0 : index
    %23 = vector.load %arg7[%c0_14, %c0_15] : memref<12x512xf32, #tpu.memory_space<vmem>>, vector<12x512xf32>
    tpu.vector_store %arg7[%c0_14, %c0_15], %14 {strides = array<i32>} : memref<12x512xf32, #tpu.memory_space<vmem>>, vector<12x512xf32>,
    %c0_16 = arith.constant 0 : index
    %c0_17 = arith.constant 0 : index
    %24 = vector.load %arg8[%c0_16, %c0_17] : memref<1x512xf32, #tpu.memory_space<vmem>>, vector<1x512xf32>
    tpu.vector_store %arg8[%c0_16, %c0_17], %22 {strides = array<i32>} : memref<1x512xf32, #tpu.memory_space<vmem>>, vector<1x512xf32>,
    %25 = vector.extract_strided_slice %1 {offsets = [0, 0], sizes = [1, 512], strides = [1, 1]} : vector<3x512xf32> to vector<1x512xf32>
    %cst_18 = arith.constant 4.850000e-01 : f32
    %26 = vector.broadcast %cst_18 : f32 to vector<1x512xf32>
    %27 = arith.subf %25, %26 : vector<1x512xf32>
    %cst_19 = arith.constant 4.36681223 : f32
    %28 = vector.broadcast %cst_19 : f32 to vector<1x512xf32>
    %29 = arith.mulf %27, %28 : vector<1x512xf32>
    %30 = vector.extract_strided_slice %1 {offsets = [1, 0], sizes = [1, 512], strides = [1, 1]} : vector<3x512xf32> to vector<1x512xf32>
    %cst_20 = arith.constant 4.560000e-01 : f32
    %31 = vector.broadcast %cst_20 : f32 to vector<1x512xf32>
    %32 = arith.subf %30, %31 : vector<1x512xf32>
    %cst_21 = arith.constant 4.46428585 : f32
    %33 = vector.broadcast %cst_21 : f32 to vector<1x512xf32>
    %34 = arith.mulf %32, %33 : vector<1x512xf32>
    %35 = vector.extract_strided_slice %1 {offsets = [2, 0], sizes = [1, 512], strides = [1, 1]} : vector<3x512xf32> to vector<1x512xf32>
    %cst_22 = arith.constant 4.060000e-01 : f32
    %36 = vector.broadcast %cst_22 : f32 to vector<1x512xf32>
    %37 = arith.subf %35, %36 : vector<1x512xf32>
    %cst_23 = arith.constant 4.44444466 : f32
    %38 = vector.broadcast %cst_23 : f32 to vector<1x512xf32>
    %39 = arith.mulf %37, %38 : vector<1x512xf32>
    %cst_24 = arith.constant 1.000000e+00 : f32
    %40 = vector.broadcast %cst_24 : f32 to vector<1x512xf32>
    %41 = arith.subf %40, %22 : vector<1x512xf32>
    %42 = vector.extract_strided_slice %14 {offsets = [9, 0], sizes = [1, 512], strides = [1, 1]} : vector<12x512xf32> to vector<1x512xf32>
    %43 = vector.extract_strided_slice %14 {offsets = [0, 0], sizes = [1, 512], strides = [1, 1]} : vector<12x512xf32> to vector<1x512xf32>
    %44 = arith.mulf %43, %29 : vector<1x512xf32>
    %45 = arith.addf %42, %44 : vector<1x512xf32>
    %46 = vector.extract_strided_slice %14 {offsets = [1, 0], sizes = [1, 512], strides = [1, 1]} : vector<12x512xf32> to vector<1x512xf32>
    %47 = arith.mulf %46, %34 : vector<1x512xf32>
    %48 = arith.addf %45, %47 : vector<1x512xf32>
    %49 = vector.extract_strided_slice %14 {offsets = [2, 0], sizes = [1, 512], strides = [1, 1]} : vector<12x512xf32> to vector<1x512xf32>
    %50 = arith.mulf %49, %39 : vector<1x512xf32>
    %51 = arith.addf %48, %50 : vector<1x512xf32>
    %cst_25 = arith.constant 2.290000e-01 : f32
    %52 = vector.broadcast %cst_25 : f32 to vector<1x512xf32>
    %53 = arith.mulf %51, %52 : vector<1x512xf32>
    %cst_26 = arith.constant 4.850000e-01 : f32
    %54 = vector.broadcast %cst_26 : f32 to vector<1x512xf32>
    %55 = arith.addf %53, %54 : vector<1x512xf32>
    %cst_27 = arith.constant 0.000000e+00 : f32
    %cst_28 = arith.constant 1.000000e+00 : f32
    %56 = vector.broadcast %cst_27 : f32 to vector<1x512xf32>
    %57 = arith.maximumf %56, %55 : vector<1x512xf32>
    %58 = vector.broadcast %cst_28 : f32 to vector<1x512xf32>
    %59 = arith.minimumf %58, %57 : vector<1x512xf32>
    %60 = arith.mulf %59, %22 : vector<1x512xf32>
    %61 = vector.extract_strided_slice %1 {offsets = [0, 0], sizes = [1, 512], strides = [1, 1]} : vector<3x512xf32> to vector<1x512xf32>
    %62 = arith.mulf %61, %41 : vector<1x512xf32>
    %63 = arith.addf %60, %62 : vector<1x512xf32>
    %c0_29 = arith.constant 0 : index
    %c0_30 = arith.constant 0 : index
    %64 = vector.load %arg6[%c0_29, %c0_30] : memref<3x512xf32, #tpu.memory_space<vmem>>, vector<1x512xf32>
    tpu.vector_store %arg6[%c0_29, %c0_30], %63 {strides = array<i32>} : memref<3x512xf32, #tpu.memory_space<vmem>>, vector<1x512xf32>,
    %65 = vector.extract_strided_slice %14 {offsets = [10, 0], sizes = [1, 512], strides = [1, 1]} : vector<12x512xf32> to vector<1x512xf32>
    %66 = vector.extract_strided_slice %14 {offsets = [3, 0], sizes = [1, 512], strides = [1, 1]} : vector<12x512xf32> to vector<1x512xf32>
    %67 = arith.mulf %66, %29 : vector<1x512xf32>
    %68 = arith.addf %65, %67 : vector<1x512xf32>
    %69 = vector.extract_strided_slice %14 {offsets = [4, 0], sizes = [1, 512], strides = [1, 1]} : vector<12x512xf32> to vector<1x512xf32>
    %70 = arith.mulf %69, %34 : vector<1x512xf32>
    %71 = arith.addf %68, %70 : vector<1x512xf32>
    %72 = vector.extract_strided_slice %14 {offsets = [5, 0], sizes = [1, 512], strides = [1, 1]} : vector<12x512xf32> to vector<1x512xf32>
    %73 = arith.mulf %72, %39 : vector<1x512xf32>
    %74 = arith.addf %71, %73 : vector<1x512xf32>
    %cst_31 = arith.constant 2.240000e-01 : f32
    %75 = vector.broadcast %cst_31 : f32 to vector<1x512xf32>
    %76 = arith.mulf %74, %75 : vector<1x512xf32>
    %cst_32 = arith.constant 4.560000e-01 : f32
    %77 = vector.broadcast %cst_32 : f32 to vector<1x512xf32>
    %78 = arith.addf %76, %77 : vector<1x512xf32>
    %cst_33 = arith.constant 0.000000e+00 : f32
    %cst_34 = arith.constant 1.000000e+00 : f32
    %79 = vector.broadcast %cst_33 : f32 to vector<1x512xf32>
    %80 = arith.maximumf %79, %78 : vector<1x512xf32>
    %81 = vector.broadcast %cst_34 : f32 to vector<1x512xf32>
    %82 = arith.minimumf %81, %80 : vector<1x512xf32>
    %83 = arith.mulf %82, %22 : vector<1x512xf32>
    %84 = vector.extract_strided_slice %1 {offsets = [1, 0], sizes = [1, 512], strides = [1, 1]} : vector<3x512xf32> to vector<1x512xf32>
    %85 = arith.mulf %84, %41 : vector<1x512xf32>
    %86 = arith.addf %83, %85 : vector<1x512xf32>
    %c1 = arith.constant 1 : index
    %c0_35 = arith.constant 0 : index
    %87 = vector.load %arg6[%c1, %c0_35] : memref<3x512xf32, #tpu.memory_space<vmem>>, vector<1x512xf32>
    tpu.vector_store %arg6[%c1, %c0_35], %86 {strides = array<i32>} : memref<3x512xf32, #tpu.memory_space<vmem>>, vector<1x512xf32>,
    %88 = vector.extract_strided_slice %14 {offsets = [11, 0], sizes = [1, 512], strides = [1, 1]} : vector<12x512xf32> to vector<1x512xf32>
    %89 = vector.extract_strided_slice %14 {offsets = [6, 0], sizes = [1, 512], strides = [1, 1]} : vector<12x512xf32> to vector<1x512xf32>
    %90 = arith.mulf %89, %29 : vector<1x512xf32>
    %91 = arith.addf %88, %90 : vector<1x512xf32>
    %92 = vector.extract_strided_slice %14 {offsets = [7, 0], sizes = [1, 512], strides = [1, 1]} : vector<12x512xf32> to vector<1x512xf32>
    %93 = arith.mulf %92, %34 : vector<1x512xf32>
    %94 = arith.addf %91, %93 : vector<1x512xf32>
    %95 = vector.extract_strided_slice %14 {offsets = [8, 0], sizes = [1, 512], strides = [1, 1]} : vector<12x512xf32> to vector<1x512xf32>
    %96 = arith.mulf %95, %39 : vector<1x512xf32>
    %97 = arith.addf %94, %96 : vector<1x512xf32>
    %cst_36 = arith.constant 2.250000e-01 : f32
    %98 = vector.broadcast %cst_36 : f32 to vector<1x512xf32>
    %99 = arith.mulf %97, %98 : vector<1x512xf32>
    %cst_37 = arith.constant 4.060000e-01 : f32
    %100 = vector.broadcast %cst_37 : f32 to vector<1x512xf32>
    %101 = arith.addf %99, %100 : vector<1x512xf32>
    %cst_38 = arith.constant 0.000000e+00 : f32
    %cst_39 = arith.constant 1.000000e+00 : f32
    %102 = vector.broadcast %cst_38 : f32 to vector<1x512xf32>
    %103 = arith.maximumf %102, %101 : vector<1x512xf32>
    %104 = vector.broadcast %cst_39 : f32 to vector<1x512xf32>
    %105 = arith.minimumf %104, %103 : vector<1x512xf32>
    %106 = arith.mulf %105, %22 : vector<1x512xf32>
    %107 = vector.extract_strided_slice %1 {offsets = [2, 0], sizes = [1, 512], strides = [1, 1]} : vector<3x512xf32> to vector<1x512xf32>
    %108 = arith.mulf %107, %41 : vector<1x512xf32>
    %109 = arith.addf %106, %108 : vector<1x512xf32>
    %c2 = arith.constant 2 : index
    %c0_40 = arith.constant 0 : index
    %110 = vector.load %arg6[%c2, %c0_40] : memref<3x512xf32, #tpu.memory_space<vmem>>, vector<1x512xf32>
    tpu.vector_store %arg6[%c2, %c0_40], %109 {strides = array<i32>} : memref<3x512xf32, #tpu.memory_space<vmem>>, vector<1x512xf32>,
    return
  }
  func.func @transform_0(%arg0: i32) -> (i32, i32) {
    %c0_i32 = arith.constant 0 : i32
    %c0_i32_0 = arith.constant 0 : i32
    return %c0_i32, %arg0 : i32, i32
  }
  func.func @transform_1(%arg0: i32) -> (i32, i32) {
    %c0_i32 = arith.constant 0 : i32
    %c0_i32_0 = arith.constant 0 : i32
    %c0_i32_1 = arith.constant 0 : i32
    return %c0_i32, %c0_i32_0 : i32, i32
  }
  func.func @transform_2(%arg0: i32) -> (i32, i32) {
    %c0_i32 = arith.constant 0 : i32
    %c0_i32_0 = arith.constant 0 : i32
    %c0_i32_1 = arith.constant 0 : i32
    return %c0_i32, %c0_i32_0 : i32, i32
  }
  func.func @transform_3(%arg0: i32) -> (i32, i32) {
    %c0_i32 = arith.constant 0 : i32
    %c0_i32_0 = arith.constant 0 : i32
    %c0_i32_1 = arith.constant 0 : i32
    return %c0_i32, %c0_i32_0 : i32, i32
  }
  func.func @transform_4(%arg0: i32) -> (i32, i32) {
    %c0_i32 = arith.constant 0 : i32
    %c0_i32_0 = arith.constant 0 : i32
    %c0_i32_1 = arith.constant 0 : i32
    return %c0_i32, %c0_i32_0 : i32, i32
  }
  func.func @transform_5(%arg0: i32) -> (i32, i32) {
    %c0_i32 = arith.constant 0 : i32
    %c0_i32_0 = arith.constant 0 : i32
    return %c0_i32, %arg0 : i32, i32
  }
  func.func @transform_6(%arg0: i32) -> (i32, i32) {
    %c0_i32 = arith.constant 0 : i32
    %c0_i32_0 = arith.constant 0 : i32
    return %c0_i32, %arg0 : i32, i32
  }
  func.func @transform_7(%arg0: i32) -> (i32, i32) {
    %c0_i32 = arith.constant 0 : i32
    %c0_i32_0 = arith.constant 0 : i32
    return %c0_i32, %arg0 : i32, i32
  }
}

module attributes {stable_mosaic.version = 11 : i64} {
  func.func @_fullres_kernel(%arg0: i32, %arg1: i32, %arg2: i32, %arg3: memref<1x3x32x32xf32, #tpu.memory_space<vmem>>, %arg4: memref<1x13x16x16xf32, #tpu.memory_space<vmem>>, %arg5: memref<32x16xf32, #tpu.memory_space<vmem>>, %arg6: memref<16x32xf32, #tpu.memory_space<vmem>>, %arg7: memref<1x3x32x32xf32, #tpu.memory_space<vmem>>, %arg8: memref<1x12x32x32xf32, #tpu.memory_space<vmem>>) attributes {dimension_semantics = [#tpu.dimension_semantics<parallel>, #tpu.dimension_semantics<parallel>, #tpu.dimension_semantics<parallel>], iteration_bounds = array<i64: 2, 1, 1>, scalar_prefetch = 0 : i64, scratch_operands = 0 : i64, tpu.core_type = #tpu.core_type<tc>, window_params = [{transform_indices = @transform_0, window_bounds = array<i64: 1, 3, 32, 32>}, {transform_indices = @transform_1, window_bounds = array<i64: 1, 13, 16, 16>}, {transform_indices = @transform_2, window_bounds = array<i64: 32, 16>}, {transform_indices = @transform_3, window_bounds = array<i64: 16, 32>}, {transform_indices = @transform_4, window_bounds = array<i64: 1, 3, 32, 32>}, {transform_indices = @transform_5, window_bounds = array<i64: 1, 12, 32, 32>}]} {
    %c0 = arith.constant 0 : index
    %c0_0 = arith.constant 0 : index
    %0 = vector.load %arg5[%c0, %c0_0] : memref<32x16xf32, #tpu.memory_space<vmem>>, vector<32x16xf32>
    %c0_1 = arith.constant 0 : index
    %c0_2 = arith.constant 0 : index
    %1 = vector.load %arg6[%c0_1, %c0_2] : memref<16x32xf32, #tpu.memory_space<vmem>>, vector<16x32xf32>
    %c0_3 = arith.constant 0 : index
    %c0_4 = arith.constant 0 : index
    %c0_5 = arith.constant 0 : index
    %c0_6 = arith.constant 0 : index
    %2 = vector.load %arg4[%c0_3, %c0_4, %c0_5, %c0_6] : memref<1x13x16x16xf32, #tpu.memory_space<vmem>>, vector<1x1x16x16xf32>
    %3 = vector.shape_cast %2 : vector<1x1x16x16xf32> to vector<16x16xf32>
    %cst = arith.constant dense<0.000000e+00> : vector<32x16xf32>
    %4 = tpu.matmul %0, %3, %cst {dimension_numbers = #tpu.dot_dimension_numbers<[1], [0], [0], [1], [0, 0, 1, 1], [], []>} : vector<32x16xf32>, vector<16x16xf32>, vector<32x16xf32> -> vector<32x16xf32>
    %cst_7 = arith.constant dense<0.000000e+00> : vector<32x32xf32>
    %5 = tpu.matmul %4, %1, %cst_7 {dimension_numbers = #tpu.dot_dimension_numbers<[1], [0], [0], [1], [0, 0, 1, 1], [], []>} : vector<32x16xf32>, vector<16x32xf32>, vector<32x32xf32> -> vector<32x32xf32>
    %c0_8 = arith.constant 0 : index
    %c0_9 = arith.constant 0 : index
    %c0_10 = arith.constant 0 : index
    %c0_11 = arith.constant 0 : index
    %6 = vector.load %arg8[%c0_8, %c0_9, %c0_10, %c0_11] : memref<1x12x32x32xf32, #tpu.memory_space<vmem>>, vector<1x1x32x32xf32>
    %7 = vector.shape_cast %6 : vector<1x1x32x32xf32> to vector<32x32xf32>
    %8 = vector.shape_cast %5 : vector<32x32xf32> to vector<1x1x32x32xf32>
    tpu.vector_store %arg8[%c0_8, %c0_9, %c0_10, %c0_11], %8 {strides = array<i32>} : memref<1x12x32x32xf32, #tpu.memory_space<vmem>>, vector<1x1x32x32xf32>,
    %c0_12 = arith.constant 0 : index
    %c1 = arith.constant 1 : index
    %c0_13 = arith.constant 0 : index
    %c0_14 = arith.constant 0 : index
    %9 = vector.load %arg4[%c0_12, %c1, %c0_13, %c0_14] : memref<1x13x16x16xf32, #tpu.memory_space<vmem>>, vector<1x1x16x16xf32>
    %10 = vector.shape_cast %9 : vector<1x1x16x16xf32> to vector<16x16xf32>
    %cst_15 = arith.constant dense<0.000000e+00> : vector<32x16xf32>
    %11 = tpu.matmul %0, %10, %cst_15 {dimension_numbers = #tpu.dot_dimension_numbers<[1], [0], [0], [1], [0, 0, 1, 1], [], []>} : vector<32x16xf32>, vector<16x16xf32>, vector<32x16xf32> -> vector<32x16xf32>
    %cst_16 = arith.constant dense<0.000000e+00> : vector<32x32xf32>
    %12 = tpu.matmul %11, %1, %cst_16 {dimension_numbers = #tpu.dot_dimension_numbers<[1], [0], [0], [1], [0, 0, 1, 1], [], []>} : vector<32x16xf32>, vector<16x32xf32>, vector<32x32xf32> -> vector<32x32xf32>
    %c0_17 = arith.constant 0 : index
    %c1_18 = arith.constant 1 : index
    %c0_19 = arith.constant 0 : index
    %c0_20 = arith.constant 0 : index
    %13 = vector.load %arg8[%c0_17, %c1_18, %c0_19, %c0_20] : memref<1x12x32x32xf32, #tpu.memory_space<vmem>>, vector<1x1x32x32xf32>
    %14 = vector.shape_cast %13 : vector<1x1x32x32xf32> to vector<32x32xf32>
    %15 = vector.shape_cast %12 : vector<32x32xf32> to vector<1x1x32x32xf32>
    tpu.vector_store %arg8[%c0_17, %c1_18, %c0_19, %c0_20], %15 {strides = array<i32>} : memref<1x12x32x32xf32, #tpu.memory_space<vmem>>, vector<1x1x32x32xf32>,
    %c0_21 = arith.constant 0 : index
    %c2 = arith.constant 2 : index
    %c0_22 = arith.constant 0 : index
    %c0_23 = arith.constant 0 : index
    %16 = vector.load %arg4[%c0_21, %c2, %c0_22, %c0_23] : memref<1x13x16x16xf32, #tpu.memory_space<vmem>>, vector<1x1x16x16xf32>
    %17 = vector.shape_cast %16 : vector<1x1x16x16xf32> to vector<16x16xf32>
    %cst_24 = arith.constant dense<0.000000e+00> : vector<32x16xf32>
    %18 = tpu.matmul %0, %17, %cst_24 {dimension_numbers = #tpu.dot_dimension_numbers<[1], [0], [0], [1], [0, 0, 1, 1], [], []>} : vector<32x16xf32>, vector<16x16xf32>, vector<32x16xf32> -> vector<32x16xf32>
    %cst_25 = arith.constant dense<0.000000e+00> : vector<32x32xf32>
    %19 = tpu.matmul %18, %1, %cst_25 {dimension_numbers = #tpu.dot_dimension_numbers<[1], [0], [0], [1], [0, 0, 1, 1], [], []>} : vector<32x16xf32>, vector<16x32xf32>, vector<32x32xf32> -> vector<32x32xf32>
    %c0_26 = arith.constant 0 : index
    %c2_27 = arith.constant 2 : index
    %c0_28 = arith.constant 0 : index
    %c0_29 = arith.constant 0 : index
    %20 = vector.load %arg8[%c0_26, %c2_27, %c0_28, %c0_29] : memref<1x12x32x32xf32, #tpu.memory_space<vmem>>, vector<1x1x32x32xf32>
    %21 = vector.shape_cast %20 : vector<1x1x32x32xf32> to vector<32x32xf32>
    %22 = vector.shape_cast %19 : vector<32x32xf32> to vector<1x1x32x32xf32>
    tpu.vector_store %arg8[%c0_26, %c2_27, %c0_28, %c0_29], %22 {strides = array<i32>} : memref<1x12x32x32xf32, #tpu.memory_space<vmem>>, vector<1x1x32x32xf32>,
    %c0_30 = arith.constant 0 : index
    %c3 = arith.constant 3 : index
    %c0_31 = arith.constant 0 : index
    %c0_32 = arith.constant 0 : index
    %23 = vector.load %arg4[%c0_30, %c3, %c0_31, %c0_32] : memref<1x13x16x16xf32, #tpu.memory_space<vmem>>, vector<1x1x16x16xf32>
    %24 = vector.shape_cast %23 : vector<1x1x16x16xf32> to vector<16x16xf32>
    %cst_33 = arith.constant dense<0.000000e+00> : vector<32x16xf32>
    %25 = tpu.matmul %0, %24, %cst_33 {dimension_numbers = #tpu.dot_dimension_numbers<[1], [0], [0], [1], [0, 0, 1, 1], [], []>} : vector<32x16xf32>, vector<16x16xf32>, vector<32x16xf32> -> vector<32x16xf32>
    %cst_34 = arith.constant dense<0.000000e+00> : vector<32x32xf32>
    %26 = tpu.matmul %25, %1, %cst_34 {dimension_numbers = #tpu.dot_dimension_numbers<[1], [0], [0], [1], [0, 0, 1, 1], [], []>} : vector<32x16xf32>, vector<16x32xf32>, vector<32x32xf32> -> vector<32x32xf32>
    %c0_35 = arith.constant 0 : index
    %c3_36 = arith.constant 3 : index
    %c0_37 = arith.constant 0 : index
    %c0_38 = arith.constant 0 : index
    %27 = vector.load %arg8[%c0_35, %c3_36, %c0_37, %c0_38] : memref<1x12x32x32xf32, #tpu.memory_space<vmem>>, vector<1x1x32x32xf32>
    %28 = vector.shape_cast %27 : vector<1x1x32x32xf32> to vector<32x32xf32>
    %29 = vector.shape_cast %26 : vector<32x32xf32> to vector<1x1x32x32xf32>
    tpu.vector_store %arg8[%c0_35, %c3_36, %c0_37, %c0_38], %29 {strides = array<i32>} : memref<1x12x32x32xf32, #tpu.memory_space<vmem>>, vector<1x1x32x32xf32>,
    %c0_39 = arith.constant 0 : index
    %c4 = arith.constant 4 : index
    %c0_40 = arith.constant 0 : index
    %c0_41 = arith.constant 0 : index
    %30 = vector.load %arg4[%c0_39, %c4, %c0_40, %c0_41] : memref<1x13x16x16xf32, #tpu.memory_space<vmem>>, vector<1x1x16x16xf32>
    %31 = vector.shape_cast %30 : vector<1x1x16x16xf32> to vector<16x16xf32>
    %cst_42 = arith.constant dense<0.000000e+00> : vector<32x16xf32>
    %32 = tpu.matmul %0, %31, %cst_42 {dimension_numbers = #tpu.dot_dimension_numbers<[1], [0], [0], [1], [0, 0, 1, 1], [], []>} : vector<32x16xf32>, vector<16x16xf32>, vector<32x16xf32> -> vector<32x16xf32>
    %cst_43 = arith.constant dense<0.000000e+00> : vector<32x32xf32>
    %33 = tpu.matmul %32, %1, %cst_43 {dimension_numbers = #tpu.dot_dimension_numbers<[1], [0], [0], [1], [0, 0, 1, 1], [], []>} : vector<32x16xf32>, vector<16x32xf32>, vector<32x32xf32> -> vector<32x32xf32>
    %c0_44 = arith.constant 0 : index
    %c4_45 = arith.constant 4 : index
    %c0_46 = arith.constant 0 : index
    %c0_47 = arith.constant 0 : index
    %34 = vector.load %arg8[%c0_44, %c4_45, %c0_46, %c0_47] : memref<1x12x32x32xf32, #tpu.memory_space<vmem>>, vector<1x1x32x32xf32>
    %35 = vector.shape_cast %34 : vector<1x1x32x32xf32> to vector<32x32xf32>
    %36 = vector.shape_cast %33 : vector<32x32xf32> to vector<1x1x32x32xf32>
    tpu.vector_store %arg8[%c0_44, %c4_45, %c0_46, %c0_47], %36 {strides = array<i32>} : memref<1x12x32x32xf32, #tpu.memory_space<vmem>>, vector<1x1x32x32xf32>,
    %c0_48 = arith.constant 0 : index
    %c5 = arith.constant 5 : index
    %c0_49 = arith.constant 0 : index
    %c0_50 = arith.constant 0 : index
    %37 = vector.load %arg4[%c0_48, %c5, %c0_49, %c0_50] : memref<1x13x16x16xf32, #tpu.memory_space<vmem>>, vector<1x1x16x16xf32>
    %38 = vector.shape_cast %37 : vector<1x1x16x16xf32> to vector<16x16xf32>
    %cst_51 = arith.constant dense<0.000000e+00> : vector<32x16xf32>
    %39 = tpu.matmul %0, %38, %cst_51 {dimension_numbers = #tpu.dot_dimension_numbers<[1], [0], [0], [1], [0, 0, 1, 1], [], []>} : vector<32x16xf32>, vector<16x16xf32>, vector<32x16xf32> -> vector<32x16xf32>
    %cst_52 = arith.constant dense<0.000000e+00> : vector<32x32xf32>
    %40 = tpu.matmul %39, %1, %cst_52 {dimension_numbers = #tpu.dot_dimension_numbers<[1], [0], [0], [1], [0, 0, 1, 1], [], []>} : vector<32x16xf32>, vector<16x32xf32>, vector<32x32xf32> -> vector<32x32xf32>
    %c0_53 = arith.constant 0 : index
    %c5_54 = arith.constant 5 : index
    %c0_55 = arith.constant 0 : index
    %c0_56 = arith.constant 0 : index
    %41 = vector.load %arg8[%c0_53, %c5_54, %c0_55, %c0_56] : memref<1x12x32x32xf32, #tpu.memory_space<vmem>>, vector<1x1x32x32xf32>
    %42 = vector.shape_cast %41 : vector<1x1x32x32xf32> to vector<32x32xf32>
    %43 = vector.shape_cast %40 : vector<32x32xf32> to vector<1x1x32x32xf32>
    tpu.vector_store %arg8[%c0_53, %c5_54, %c0_55, %c0_56], %43 {strides = array<i32>} : memref<1x12x32x32xf32, #tpu.memory_space<vmem>>, vector<1x1x32x32xf32>,
    %c0_57 = arith.constant 0 : index
    %c6 = arith.constant 6 : index
    %c0_58 = arith.constant 0 : index
    %c0_59 = arith.constant 0 : index
    %44 = vector.load %arg4[%c0_57, %c6, %c0_58, %c0_59] : memref<1x13x16x16xf32, #tpu.memory_space<vmem>>, vector<1x1x16x16xf32>
    %45 = vector.shape_cast %44 : vector<1x1x16x16xf32> to vector<16x16xf32>
    %cst_60 = arith.constant dense<0.000000e+00> : vector<32x16xf32>
    %46 = tpu.matmul %0, %45, %cst_60 {dimension_numbers = #tpu.dot_dimension_numbers<[1], [0], [0], [1], [0, 0, 1, 1], [], []>} : vector<32x16xf32>, vector<16x16xf32>, vector<32x16xf32> -> vector<32x16xf32>
    %cst_61 = arith.constant dense<0.000000e+00> : vector<32x32xf32>
    %47 = tpu.matmul %46, %1, %cst_61 {dimension_numbers = #tpu.dot_dimension_numbers<[1], [0], [0], [1], [0, 0, 1, 1], [], []>} : vector<32x16xf32>, vector<16x32xf32>, vector<32x32xf32> -> vector<32x32xf32>
    %c0_62 = arith.constant 0 : index
    %c6_63 = arith.constant 6 : index
    %c0_64 = arith.constant 0 : index
    %c0_65 = arith.constant 0 : index
    %48 = vector.load %arg8[%c0_62, %c6_63, %c0_64, %c0_65] : memref<1x12x32x32xf32, #tpu.memory_space<vmem>>, vector<1x1x32x32xf32>
    %49 = vector.shape_cast %48 : vector<1x1x32x32xf32> to vector<32x32xf32>
    %50 = vector.shape_cast %47 : vector<32x32xf32> to vector<1x1x32x32xf32>
    tpu.vector_store %arg8[%c0_62, %c6_63, %c0_64, %c0_65], %50 {strides = array<i32>} : memref<1x12x32x32xf32, #tpu.memory_space<vmem>>, vector<1x1x32x32xf32>,
    %c0_66 = arith.constant 0 : index
    %c7 = arith.constant 7 : index
    %c0_67 = arith.constant 0 : index
    %c0_68 = arith.constant 0 : index
    %51 = vector.load %arg4[%c0_66, %c7, %c0_67, %c0_68] : memref<1x13x16x16xf32, #tpu.memory_space<vmem>>, vector<1x1x16x16xf32>
    %52 = vector.shape_cast %51 : vector<1x1x16x16xf32> to vector<16x16xf32>
    %cst_69 = arith.constant dense<0.000000e+00> : vector<32x16xf32>
    %53 = tpu.matmul %0, %52, %cst_69 {dimension_numbers = #tpu.dot_dimension_numbers<[1], [0], [0], [1], [0, 0, 1, 1], [], []>} : vector<32x16xf32>, vector<16x16xf32>, vector<32x16xf32> -> vector<32x16xf32>
    %cst_70 = arith.constant dense<0.000000e+00> : vector<32x32xf32>
    %54 = tpu.matmul %53, %1, %cst_70 {dimension_numbers = #tpu.dot_dimension_numbers<[1], [0], [0], [1], [0, 0, 1, 1], [], []>} : vector<32x16xf32>, vector<16x32xf32>, vector<32x32xf32> -> vector<32x32xf32>
    %c0_71 = arith.constant 0 : index
    %c7_72 = arith.constant 7 : index
    %c0_73 = arith.constant 0 : index
    %c0_74 = arith.constant 0 : index
    %55 = vector.load %arg8[%c0_71, %c7_72, %c0_73, %c0_74] : memref<1x12x32x32xf32, #tpu.memory_space<vmem>>, vector<1x1x32x32xf32>
    %56 = vector.shape_cast %55 : vector<1x1x32x32xf32> to vector<32x32xf32>
    %57 = vector.shape_cast %54 : vector<32x32xf32> to vector<1x1x32x32xf32>
    tpu.vector_store %arg8[%c0_71, %c7_72, %c0_73, %c0_74], %57 {strides = array<i32>} : memref<1x12x32x32xf32, #tpu.memory_space<vmem>>, vector<1x1x32x32xf32>,
    %c0_75 = arith.constant 0 : index
    %c8 = arith.constant 8 : index
    %c0_76 = arith.constant 0 : index
    %c0_77 = arith.constant 0 : index
    %58 = vector.load %arg4[%c0_75, %c8, %c0_76, %c0_77] : memref<1x13x16x16xf32, #tpu.memory_space<vmem>>, vector<1x1x16x16xf32>
    %59 = vector.shape_cast %58 : vector<1x1x16x16xf32> to vector<16x16xf32>
    %cst_78 = arith.constant dense<0.000000e+00> : vector<32x16xf32>
    %60 = tpu.matmul %0, %59, %cst_78 {dimension_numbers = #tpu.dot_dimension_numbers<[1], [0], [0], [1], [0, 0, 1, 1], [], []>} : vector<32x16xf32>, vector<16x16xf32>, vector<32x16xf32> -> vector<32x16xf32>
    %cst_79 = arith.constant dense<0.000000e+00> : vector<32x32xf32>
    %61 = tpu.matmul %60, %1, %cst_79 {dimension_numbers = #tpu.dot_dimension_numbers<[1], [0], [0], [1], [0, 0, 1, 1], [], []>} : vector<32x16xf32>, vector<16x32xf32>, vector<32x32xf32> -> vector<32x32xf32>
    %c0_80 = arith.constant 0 : index
    %c8_81 = arith.constant 8 : index
    %c0_82 = arith.constant 0 : index
    %c0_83 = arith.constant 0 : index
    %62 = vector.load %arg8[%c0_80, %c8_81, %c0_82, %c0_83] : memref<1x12x32x32xf32, #tpu.memory_space<vmem>>, vector<1x1x32x32xf32>
    %63 = vector.shape_cast %62 : vector<1x1x32x32xf32> to vector<32x32xf32>
    %64 = vector.shape_cast %61 : vector<32x32xf32> to vector<1x1x32x32xf32>
    tpu.vector_store %arg8[%c0_80, %c8_81, %c0_82, %c0_83], %64 {strides = array<i32>} : memref<1x12x32x32xf32, #tpu.memory_space<vmem>>, vector<1x1x32x32xf32>,
    %c0_84 = arith.constant 0 : index
    %c9 = arith.constant 9 : index
    %c0_85 = arith.constant 0 : index
    %c0_86 = arith.constant 0 : index
    %65 = vector.load %arg4[%c0_84, %c9, %c0_85, %c0_86] : memref<1x13x16x16xf32, #tpu.memory_space<vmem>>, vector<1x1x16x16xf32>
    %66 = vector.shape_cast %65 : vector<1x1x16x16xf32> to vector<16x16xf32>
    %cst_87 = arith.constant dense<0.000000e+00> : vector<32x16xf32>
    %67 = tpu.matmul %0, %66, %cst_87 {dimension_numbers = #tpu.dot_dimension_numbers<[1], [0], [0], [1], [0, 0, 1, 1], [], []>} : vector<32x16xf32>, vector<16x16xf32>, vector<32x16xf32> -> vector<32x16xf32>
    %cst_88 = arith.constant dense<0.000000e+00> : vector<32x32xf32>
    %68 = tpu.matmul %67, %1, %cst_88 {dimension_numbers = #tpu.dot_dimension_numbers<[1], [0], [0], [1], [0, 0, 1, 1], [], []>} : vector<32x16xf32>, vector<16x32xf32>, vector<32x32xf32> -> vector<32x32xf32>
    %c0_89 = arith.constant 0 : index
    %c9_90 = arith.constant 9 : index
    %c0_91 = arith.constant 0 : index
    %c0_92 = arith.constant 0 : index
    %69 = vector.load %arg8[%c0_89, %c9_90, %c0_91, %c0_92] : memref<1x12x32x32xf32, #tpu.memory_space<vmem>>, vector<1x1x32x32xf32>
    %70 = vector.shape_cast %69 : vector<1x1x32x32xf32> to vector<32x32xf32>
    %71 = vector.shape_cast %68 : vector<32x32xf32> to vector<1x1x32x32xf32>
    tpu.vector_store %arg8[%c0_89, %c9_90, %c0_91, %c0_92], %71 {strides = array<i32>} : memref<1x12x32x32xf32, #tpu.memory_space<vmem>>, vector<1x1x32x32xf32>,
    %c0_93 = arith.constant 0 : index
    %c10 = arith.constant 10 : index
    %c0_94 = arith.constant 0 : index
    %c0_95 = arith.constant 0 : index
    %72 = vector.load %arg4[%c0_93, %c10, %c0_94, %c0_95] : memref<1x13x16x16xf32, #tpu.memory_space<vmem>>, vector<1x1x16x16xf32>
    %73 = vector.shape_cast %72 : vector<1x1x16x16xf32> to vector<16x16xf32>
    %cst_96 = arith.constant dense<0.000000e+00> : vector<32x16xf32>
    %74 = tpu.matmul %0, %73, %cst_96 {dimension_numbers = #tpu.dot_dimension_numbers<[1], [0], [0], [1], [0, 0, 1, 1], [], []>} : vector<32x16xf32>, vector<16x16xf32>, vector<32x16xf32> -> vector<32x16xf32>
    %cst_97 = arith.constant dense<0.000000e+00> : vector<32x32xf32>
    %75 = tpu.matmul %74, %1, %cst_97 {dimension_numbers = #tpu.dot_dimension_numbers<[1], [0], [0], [1], [0, 0, 1, 1], [], []>} : vector<32x16xf32>, vector<16x32xf32>, vector<32x32xf32> -> vector<32x32xf32>
    %c0_98 = arith.constant 0 : index
    %c10_99 = arith.constant 10 : index
    %c0_100 = arith.constant 0 : index
    %c0_101 = arith.constant 0 : index
    %76 = vector.load %arg8[%c0_98, %c10_99, %c0_100, %c0_101] : memref<1x12x32x32xf32, #tpu.memory_space<vmem>>, vector<1x1x32x32xf32>
    %77 = vector.shape_cast %76 : vector<1x1x32x32xf32> to vector<32x32xf32>
    %78 = vector.shape_cast %75 : vector<32x32xf32> to vector<1x1x32x32xf32>
    tpu.vector_store %arg8[%c0_98, %c10_99, %c0_100, %c0_101], %78 {strides = array<i32>} : memref<1x12x32x32xf32, #tpu.memory_space<vmem>>, vector<1x1x32x32xf32>,
    %c0_102 = arith.constant 0 : index
    %c11 = arith.constant 11 : index
    %c0_103 = arith.constant 0 : index
    %c0_104 = arith.constant 0 : index
    %79 = vector.load %arg4[%c0_102, %c11, %c0_103, %c0_104] : memref<1x13x16x16xf32, #tpu.memory_space<vmem>>, vector<1x1x16x16xf32>
    %80 = vector.shape_cast %79 : vector<1x1x16x16xf32> to vector<16x16xf32>
    %cst_105 = arith.constant dense<0.000000e+00> : vector<32x16xf32>
    %81 = tpu.matmul %0, %80, %cst_105 {dimension_numbers = #tpu.dot_dimension_numbers<[1], [0], [0], [1], [0, 0, 1, 1], [], []>} : vector<32x16xf32>, vector<16x16xf32>, vector<32x16xf32> -> vector<32x16xf32>
    %cst_106 = arith.constant dense<0.000000e+00> : vector<32x32xf32>
    %82 = tpu.matmul %81, %1, %cst_106 {dimension_numbers = #tpu.dot_dimension_numbers<[1], [0], [0], [1], [0, 0, 1, 1], [], []>} : vector<32x16xf32>, vector<16x32xf32>, vector<32x32xf32> -> vector<32x32xf32>
    %c0_107 = arith.constant 0 : index
    %c11_108 = arith.constant 11 : index
    %c0_109 = arith.constant 0 : index
    %c0_110 = arith.constant 0 : index
    %83 = vector.load %arg8[%c0_107, %c11_108, %c0_109, %c0_110] : memref<1x12x32x32xf32, #tpu.memory_space<vmem>>, vector<1x1x32x32xf32>
    %84 = vector.shape_cast %83 : vector<1x1x32x32xf32> to vector<32x32xf32>
    %85 = vector.shape_cast %82 : vector<32x32xf32> to vector<1x1x32x32xf32>
    tpu.vector_store %arg8[%c0_107, %c11_108, %c0_109, %c0_110], %85 {strides = array<i32>} : memref<1x12x32x32xf32, #tpu.memory_space<vmem>>, vector<1x1x32x32xf32>,
    %c0_111 = arith.constant 0 : index
    %c12 = arith.constant 12 : index
    %c0_112 = arith.constant 0 : index
    %c0_113 = arith.constant 0 : index
    %86 = vector.load %arg4[%c0_111, %c12, %c0_112, %c0_113] : memref<1x13x16x16xf32, #tpu.memory_space<vmem>>, vector<1x1x16x16xf32>
    %87 = vector.shape_cast %86 : vector<1x1x16x16xf32> to vector<16x16xf32>
    %cst_114 = arith.constant dense<0.000000e+00> : vector<32x16xf32>
    %88 = tpu.matmul %0, %87, %cst_114 {dimension_numbers = #tpu.dot_dimension_numbers<[1], [0], [0], [1], [0, 0, 1, 1], [], []>} : vector<32x16xf32>, vector<16x16xf32>, vector<32x16xf32> -> vector<32x16xf32>
    %cst_115 = arith.constant dense<0.000000e+00> : vector<32x32xf32>
    %89 = tpu.matmul %88, %1, %cst_115 {dimension_numbers = #tpu.dot_dimension_numbers<[1], [0], [0], [1], [0, 0, 1, 1], [], []>} : vector<32x16xf32>, vector<16x32xf32>, vector<32x32xf32> -> vector<32x32xf32>
    %cst_116 = arith.constant 1.000000e+00 : f32
    %90 = vector.broadcast %cst_116 : f32 to vector<32x32xf32>
    %91 = arith.subf %90, %89 : vector<32x32xf32>
    %c0_117 = arith.constant 0 : index
    %c9_118 = arith.constant 9 : index
    %c0_119 = arith.constant 0 : index
    %c0_120 = arith.constant 0 : index
    %92 = vector.load %arg8[%c0_117, %c9_118, %c0_119, %c0_120] : memref<1x12x32x32xf32, #tpu.memory_space<vmem>>, vector<1x1x32x32xf32>
    %93 = vector.shape_cast %92 : vector<1x1x32x32xf32> to vector<32x32xf32>
    %c0_121 = arith.constant 0 : index
    %c0_122 = arith.constant 0 : index
    %c0_123 = arith.constant 0 : index
    %c0_124 = arith.constant 0 : index
    %94 = vector.load %arg3[%c0_121, %c0_122, %c0_123, %c0_124] : memref<1x3x32x32xf32, #tpu.memory_space<vmem>>, vector<1x1x32x32xf32>
    %95 = vector.shape_cast %94 : vector<1x1x32x32xf32> to vector<32x32xf32>
    %cst_125 = arith.constant 4.850000e-01 : f32
    %96 = vector.broadcast %cst_125 : f32 to vector<32x32xf32>
    %97 = arith.subf %95, %96 : vector<32x32xf32>
    %cst_126 = arith.constant 4.36681223 : f32
    %98 = vector.broadcast %cst_126 : f32 to vector<32x32xf32>
    %99 = arith.mulf %97, %98 : vector<32x32xf32>
    %c0_127 = arith.constant 0 : index
    %c0_128 = arith.constant 0 : index
    %c0_129 = arith.constant 0 : index
    %c0_130 = arith.constant 0 : index
    %100 = vector.load %arg8[%c0_127, %c0_128, %c0_129, %c0_130] : memref<1x12x32x32xf32, #tpu.memory_space<vmem>>, vector<1x1x32x32xf32>
    %101 = vector.shape_cast %100 : vector<1x1x32x32xf32> to vector<32x32xf32>
    %102 = arith.mulf %101, %99 : vector<32x32xf32>
    %103 = arith.addf %93, %102 : vector<32x32xf32>
    %c0_131 = arith.constant 0 : index
    %c1_132 = arith.constant 1 : index
    %c0_133 = arith.constant 0 : index
    %c0_134 = arith.constant 0 : index
    %104 = vector.load %arg3[%c0_131, %c1_132, %c0_133, %c0_134] : memref<1x3x32x32xf32, #tpu.memory_space<vmem>>, vector<1x1x32x32xf32>
    %105 = vector.shape_cast %104 : vector<1x1x32x32xf32> to vector<32x32xf32>
    %cst_135 = arith.constant 4.560000e-01 : f32
    %106 = vector.broadcast %cst_135 : f32 to vector<32x32xf32>
    %107 = arith.subf %105, %106 : vector<32x32xf32>
    %cst_136 = arith.constant 4.46428585 : f32
    %108 = vector.broadcast %cst_136 : f32 to vector<32x32xf32>
    %109 = arith.mulf %107, %108 : vector<32x32xf32>
    %c0_137 = arith.constant 0 : index
    %c1_138 = arith.constant 1 : index
    %c0_139 = arith.constant 0 : index
    %c0_140 = arith.constant 0 : index
    %110 = vector.load %arg8[%c0_137, %c1_138, %c0_139, %c0_140] : memref<1x12x32x32xf32, #tpu.memory_space<vmem>>, vector<1x1x32x32xf32>
    %111 = vector.shape_cast %110 : vector<1x1x32x32xf32> to vector<32x32xf32>
    %112 = arith.mulf %111, %109 : vector<32x32xf32>
    %113 = arith.addf %103, %112 : vector<32x32xf32>
    %c0_141 = arith.constant 0 : index
    %c2_142 = arith.constant 2 : index
    %c0_143 = arith.constant 0 : index
    %c0_144 = arith.constant 0 : index
    %114 = vector.load %arg3[%c0_141, %c2_142, %c0_143, %c0_144] : memref<1x3x32x32xf32, #tpu.memory_space<vmem>>, vector<1x1x32x32xf32>
    %115 = vector.shape_cast %114 : vector<1x1x32x32xf32> to vector<32x32xf32>
    %cst_145 = arith.constant 4.060000e-01 : f32
    %116 = vector.broadcast %cst_145 : f32 to vector<32x32xf32>
    %117 = arith.subf %115, %116 : vector<32x32xf32>
    %cst_146 = arith.constant 4.44444466 : f32
    %118 = vector.broadcast %cst_146 : f32 to vector<32x32xf32>
    %119 = arith.mulf %117, %118 : vector<32x32xf32>
    %c0_147 = arith.constant 0 : index
    %c2_148 = arith.constant 2 : index
    %c0_149 = arith.constant 0 : index
    %c0_150 = arith.constant 0 : index
    %120 = vector.load %arg8[%c0_147, %c2_148, %c0_149, %c0_150] : memref<1x12x32x32xf32, #tpu.memory_space<vmem>>, vector<1x1x32x32xf32>
    %121 = vector.shape_cast %120 : vector<1x1x32x32xf32> to vector<32x32xf32>
    %122 = arith.mulf %121, %119 : vector<32x32xf32>
    %123 = arith.addf %113, %122 : vector<32x32xf32>
    %cst_151 = arith.constant 2.290000e-01 : f32
    %124 = vector.broadcast %cst_151 : f32 to vector<32x32xf32>
    %125 = arith.mulf %123, %124 : vector<32x32xf32>
    %cst_152 = arith.constant 4.850000e-01 : f32
    %126 = vector.broadcast %cst_152 : f32 to vector<32x32xf32>
    %127 = arith.addf %125, %126 : vector<32x32xf32>
    %cst_153 = arith.constant 0.000000e+00 : f32
    %cst_154 = arith.constant 1.000000e+00 : f32
    %128 = vector.broadcast %cst_153 : f32 to vector<32x32xf32>
    %129 = arith.maximumf %128, %127 : vector<32x32xf32>
    %130 = vector.broadcast %cst_154 : f32 to vector<32x32xf32>
    %131 = arith.minimumf %130, %129 : vector<32x32xf32>
    %132 = arith.mulf %131, %89 : vector<32x32xf32>
    %c0_155 = arith.constant 0 : index
    %c0_156 = arith.constant 0 : index
    %c0_157 = arith.constant 0 : index
    %c0_158 = arith.constant 0 : index
    %133 = vector.load %arg3[%c0_155, %c0_156, %c0_157, %c0_158] : memref<1x3x32x32xf32, #tpu.memory_space<vmem>>, vector<1x1x32x32xf32>
    %134 = vector.shape_cast %133 : vector<1x1x32x32xf32> to vector<32x32xf32>
    %135 = arith.mulf %134, %91 : vector<32x32xf32>
    %136 = arith.addf %132, %135 : vector<32x32xf32>
    %c0_159 = arith.constant 0 : index
    %c0_160 = arith.constant 0 : index
    %c0_161 = arith.constant 0 : index
    %c0_162 = arith.constant 0 : index
    %137 = vector.load %arg7[%c0_159, %c0_160, %c0_161, %c0_162] : memref<1x3x32x32xf32, #tpu.memory_space<vmem>>, vector<1x1x32x32xf32>
    %138 = vector.shape_cast %137 : vector<1x1x32x32xf32> to vector<32x32xf32>
    %139 = vector.shape_cast %136 : vector<32x32xf32> to vector<1x1x32x32xf32>
    tpu.vector_store %arg7[%c0_159, %c0_160, %c0_161, %c0_162], %139 {strides = array<i32>} : memref<1x3x32x32xf32, #tpu.memory_space<vmem>>, vector<1x1x32x32xf32>,
    %c0_163 = arith.constant 0 : index
    %c10_164 = arith.constant 10 : index
    %c0_165 = arith.constant 0 : index
    %c0_166 = arith.constant 0 : index
    %140 = vector.load %arg8[%c0_163, %c10_164, %c0_165, %c0_166] : memref<1x12x32x32xf32, #tpu.memory_space<vmem>>, vector<1x1x32x32xf32>
    %141 = vector.shape_cast %140 : vector<1x1x32x32xf32> to vector<32x32xf32>
    %c0_167 = arith.constant 0 : index
    %c0_168 = arith.constant 0 : index
    %c0_169 = arith.constant 0 : index
    %c0_170 = arith.constant 0 : index
    %142 = vector.load %arg3[%c0_167, %c0_168, %c0_169, %c0_170] : memref<1x3x32x32xf32, #tpu.memory_space<vmem>>, vector<1x1x32x32xf32>
    %143 = vector.shape_cast %142 : vector<1x1x32x32xf32> to vector<32x32xf32>
    %cst_171 = arith.constant 4.850000e-01 : f32
    %144 = vector.broadcast %cst_171 : f32 to vector<32x32xf32>
    %145 = arith.subf %143, %144 : vector<32x32xf32>
    %cst_172 = arith.constant 4.36681223 : f32
    %146 = vector.broadcast %cst_172 : f32 to vector<32x32xf32>
    %147 = arith.mulf %145, %146 : vector<32x32xf32>
    %c0_173 = arith.constant 0 : index
    %c3_174 = arith.constant 3 : index
    %c0_175 = arith.constant 0 : index
    %c0_176 = arith.constant 0 : index
    %148 = vector.load %arg8[%c0_173, %c3_174, %c0_175, %c0_176] : memref<1x12x32x32xf32, #tpu.memory_space<vmem>>, vector<1x1x32x32xf32>
    %149 = vector.shape_cast %148 : vector<1x1x32x32xf32> to vector<32x32xf32>
    %150 = arith.mulf %149, %147 : vector<32x32xf32>
    %151 = arith.addf %141, %150 : vector<32x32xf32>
    %c0_177 = arith.constant 0 : index
    %c1_178 = arith.constant 1 : index
    %c0_179 = arith.constant 0 : index
    %c0_180 = arith.constant 0 : index
    %152 = vector.load %arg3[%c0_177, %c1_178, %c0_179, %c0_180] : memref<1x3x32x32xf32, #tpu.memory_space<vmem>>, vector<1x1x32x32xf32>
    %153 = vector.shape_cast %152 : vector<1x1x32x32xf32> to vector<32x32xf32>
    %cst_181 = arith.constant 4.560000e-01 : f32
    %154 = vector.broadcast %cst_181 : f32 to vector<32x32xf32>
    %155 = arith.subf %153, %154 : vector<32x32xf32>
    %cst_182 = arith.constant 4.46428585 : f32
    %156 = vector.broadcast %cst_182 : f32 to vector<32x32xf32>
    %157 = arith.mulf %155, %156 : vector<32x32xf32>
    %c0_183 = arith.constant 0 : index
    %c4_184 = arith.constant 4 : index
    %c0_185 = arith.constant 0 : index
    %c0_186 = arith.constant 0 : index
    %158 = vector.load %arg8[%c0_183, %c4_184, %c0_185, %c0_186] : memref<1x12x32x32xf32, #tpu.memory_space<vmem>>, vector<1x1x32x32xf32>
    %159 = vector.shape_cast %158 : vector<1x1x32x32xf32> to vector<32x32xf32>
    %160 = arith.mulf %159, %157 : vector<32x32xf32>
    %161 = arith.addf %151, %160 : vector<32x32xf32>
    %c0_187 = arith.constant 0 : index
    %c2_188 = arith.constant 2 : index
    %c0_189 = arith.constant 0 : index
    %c0_190 = arith.constant 0 : index
    %162 = vector.load %arg3[%c0_187, %c2_188, %c0_189, %c0_190] : memref<1x3x32x32xf32, #tpu.memory_space<vmem>>, vector<1x1x32x32xf32>
    %163 = vector.shape_cast %162 : vector<1x1x32x32xf32> to vector<32x32xf32>
    %cst_191 = arith.constant 4.060000e-01 : f32
    %164 = vector.broadcast %cst_191 : f32 to vector<32x32xf32>
    %165 = arith.subf %163, %164 : vector<32x32xf32>
    %cst_192 = arith.constant 4.44444466 : f32
    %166 = vector.broadcast %cst_192 : f32 to vector<32x32xf32>
    %167 = arith.mulf %165, %166 : vector<32x32xf32>
    %c0_193 = arith.constant 0 : index
    %c5_194 = arith.constant 5 : index
    %c0_195 = arith.constant 0 : index
    %c0_196 = arith.constant 0 : index
    %168 = vector.load %arg8[%c0_193, %c5_194, %c0_195, %c0_196] : memref<1x12x32x32xf32, #tpu.memory_space<vmem>>, vector<1x1x32x32xf32>
    %169 = vector.shape_cast %168 : vector<1x1x32x32xf32> to vector<32x32xf32>
    %170 = arith.mulf %169, %167 : vector<32x32xf32>
    %171 = arith.addf %161, %170 : vector<32x32xf32>
    %cst_197 = arith.constant 2.240000e-01 : f32
    %172 = vector.broadcast %cst_197 : f32 to vector<32x32xf32>
    %173 = arith.mulf %171, %172 : vector<32x32xf32>
    %cst_198 = arith.constant 4.560000e-01 : f32
    %174 = vector.broadcast %cst_198 : f32 to vector<32x32xf32>
    %175 = arith.addf %173, %174 : vector<32x32xf32>
    %cst_199 = arith.constant 0.000000e+00 : f32
    %cst_200 = arith.constant 1.000000e+00 : f32
    %176 = vector.broadcast %cst_199 : f32 to vector<32x32xf32>
    %177 = arith.maximumf %176, %175 : vector<32x32xf32>
    %178 = vector.broadcast %cst_200 : f32 to vector<32x32xf32>
    %179 = arith.minimumf %178, %177 : vector<32x32xf32>
    %180 = arith.mulf %179, %89 : vector<32x32xf32>
    %c0_201 = arith.constant 0 : index
    %c1_202 = arith.constant 1 : index
    %c0_203 = arith.constant 0 : index
    %c0_204 = arith.constant 0 : index
    %181 = vector.load %arg3[%c0_201, %c1_202, %c0_203, %c0_204] : memref<1x3x32x32xf32, #tpu.memory_space<vmem>>, vector<1x1x32x32xf32>
    %182 = vector.shape_cast %181 : vector<1x1x32x32xf32> to vector<32x32xf32>
    %183 = arith.mulf %182, %91 : vector<32x32xf32>
    %184 = arith.addf %180, %183 : vector<32x32xf32>
    %c0_205 = arith.constant 0 : index
    %c1_206 = arith.constant 1 : index
    %c0_207 = arith.constant 0 : index
    %c0_208 = arith.constant 0 : index
    %185 = vector.load %arg7[%c0_205, %c1_206, %c0_207, %c0_208] : memref<1x3x32x32xf32, #tpu.memory_space<vmem>>, vector<1x1x32x32xf32>
    %186 = vector.shape_cast %185 : vector<1x1x32x32xf32> to vector<32x32xf32>
    %187 = vector.shape_cast %184 : vector<32x32xf32> to vector<1x1x32x32xf32>
    tpu.vector_store %arg7[%c0_205, %c1_206, %c0_207, %c0_208], %187 {strides = array<i32>} : memref<1x3x32x32xf32, #tpu.memory_space<vmem>>, vector<1x1x32x32xf32>,
    %c0_209 = arith.constant 0 : index
    %c11_210 = arith.constant 11 : index
    %c0_211 = arith.constant 0 : index
    %c0_212 = arith.constant 0 : index
    %188 = vector.load %arg8[%c0_209, %c11_210, %c0_211, %c0_212] : memref<1x12x32x32xf32, #tpu.memory_space<vmem>>, vector<1x1x32x32xf32>
    %189 = vector.shape_cast %188 : vector<1x1x32x32xf32> to vector<32x32xf32>
    %c0_213 = arith.constant 0 : index
    %c0_214 = arith.constant 0 : index
    %c0_215 = arith.constant 0 : index
    %c0_216 = arith.constant 0 : index
    %190 = vector.load %arg3[%c0_213, %c0_214, %c0_215, %c0_216] : memref<1x3x32x32xf32, #tpu.memory_space<vmem>>, vector<1x1x32x32xf32>
    %191 = vector.shape_cast %190 : vector<1x1x32x32xf32> to vector<32x32xf32>
    %cst_217 = arith.constant 4.850000e-01 : f32
    %192 = vector.broadcast %cst_217 : f32 to vector<32x32xf32>
    %193 = arith.subf %191, %192 : vector<32x32xf32>
    %cst_218 = arith.constant 4.36681223 : f32
    %194 = vector.broadcast %cst_218 : f32 to vector<32x32xf32>
    %195 = arith.mulf %193, %194 : vector<32x32xf32>
    %c0_219 = arith.constant 0 : index
    %c6_220 = arith.constant 6 : index
    %c0_221 = arith.constant 0 : index
    %c0_222 = arith.constant 0 : index
    %196 = vector.load %arg8[%c0_219, %c6_220, %c0_221, %c0_222] : memref<1x12x32x32xf32, #tpu.memory_space<vmem>>, vector<1x1x32x32xf32>
    %197 = vector.shape_cast %196 : vector<1x1x32x32xf32> to vector<32x32xf32>
    %198 = arith.mulf %197, %195 : vector<32x32xf32>
    %199 = arith.addf %189, %198 : vector<32x32xf32>
    %c0_223 = arith.constant 0 : index
    %c1_224 = arith.constant 1 : index
    %c0_225 = arith.constant 0 : index
    %c0_226 = arith.constant 0 : index
    %200 = vector.load %arg3[%c0_223, %c1_224, %c0_225, %c0_226] : memref<1x3x32x32xf32, #tpu.memory_space<vmem>>, vector<1x1x32x32xf32>
    %201 = vector.shape_cast %200 : vector<1x1x32x32xf32> to vector<32x32xf32>
    %cst_227 = arith.constant 4.560000e-01 : f32
    %202 = vector.broadcast %cst_227 : f32 to vector<32x32xf32>
    %203 = arith.subf %201, %202 : vector<32x32xf32>
    %cst_228 = arith.constant 4.46428585 : f32
    %204 = vector.broadcast %cst_228 : f32 to vector<32x32xf32>
    %205 = arith.mulf %203, %204 : vector<32x32xf32>
    %c0_229 = arith.constant 0 : index
    %c7_230 = arith.constant 7 : index
    %c0_231 = arith.constant 0 : index
    %c0_232 = arith.constant 0 : index
    %206 = vector.load %arg8[%c0_229, %c7_230, %c0_231, %c0_232] : memref<1x12x32x32xf32, #tpu.memory_space<vmem>>, vector<1x1x32x32xf32>
    %207 = vector.shape_cast %206 : vector<1x1x32x32xf32> to vector<32x32xf32>
    %208 = arith.mulf %207, %205 : vector<32x32xf32>
    %209 = arith.addf %199, %208 : vector<32x32xf32>
    %c0_233 = arith.constant 0 : index
    %c2_234 = arith.constant 2 : index
    %c0_235 = arith.constant 0 : index
    %c0_236 = arith.constant 0 : index
    %210 = vector.load %arg3[%c0_233, %c2_234, %c0_235, %c0_236] : memref<1x3x32x32xf32, #tpu.memory_space<vmem>>, vector<1x1x32x32xf32>
    %211 = vector.shape_cast %210 : vector<1x1x32x32xf32> to vector<32x32xf32>
    %cst_237 = arith.constant 4.060000e-01 : f32
    %212 = vector.broadcast %cst_237 : f32 to vector<32x32xf32>
    %213 = arith.subf %211, %212 : vector<32x32xf32>
    %cst_238 = arith.constant 4.44444466 : f32
    %214 = vector.broadcast %cst_238 : f32 to vector<32x32xf32>
    %215 = arith.mulf %213, %214 : vector<32x32xf32>
    %c0_239 = arith.constant 0 : index
    %c8_240 = arith.constant 8 : index
    %c0_241 = arith.constant 0 : index
    %c0_242 = arith.constant 0 : index
    %216 = vector.load %arg8[%c0_239, %c8_240, %c0_241, %c0_242] : memref<1x12x32x32xf32, #tpu.memory_space<vmem>>, vector<1x1x32x32xf32>
    %217 = vector.shape_cast %216 : vector<1x1x32x32xf32> to vector<32x32xf32>
    %218 = arith.mulf %217, %215 : vector<32x32xf32>
    %219 = arith.addf %209, %218 : vector<32x32xf32>
    %cst_243 = arith.constant 2.250000e-01 : f32
    %220 = vector.broadcast %cst_243 : f32 to vector<32x32xf32>
    %221 = arith.mulf %219, %220 : vector<32x32xf32>
    %cst_244 = arith.constant 4.060000e-01 : f32
    %222 = vector.broadcast %cst_244 : f32 to vector<32x32xf32>
    %223 = arith.addf %221, %222 : vector<32x32xf32>
    %cst_245 = arith.constant 0.000000e+00 : f32
    %cst_246 = arith.constant 1.000000e+00 : f32
    %224 = vector.broadcast %cst_245 : f32 to vector<32x32xf32>
    %225 = arith.maximumf %224, %223 : vector<32x32xf32>
    %226 = vector.broadcast %cst_246 : f32 to vector<32x32xf32>
    %227 = arith.minimumf %226, %225 : vector<32x32xf32>
    %228 = arith.mulf %227, %89 : vector<32x32xf32>
    %c0_247 = arith.constant 0 : index
    %c2_248 = arith.constant 2 : index
    %c0_249 = arith.constant 0 : index
    %c0_250 = arith.constant 0 : index
    %229 = vector.load %arg3[%c0_247, %c2_248, %c0_249, %c0_250] : memref<1x3x32x32xf32, #tpu.memory_space<vmem>>, vector<1x1x32x32xf32>
    %230 = vector.shape_cast %229 : vector<1x1x32x32xf32> to vector<32x32xf32>
    %231 = arith.mulf %230, %91 : vector<32x32xf32>
    %232 = arith.addf %228, %231 : vector<32x32xf32>
    %c0_251 = arith.constant 0 : index
    %c2_252 = arith.constant 2 : index
    %c0_253 = arith.constant 0 : index
    %c0_254 = arith.constant 0 : index
    %233 = vector.load %arg7[%c0_251, %c2_252, %c0_253, %c0_254] : memref<1x3x32x32xf32, #tpu.memory_space<vmem>>, vector<1x1x32x32xf32>
    %234 = vector.shape_cast %233 : vector<1x1x32x32xf32> to vector<32x32xf32>
    %235 = vector.shape_cast %232 : vector<32x32xf32> to vector<1x1x32x32xf32>
    tpu.vector_store %arg7[%c0_251, %c2_252, %c0_253, %c0_254], %235 {strides = array<i32>} : memref<1x3x32x32xf32, #tpu.memory_space<vmem>>, vector<1x1x32x32xf32>,
    return
  }
  func.func @transform_0(%arg0: i32, %arg1: i32, %arg2: i32) -> (i32, i32, i32, i32) {
    %c0_i32 = arith.constant 0 : i32
    %c0_i32_0 = arith.constant 0 : i32
    return %arg0, %c0_i32, %arg1, %arg2 : i32, i32, i32, i32
  }
  func.func @transform_1(%arg0: i32, %arg1: i32, %arg2: i32) -> (i32, i32, i32, i32) {
    %c0_i32 = arith.constant 0 : i32
    %c0_i32_0 = arith.constant 0 : i32
    %c0_i32_1 = arith.constant 0 : i32
    %c0_i32_2 = arith.constant 0 : i32
    return %arg0, %c0_i32, %c0_i32_0, %c0_i32_1 : i32, i32, i32, i32
  }
  func.func @transform_2(%arg0: i32, %arg1: i32, %arg2: i32) -> (i32, i32) {
    %c0_i32 = arith.constant 0 : i32
    %c0_i32_0 = arith.constant 0 : i32
    return %arg1, %c0_i32 : i32, i32
  }
  func.func @transform_3(%arg0: i32, %arg1: i32, %arg2: i32) -> (i32, i32) {
    %c0_i32 = arith.constant 0 : i32
    %c0_i32_0 = arith.constant 0 : i32
    return %c0_i32, %arg2 : i32, i32
  }
  func.func @transform_4(%arg0: i32, %arg1: i32, %arg2: i32) -> (i32, i32, i32, i32) {
    %c0_i32 = arith.constant 0 : i32
    %c0_i32_0 = arith.constant 0 : i32
    return %arg0, %c0_i32, %arg1, %arg2 : i32, i32, i32, i32
  }
  func.func @transform_5(%arg0: i32, %arg1: i32, %arg2: i32) -> (i32, i32, i32, i32) {
    %c0_i32 = arith.constant 0 : i32
    %c0_i32_0 = arith.constant 0 : i32
    return %arg0, %c0_i32, %arg1, %arg2 : i32, i32, i32, i32
  }
}

</mosaic_0001>

<llo_original>
// kernel: pct_net_forward.2
$region0: #{pct_net_forward.2}
  #allocation0 [shape = 'u32[]', space=smem, size = 0x4, offset = 0x4, fixed_abs, tag = 'smem constant byte address 0x4 - core index']
  #allocation1 [shape = 'u32[144,128]{1,0:T(1,128)}', space=vmem, size = 0x12000, scoped, tag = 'internal scratch']
  %s0 = inlined_call_operand.vmem [shape: f32[4,512], index: 0, kind: input, shape index: {}]
  %s1 = inlined_call_operand.vmem [shape: f32[32,4], index: 1, kind: input, shape index: {}]
  %s2 = inlined_call_operand.vmem [shape: f32[32,1], index: 2, kind: input, shape index: {}]
  %s3 = inlined_call_operand.vmem [shape: f32[13,32], index: 3, kind: input, shape index: {}]
  %s4 = inlined_call_operand.vmem [shape: f32[13,1], index: 4, kind: input, shape index: {}]
  %s5 = inlined_call_operand.vmem [shape: f32[3,512], index: 5, kind: output, shape index: {0}]
  %s6 = inlined_call_operand.vmem [shape: f32[12,512], index: 6, kind: output, shape index: {1}]
  %s7 = inlined_call_operand.vmem [shape: f32[1,512], index: 7, kind: output, shape index: {2}]
  %8 = xla_tuple %s5, %s6, %s7
  %s9 = sld [smem:[#allocation0]]
  $region46: #{pct_net_forward.2} parent=0
    _
  %s11 = ssub.s32 1, %s9
  %s12 = scalar_select 0, %s11, %s9
  // Predicated region
  $region2: #{pct_net_forward.2} parent=0 // pred_check
    _
  $region3: #{pct_net_forward.2} parent=0 // pred_check_branch
    %14 = sbr.rel (0) target = $region5
  $region4: #{pct_net_forward.2} parent=0 // pred_region
    _
  $region5: #{pct_net_forward.2} parent=0 // pred_fallthru
    _
  // Predicated region
  $region6: #{pct_net_forward.2} parent=0 // pred_check
    _
  $region7: #{pct_net_forward.2} parent=0 // pred_check_branch
    %16 = sbr.rel (0) target = $region9
  $region8: #{pct_net_forward.2} parent=0 // pred_region
    _
  $region9: #{pct_net_forward.2} parent=0 // pred_fallthru
    _
  // Predicated region
  $region10: #{pct_net_forward.2} parent=0 // pred_check
    _
  $region11: #{pct_net_forward.2} parent=0 // pred_check_branch
    %18 = sbr.rel (0) target = $region13
  $region12: #{pct_net_forward.2} parent=0 // pred_region
    _
  $region13: #{pct_net_forward.2} parent=0 // pred_fallthru
    _
  // Predicated region
  $region14: #{pct_net_forward.2} parent=0 // pred_check
    _
  $region15: #{pct_net_forward.2} parent=0 // pred_check_branch
    %20 = sbr.rel (0) target = $region17
  $region16: #{pct_net_forward.2} parent=0 // pred_region
    _
  $region17: #{pct_net_forward.2} parent=0 // pred_fallthru
    _
  // Predicated region
  $region18: #{pct_net_forward.2} parent=0 // pred_check
    _
  $region19: #{pct_net_forward.2} parent=0 // pred_check_branch
    %22 = sbr.rel (0) target = $region21
  $region20: #{pct_net_forward.2} parent=0 // pred_region
    _
  $region21: #{pct_net_forward.2} parent=0 // pred_fallthru
    _
  %v23 = vld [vmem:[%s0] sm:$0xff]
  %v24 = vld [vmem:[%s0 + $0x8] sm:$0xff]
  %v25 = vld [vmem:[%s1] sm:$0xff]
  %v26 = vld [vmem:[%s1 + $0x8] sm:$0xff]
  %v27 = vld [vmem:[%s1 + $0x10] sm:$0xff]
  %v28 = vld [vmem:[%s1 + $0x18] sm:$0xff]
  %v29 = vld [vmem:[%s2] sm:$0xff]
  %v30 = vld [vmem:[%s2 + $0x8] sm:$0xff]
  %v31 = vld [vmem:[%s2 + $0x10] sm:$0xff]
  %v32 = vld [vmem:[%s2 + $0x18] sm:$0xff]
  %34 = vset.pattern.permute.xlu0 0
  %35 = vperm.xlu0 %34, %v29
  %v36 = vpop.permute.xlu0 %35
  %39 = vset.pattern.permute.xlu0 0
  %40 = vperm.xlu0 %39, %v30
  %v41 = vpop.permute.xlu0 %40
  %44 = vset.pattern.permute.xlu0 0
  %45 = vperm.xlu0 %44, %v31
  %v46 = vpop.permute.xlu0 %45
  %49 = vset.pattern.permute.xlu0 0
  %50 = vperm.xlu0 %49, %v32
  %v51 = vpop.permute.xlu0 %50
  %v55 = vcombine.high %v23, %v23
  %v56 = vcombine.high %v24, %v24
  %vm57 = vcmask 31744
  %v59 = vsel %vm57, %v25, 0
  %v62 = vsel %vm57, %v26, 0
  %v65 = vsel %vm57, %v27, 0
  %v68 = vsel %vm57, %v28, 0
  %vm70 = vcmask 1043456
  %v71 = vsel %vm70, %v23, 0
  %v73 = vsel %vm70, %v55, 0
  %v75 = vsel %vm70, %v24, 0
  %v77 = vsel %vm70, %v56, 0
  %79 = vmatprep.subr.mxu0 0.0
  %80 = vmatpush1.msra.mxu0 0.0
  %81 = vmatprep.subr.mxu0 0.0
  %82 = vmatpush1.msra.mxu0 0.0
  %83 = vmatprep.subr.mxu0 0.0
  %84 = vmatpush1.msra.mxu0 0.0
  %85 = vmatprep.subr.mxu0 0.0
  %86 = vmatpush1.msra.mxu0 0.0
  %87 = vmatprep.subr.mxu0 0.0
  %88 = vmatpush1.msra.mxu0 0.0
  %89 = vmatprep.subr.mxu0 0.0
  %90 = vmatpush1.msra.mxu0 0.0
  %91 = vmatprep.subr.mxu0 0.0
  %92 = vmatpush1.msra.mxu0 0.0
  %93 = vmatprep.subr.mxu0 0.0
  %94 = vmatpush1.msra.mxu0 0.0
  %95 = vmatprep.subr.mxu0 0.0
  %96 = vmatpush1.msra.mxu0 0.0
  %97 = vmatprep.subr.mxu0 0.0
  %98 = vmatpush1.msra.mxu0 0.0
  %99 = vmatprep.subr.mxu0 0.0
  %100 = vmatpush1.msra.mxu0 0.0
  %101 = vmatprep.subr.mxu0 0.0
  %102 = vmatpush1.msra.mxu0 0.0
  %103 = vmatprep.subr.mxu0 0.0
  %104 = vmatpush1.msra.mxu0 0.0
  %105 = vmatprep.subr.mxu0 0.0
  %106 = vmatpush1.msra.mxu0 0.0
  %107 = vmatprep.subr.mxu0 0.0
  %108 = vmatpush1.msra.mxu0 0.0
  %109 = vmatprep.subr.mxu0 %v73
  %110 = vmatpush1.msra.mxu0 %v71
  %111 = vmatprep.subr.mxu0 0.0
  %112 = vmatpush2.msra.mxu0 0.0
  %113 = vmatprep.subr.mxu0 0.0
  %114 = vmatpush2.msra.mxu0 0.0
  %115 = vmatprep.subr.mxu0 0.0
  %116 = vmatpush2.msra.mxu0 0.0
  %117 = vmatprep.subr.mxu0 0.0
  %118 = vmatpush2.msra.mxu0 0.0
  %119 = vmatprep.subr.mxu0 0.0
  %120 = vmatpush2.msra.mxu0 0.0
  %121 = vmatprep.subr.mxu0 0.0
  %122 = vmatpush2.msra.mxu0 0.0
  %123 = vmatprep.subr.mxu0 0.0
  %124 = vmatpush2.msra.mxu0 0.0
  %125 = vmatprep.subr.mxu0 0.0
  %126 = vmatpush2.msra.mxu0 0.0
  %127 = vmatprep.subr.mxu0 0.0
  %128 = vmatpush2.msra.mxu0 0.0
  %129 = vmatprep.subr.mxu0 0.0
  %130 = vmatpush2.msra.mxu0 0.0
  %131 = vmatprep.subr.mxu0 0.0
  %132 = vmatpush2.msra.mxu0 0.0
  %133 = vmatprep.subr.mxu0 0.0
  %134 = vmatpush2.msra.mxu0 0.0
  %135 = vmatprep.subr.mxu0 0.0
  %136 = vmatpush2.msra.mxu0 0.0
  %137 = vmatprep.subr.mxu0 0.0
  %138 = vmatpush2.msra.mxu0 0.0
  %139 = vmatprep.subr.mxu0 0.0
  %140 = vmatpush2.msra.mxu0 0.0
  %141 = vmatprep.subr.mxu0 0.0
  %142 = vmatpush2.msra.mxu0 0.0
  %143 = vmatprep.mubr.f32.mxu0 0.0
  %144 = vmatmul.mubr.f32.gmra.mxu0 %v59
  %v145 = vpop.f32.mrf.mxu0
  %v146 = vadd.f32 %v36, %v145
  %v147 = vpop.f32.mrf.mxu0
  %v148 = vadd.f32 %v36, %v147
  %149 = vmatprep.mubr.f32.mxu0 0.0
  %150 = vmatmul.mubr.f32.gmra.mxu0 %v62
  %v151 = vpop.f32.mrf.mxu0
  %v152 = vadd.f32 %v41, %v151
  %v153 = vpop.f32.mrf.mxu0
  %v154 = vadd.f32 %v41, %v153
  %155 = vmatprep.mubr.f32.mxu0 0.0
  %156 = vmatmul.mubr.f32.gmra.mxu0 %v65
  %v157 = vpop.f32.mrf.mxu0
  %v158 = vadd.f32 %v46, %v157
  %v159 = vpop.f32.mrf.mxu0
  %v160 = vadd.f32 %v46, %v159
  %161 = vmatprep.mubr.f32.mxu0 0.0
  %162 = vmatmul.mubr.f32.gmra.mxu0 %v68
  %v163 = vpop.f32.mrf.mxu0
  %v164 = vadd.f32 %v51, %v163
  %v165 = vpop.f32.mrf.mxu0
  %v166 = vadd.f32 %v51, %v165
  %167 = vdwg.mxu0
  %168 = vmatprep.subr.mxu0 0.0
  %169 = vmatpush1.msra.mxu0 0.0
  %170 = vmatprep.subr.mxu0 0.0
  %171 = vmatpush1.msra.mxu0 0.0
  %172 = vmatprep.subr.mxu0 0.0
  %173 = vmatpush1.msra.mxu0 0.0
  %174 = vmatprep.subr.mxu0 0.0
  %175 = vmatpush1.msra.mxu0 0.0
  %176 = vmatprep.subr.mxu0 0.0
  %177 = vmatpush1.msra.mxu0 0.0
  %178 = vmatprep.subr.mxu0 0.0
  %179 = vmatpush1.msra.mxu0 0.0
  %180 = vmatprep.subr.mxu0 0.0
  %181 = vmatpush1.msra.mxu0 0.0
  %182 = vmatprep.subr.mxu0 0.0
  %183 = vmatpush1.msra.mxu0 0.0
  %184 = vmatprep.subr.mxu0 0.0
  %185 = vmatpush1.msra.mxu0 0.0
  %186 = vmatprep.subr.mxu0 0.0
  %187 = vmatpush1.msra.mxu0 0.0
  %188 = vmatprep.subr.mxu0 0.0
  %189 = vmatpush1.msra.mxu0 0.0
  %190 = vmatprep.subr.mxu0 0.0
  %191 = vmatpush1.msra.mxu0 0.0
  %192 = vmatprep.subr.mxu0 0.0
  %193 = vmatpush1.msra.mxu0 0.0
  %194 = vmatprep.subr.mxu0 0.0
  %195 = vmatpush1.msra.mxu0 0.0
  %196 = vmatprep.subr.mxu0 0.0
  %197 = vmatpush1.msra.mxu0 0.0
  %198 = vmatprep.subr.mxu0 %v77
  %199 = vmatpush1.msra.mxu0 %v75
  %200 = vmatprep.subr.mxu0 0.0
  %201 = vmatpush2.msra.mxu0 0.0
  %202 = vmatprep.subr.mxu0 0.0
  %203 = vmatpush2.msra.mxu0 0.0
  %204 = vmatprep.subr.mxu0 0.0
  %205 = vmatpush2.msra.mxu0 0.0
  %206 = vmatprep.subr.mxu0 0.0
  %207 = vmatpush2.msra.mxu0 0.0
  %208 = vmatprep.subr.mxu0 0.0
  %209 = vmatpush2.msra.mxu0 0.0
  %210 = vmatprep.subr.mxu0 0.0
  %211 = vmatpush2.msra.mxu0 0.0
  %212 = vmatprep.subr.mxu0 0.0
  %213 = vmatpush2.msra.mxu0 0.0
  %214 = vmatprep.subr.mxu0 0.0
  %215 = vmatpush2.msra.mxu0 0.0
  %216 = vmatprep.subr.mxu0 0.0
  %217 = vmatpush2.msra.mxu0 0.0
  %218 = vmatprep.subr.mxu0 0.0
  %219 = vmatpush2.msra.mxu0 0.0
  %220 = vmatprep.subr.mxu0 0.0
  %221 = vmatpush2.msra.mxu0 0.0
  %222 = vmatprep.subr.mxu0 0.0
  %223 = vmatpush2.msra.mxu0 0.0
  %224 = vmatprep.subr.mxu0 0.0
  %225 = vmatpush2.msra.mxu0 0.0
  %226 = vmatprep.subr.mxu0 0.0
  %227 = vmatpush2.msra.mxu0 0.0
  %228 = vmatprep.subr.mxu0 0.0
  %229 = vmatpush2.msra.mxu0 0.0
  %230 = vmatprep.subr.mxu0 0.0
  %231 = vmatpush2.msra.mxu0 0.0
  %232 = vmatprep.mubr.f32.mxu0 0.0
  %233 = vmatmul.mubr.f32.gmra.mxu0 %v59
  %v234 = vpop.f32.mrf.mxu0
  %v235 = vadd.f32 %v36, %v234
  %v236 = vpop.f32.mrf.mxu0
  %v237 = vadd.f32 %v36, %v236
  %238 = vmatprep.mubr.f32.mxu0 0.0
  %239 = vmatmul.mubr.f32.gmra.mxu0 %v62
  %v240 = vpop.f32.mrf.mxu0
  %v241 = vadd.f32 %v41, %v240
  %v242 = vpop.f32.mrf.mxu0
  %v243 = vadd.f32 %v41, %v242
  %244 = vmatprep.mubr.f32.mxu0 0.0
  %245 = vmatmul.mubr.f32.gmra.mxu0 %v65
  %v246 = vpop.f32.mrf.mxu0
  %v247 = vadd.f32 %v46, %v246
  %v248 = vpop.f32.mrf.mxu0
  %v249 = vadd.f32 %v46, %v248
  %250 = vmatprep.mubr.f32.mxu0 0.0
  %251 = vmatmul.mubr.f32.gmra.mxu0 %v68
  %v252 = vpop.f32.mrf.mxu0
  %v253 = vadd.f32 %v51, %v252
  %v254 = vpop.f32.mrf.mxu0
  %v255 = vadd.f32 %v51, %v254
  %256 = vdwg.mxu0
  %v257 = vmax.f32 %v146, 0.0
  %v258 = vmax.f32 %v148, 0.0
  %v259 = vmax.f32 %v235, 0.0
  %v260 = vmax.f32 %v237, 0.0
  %v261 = vmax.f32 %v152, 0.0
  %v262 = vmax.f32 %v154, 0.0
  %v263 = vmax.f32 %v241, 0.0
  %v264 = vmax.f32 %v243, 0.0
  %v265 = vmax.f32 %v158, 0.0
  %v266 = vmax.f32 %v160, 0.0
  %v267 = vmax.f32 %v247, 0.0
  %v268 = vmax.f32 %v249, 0.0
  %v269 = vmax.f32 %v164, 0.0
  %v270 = vmax.f32 %v166, 0.0
  %v271 = vmax.f32 %v253, 0.0
  %v272 = vmax.f32 %v255, 0.0
  %v273 = vld [vmem:[%s3] sm:$0xff]
  %v274 = vld [vmem:[%s3 + $0x8] sm:$0x1f]
  %v275 = vld [vmem:[%s4] sm:$0xff]
  %v276 = vld [vmem:[%s4 + $0x8] sm:$0x1f]
  %278 = vset.pattern.permute.xlu0 0
  %279 = vperm.xlu0 %278, %v275
  %v280 = vpop.permute.xlu0 %279
  %283 = vset.pattern.permute.xlu0 0
  %284 = vperm.xlu0 %283, %v276
  %v285 = vpop.permute.xlu0 %284
  %vm287 = vcmask 261120
  %v289 = vsel %vm287, %v273, 0
  %v292 = vsel %vm287, %v274, 0
  %294 = vmatprep.subr.mxu0 0.0
  %295 = vmatpush1.msra.mxu0 0.0
  %296 = vmatprep.subr.mxu0 0.0
  %297 = vmatpush1.msra.mxu0 0.0
  %298 = vmatprep.subr.mxu0 0.0
  %299 = vmatpush1.msra.mxu0 0.0
  %300 = vmatprep.subr.mxu0 0.0
  %301 = vmatpush1.msra.mxu0 0.0
  %302 = vmatprep.subr.mxu0 0.0
  %303 = vmatpush1.msra.mxu0 0.0
  %304 = vmatprep.subr.mxu0 0.0
  %305 = vmatpush1.msra.mxu0 0.0
  %306 = vmatprep.subr.mxu0 0.0
  %307 = vmatpush1.msra.mxu0 0.0
  %308 = vmatprep.subr.mxu0 0.0
  %309 = vmatpush1.msra.mxu0 0.0
  %310 = vmatprep.subr.mxu0 0.0
  %311 = vmatpush1.msra.mxu0 0.0
  %312 = vmatprep.subr.mxu0 0.0
  %313 = vmatpush1.msra.mxu0 0.0
  %314 = vmatprep.subr.mxu0 0.0
  %315 = vmatpush1.msra.mxu0 0.0
  %316 = vmatprep.subr.mxu0 0.0
  %317 = vmatpush1.msra.mxu0 0.0
  %318 = vmatprep.subr.mxu0 %v270
  %319 = vmatpush1.msra.mxu0 %v269
  %320 = vmatprep.subr.mxu0 %v266
  %321 = vmatpush1.msra.mxu0 %v265
  %322 = vmatprep.subr.mxu0 %v262
  %323 = vmatpush1.msra.mxu0 %v261
  %324 = vmatprep.subr.mxu0 %v258
  %325 = vmatpush1.msra.mxu0 %v257
  %326 = vmatprep.subr.mxu0 0.0
  %327 = vmatpush2.msra.mxu0 0.0
  %328 = vmatprep.subr.mxu0 0.0
  %329 = vmatpush2.msra.mxu0 0.0
  %330 = vmatprep.subr.mxu0 0.0
  %331 = vmatpush2.msra.mxu0 0.0
  %332 = vmatprep.subr.mxu0 0.0
  %333 = vmatpush2.msra.mxu0 0.0
  %334 = vmatprep.subr.mxu0 0.0
  %335 = vmatpush2.msra.mxu0 0.0
  %336 = vmatprep.subr.mxu0 0.0
  %337 = vmatpush2.msra.mxu0 0.0
  %338 = vmatprep.subr.mxu0 0.0
  %339 = vmatpush2.msra.mxu0 0.0
  %340 = vmatprep.subr.mxu0 0.0
  %341 = vmatpush2.msra.mxu0 0.0
  %342 = vmatprep.subr.mxu0 0.0
  %343 = vmatpush2.msra.mxu0 0.0
  %344 = vmatprep.subr.mxu0 0.0
  %345 = vmatpush2.msra.mxu0 0.0
  %346 = vmatprep.subr.mxu0 0.0
  %347 = vmatpush2.msra.mxu0 0.0
  %348 = vmatprep.subr.mxu0 0.0
  %349 = vmatpush2.msra.mxu0 0.0
  %350 = vmatprep.subr.mxu0 0.0
  %351 = vmatpush2.msra.mxu0 0.0
  %352 = vmatprep.subr.mxu0 0.0
  %353 = vmatpush2.msra.mxu0 0.0
  %354 = vmatprep.subr.mxu0 0.0
  %355 = vmatpush2.msra.mxu0 0.0
  %356 = vmatprep.subr.mxu0 0.0
  %357 = vmatpush2.msra.mxu0 0.0
  %358 = vmatprep.mubr.f32.mxu0 0.0
  %359 = vmatmul.mubr.f32.gmra.mxu0 %v289
  %v360 = vpop.f32.mrf.mxu0
  %v361 = vadd.f32 %v280, %v360
  %v362 = vpop.f32.mrf.mxu0
  %v363 = vadd.f32 %v280, %v362
  %364 = vmatprep.mubr.f32.mxu0 0.0
  %365 = vmatmul.mubr.f32.gmra.mxu0 %v292
  %v366 = vpop.f32.mrf.mxu0
  %v367 = vadd.f32 %v285, %v366
  %v368 = vpop.f32.mrf.mxu0
  %v369 = vadd.f32 %v285, %v368
  %370 = vdwg.mxu0
  %371 = vmatprep.subr.mxu0 0.0
  %372 = vmatpush1.msra.mxu0 0.0
  %373 = vmatprep.subr.mxu0 0.0
  %374 = vmatpush1.msra.mxu0 0.0
  %375 = vmatprep.subr.mxu0 0.0
  %376 = vmatpush1.msra.mxu0 0.0
  %377 = vmatprep.subr.mxu0 0.0
  %378 = vmatpush1.msra.mxu0 0.0
  %379 = vmatprep.subr.mxu0 0.0
  %380 = vmatpush1.msra.mxu0 0.0
  %381 = vmatprep.subr.mxu0 0.0
  %382 = vmatpush1.msra.mxu0 0.0
  %383 = vmatprep.subr.mxu0 0.0
  %384 = vmatpush1.msra.mxu0 0.0
  %385 = vmatprep.subr.mxu0 0.0
  %386 = vmatpush1.msra.mxu0 0.0
  %387 = vmatprep.subr.mxu0 0.0
  %388 = vmatpush1.msra.mxu0 0.0
  %389 = vmatprep.subr.mxu0 0.0
  %390 = vmatpush1.msra.mxu0 0.0
  %391 = vmatprep.subr.mxu0 0.0
  %392 = vmatpush1.msra.mxu0 0.0
  %393 = vmatprep.subr.mxu0 0.0
  %394 = vmatpush1.msra.mxu0 0.0
  %395 = vmatprep.subr.mxu0 %v272
  %396 = vmatpush1.msra.mxu0 %v271
  %397 = vmatprep.subr.mxu0 %v268
  %398 = vmatpush1.msra.mxu0 %v267
  %399 = vmatprep.subr.mxu0 %v264
  %400 = vmatpush1.msra.mxu0 %v263
  %401 = vmatprep.subr.mxu0 %v260
  %402 = vmatpush1.msra.mxu0 %v259
  %403 = vmatprep.subr.mxu0 0.0
  %404 = vmatpush2.msra.mxu0 0.0
  %405 = vmatprep.subr.mxu0 0.0
  %406 = vmatpush2.msra.mxu0 0.0
  %407 = vmatprep.subr.mxu0 0.0
  %408 = vmatpush2.msra.mxu0 0.0
  %409 = vmatprep.subr.mxu0 0.0
  %410 = vmatpush2.msra.mxu0 0.0
  %411 = vmatprep.subr.mxu0 0.0
  %412 = vmatpush2.msra.mxu0 0.0
  %413 = vmatprep.subr.mxu0 0.0
  %414 = vmatpush2.msra.mxu0 0.0
  %415 = vmatprep.subr.mxu0 0.0
  %416 = vmatpush2.msra.mxu0 0.0
  %417 = vmatprep.subr.mxu0 0.0
  %418 = vmatpush2.msra.mxu0 0.0
  %419 = vmatprep.subr.mxu0 0.0
  %420 = vmatpush2.msra.mxu0 0.0
  %421 = vmatprep.subr.mxu0 0.0
  %422 = vmatpush2.msra.mxu0 0.0
  %423 = vmatprep.subr.mxu0 0.0
  %424 = vmatpush2.msra.mxu0 0.0
  %425 = vmatprep.subr.mxu0 0.0
  %426 = vmatpush2.msra.mxu0 0.0
  %427 = vmatprep.subr.mxu0 0.0
  %428 = vmatpush2.msra.mxu0 0.0
  %429 = vmatprep.subr.mxu0 0.0
  %430 = vmatpush2.msra.mxu0 0.0
  %431 = vmatprep.subr.mxu0 0.0
  %432 = vmatpush2.msra.mxu0 0.0
  %433 = vmatprep.subr.mxu0 0.0
  %434 = vmatpush2.msra.mxu0 0.0
  %435 = vmatprep.mubr.f32.mxu0 0.0
  %436 = vmatmul.mubr.f32.gmra.mxu0 %v289
  %v437 = vpop.f32.mrf.mxu0
  %v438 = vadd.f32 %v280, %v437
  %v439 = vpop.f32.mrf.mxu0
  %v440 = vadd.f32 %v280, %v439
  %441 = vmatprep.mubr.f32.mxu0 0.0
  %442 = vmatmul.mubr.f32.gmra.mxu0 %v292
  %v443 = vpop.f32.mrf.mxu0
  %v444 = vadd.f32 %v285, %v443
  %v445 = vpop.f32.mrf.mxu0
  %v446 = vadd.f32 %v285, %v445
  %447 = vdwg.mxu0
  %v448 = vsub.f32 0.0, %v367
  %v449 = vsub.f32 0.0, %v369
  %v450 = vsub.f32 0.0, %v444
  %v451 = vsub.f32 0.0, %v446
  %v452 = vmul.f32 %v448, 1.442695
  %v453 = vpow.pop %v452
  %v454 = vmul.f32 %v449, 1.442695
  %v455 = vpow.pop %v454
  %v456 = vmul.f32 %v450, 1.442695
  %v457 = vpow.pop %v456
  %v458 = vmul.f32 %v451, 1.442695
  %v459 = vpow.pop %v458
  %v460 = vadd.f32 %v453, 1.0
  %v461 = vadd.f32 %v455, 1.0
  %v462 = vadd.f32 %v457, 1.0
  %v463 = vadd.f32 %v459, 1.0
  %v464 = vrcp.pop %v460
  %v465 = vmul.f32 1.0, %v464
  %v466 = vrcp.pop %v461
  %v467 = vmul.f32 1.0, %v466
  %v468 = vrcp.pop %v462
  %v469 = vmul.f32 1.0, %v468
  %v470 = vrcp.pop %v463
  %v471 = vmul.f32 1.0, %v470
  %472 = vst [vmem:[%s6] sm:$0xff] %v361
  %473 = vst [vmem:[%s6 + $0x8] sm:$0xff] %v363
  %474 = vst [vmem:[%s6 + $0x10] sm:$0xff] %v438
  %475 = vst [vmem:[%s6 + $0x18] sm:$0xff] %v440
  %476 = vst [vmem:[%s6 + $0x20] sm:$0xf] %v367
  %477 = vst [vmem:[%s6 + $0x28] sm:$0xf] %v369
  %478 = vst [vmem:[%s6 + $0x30] sm:$0xf] %v444
  %479 = vst [vmem:[%s6 + $0x38] sm:$0xf] %v446
  %v484 = vcombine.high %v465, %v467
  %v485 = vcombine.high %v469, %v471
  %v487 = vunpack.c.l.s4 1966171168
  %v488 = vunpack.c.0.s8 %v487
  %v489 = vlaneseq
  %v490 = vshrl.u32 %v489, 7
  %v491 = vsub.s32 %v488, %v490
  %v492 = vrot.slane %v484, %v491
  %v494 = vunpack.c.l.s4 1966171168
  %v495 = vunpack.c.0.s8 %v494
  %v496 = vlaneseq
  %v497 = vshrl.u32 %v496, 7
  %v498 = vsub.s32 %v495, %v497
  %v499 = vrot.slane %v485, %v498
  %v500 = vcombine.low %v492, %v499
  %v502 = vunpack.c.l.s4 1966171168
  %v503 = vunpack.c.0.s8 %v502
  %v504 = vlaneseq
  %v505 = vshrl.u32 %v504, 7
  %v506 = vsub.s32 %v503, %v505
  %v507 = vrot.slane %v500, %v506
  %v509 = vlaneseq
  %vm510 = vcmp.ge.s32.totalorder %v509, 0
  %vm511 = vcmp.lt.s32.totalorder %v509, 512
  %vm512 = vmand %vm510, %vm511
  %513 = vst.msk [vmem:[%s7] sm:$0xf] %vm512, %v507
  %v514 = vsub.f32 %v23, 0.485
  %v515 = vsub.f32 %v24, 0.485
  %v516 = vmul.f32 %v514, 4.366812
  %v517 = vmul.f32 %v515, 4.366812
  %v518 = vsub.f32 %v23, 0.456
  %v519 = vsub.f32 %v24, 0.456
  %v520 = vmul.f32 %v518, 4.464286
  %v521 = vmul.f32 %v519, 4.464286
  %v522 = vsub.f32 %v23, 0.406
  %v523 = vsub.f32 %v24, 0.406
  %v524 = vmul.f32 %v522, 4.4444447
  %v525 = vmul.f32 %v523, 4.4444447
  %v526 = vsub.f32 1.0, %v465
  %v527 = vsub.f32 1.0, %v467
  %v528 = vsub.f32 1.0, %v469
  %v529 = vsub.f32 1.0, %v471
  %v532 = vlaneseq
  %v533 = vshrl.u32 %v532, 7
  %v534 = vsub.s32 0, %v533
  %v535 = vrot.slane %v516, %v534
  %v536 = vlaneseq
  %v537 = vshrl.u32 %v536, 7
  %v538 = vsub.s32 4, %v537
  %v539 = vrot.slane %v516, %v538
  %v540 = vlaneseq
  %v541 = vshrl.u32 %v540, 7
  %v542 = vsub.s32 0, %v541
  %v543 = vrot.slane %v517, %v542
  %v544 = vlaneseq
  %v545 = vshrl.u32 %v544, 7
  %v546 = vsub.s32 4, %v545
  %v547 = vrot.slane %v517, %v546
  %v552 = vmul.f32 %v361, %v535
  %v553 = vmul.f32 %v363, %v539
  %v554 = vmul.f32 %v438, %v543
  %v555 = vmul.f32 %v440, %v547
  %v560 = vrot.slane %v552, 7
  %v561 = vrot.slane %v553, 7
  %v562 = vrot.slane %v554, 7
  %v563 = vrot.slane %v555, 7
  %v568 = vadd.f32 %v367, %v560
  %v569 = vadd.f32 %v369, %v561
  %v570 = vadd.f32 %v444, %v562
  %v571 = vadd.f32 %v446, %v563
  %v574 = vlaneseq
  %v575 = vshrl.u32 %v574, 7
  %v576 = vsub.s32 1, %v575
  %v577 = vrot.slane %v520, %v576
  %v578 = vlaneseq
  %v579 = vshrl.u32 %v578, 7
  %v580 = vsub.s32 5, %v579
  %v581 = vrot.slane %v520, %v580
  %v582 = vlaneseq
  %v583 = vshrl.u32 %v582, 7
  %v584 = vsub.s32 1, %v583
  %v585 = vrot.slane %v521, %v584
  %v586 = vlaneseq
  %v587 = vshrl.u32 %v586, 7
  %v588 = vsub.s32 5, %v587
  %v589 = vrot.slane %v521, %v588
  %v594 = vmul.f32 %v361, %v577
  %v595 = vmul.f32 %v363, %v581
  %v596 = vmul.f32 %v438, %v585
  %v597 = vmul.f32 %v440, %v589
  %v598 = vadd.f32 %v568, %v594
  %v599 = vadd.f32 %v569, %v595
  %v600 = vadd.f32 %v570, %v596
  %v601 = vadd.f32 %v571, %v597
  %v604 = vlaneseq
  %v605 = vshrl.u32 %v604, 7
  %v606 = vsub.s32 2, %v605
  %v607 = vrot.slane %v524, %v606
  %v608 = vlaneseq
  %v609 = vshrl.u32 %v608, 7
  %v610 = vsub.s32 6, %v609
  %v611 = vrot.slane %v524, %v610
  %v612 = vlaneseq
  %v613 = vshrl.u32 %v612, 7
  %v614 = vsub.s32 2, %v613
  %v615 = vrot.slane %v525, %v614
  %v616 = vlaneseq
  %v617 = vshrl.u32 %v616, 7
  %v618 = vsub.s32 6, %v617
  %v619 = vrot.slane %v525, %v618
  %v624 = vmul.f32 %v361, %v607
  %v625 = vmul.f32 %v363, %v611
  %v626 = vmul.f32 %v438, %v615
  %v627 = vmul.f32 %v440, %v619
  %v632 = vrot.slane %v624, 1
  %v633 = vrot.slane %v625, 1
  %v634 = vrot.slane %v626, 1
  %v635 = vrot.slane %v627, 1
  %v640 = vadd.f32 %v598, %v632
  %v641 = vadd.f32 %v599, %v633
  %v642 = vadd.f32 %v600, %v634
  %v643 = vadd.f32 %v601, %v635
  %v644 = vmul.f32 %v640, 0.229
  %v645 = vmul.f32 %v641, 0.229
  %v646 = vmul.f32 %v642, 0.229
  %v647 = vmul.f32 %v643, 0.229
  %v648 = vadd.f32 %v644, 0.485
  %v649 = vadd.f32 %v645, 0.485
  %v650 = vadd.f32 %v646, 0.485
  %v651 = vadd.f32 %v647, 0.485
  %v652 = vmax.f32 %v648, 0.0
  %v653 = vmax.f32 %v649, 0.0
  %v654 = vmax.f32 %v650, 0.0
  %v655 = vmax.f32 %v651, 0.0
  %v656 = vmin.f32 %v652, 1.0
  %v657 = vmin.f32 %v653, 1.0
  %v658 = vmin.f32 %v654, 1.0
  %v659 = vmin.f32 %v655, 1.0
  %v660 = vrot.slane %v465, 3
  %v661 = vrot.slane %v467, 3
  %v662 = vrot.slane %v469, 3
  %v663 = vrot.slane %v471, 3
  %v668 = vmul.f32 %v656, %v660
  %v669 = vmul.f32 %v657, %v661
  %v670 = vmul.f32 %v658, %v662
  %v671 = vmul.f32 %v659, %v663
  %v676 = vcombine.high %v526, %v527
  %v677 = vcombine.high %v528, %v529
  %v680 = vmul.f32 %v23, %v676
  %v681 = vmul.f32 %v24, %v677
  %v684 = vlaneseq
  %v685 = vshrl.u32 %v684, 7
  %v686 = vsub.s32 0, %v685
  %v687 = vrot.slane %v680, %v686
  %v688 = vlaneseq
  %v689 = vshrl.u32 %v688, 7
  %v690 = vsub.s32 4, %v689
  %v691 = vrot.slane %v680, %v690
  %v692 = vlaneseq
  %v693 = vshrl.u32 %v692, 7
  %v694 = vsub.s32 0, %v693
  %v695 = vrot.slane %v681, %v694
  %v696 = vlaneseq
  %v697 = vshrl.u32 %v696, 7
  %v698 = vsub.s32 4, %v697
  %v699 = vrot.slane %v681, %v698
  %v704 = vadd.f32 %v668, %v687
  %v705 = vadd.f32 %v669, %v691
  %v706 = vadd.f32 %v670, %v695
  %v707 = vadd.f32 %v671, %v699
  %v712 = vcombine.low %v704, %v705
  %v713 = vcombine.low %v706, %v707
  %v715 = vunpack.c.l.s4 1966171168
  %v716 = vunpack.c.0.s8 %v715
  %v717 = vlaneseq
  %v718 = vshrl.u32 %v717, 7
  %v719 = vsub.s32 %v716, %v718
  %v720 = vrot.slane %v712, %v719
  %v722 = vunpack.c.l.s4 1966171168
  %v723 = vunpack.c.0.s8 %v722
  %v724 = vlaneseq
  %v725 = vshrl.u32 %v724, 7
  %v726 = vsub.s32 %v723, %v725
  %v727 = vrot.slane %v713, %v726
  %v728 = vcombine.high %v720, %v727
  %v730 = vunpack.c.l.s4 1966171168
  %v731 = vunpack.c.0.s8 %v730
  %v732 = vlaneseq
  %v733 = vshrl.u32 %v732, 7
  %v734 = vsub.s32 %v731, %v733
  %v735 = vrot.slane %v728, %v734
  %737 = vst.msk [vmem:[%s5] ss:$4 sm:$0xf] %vm512, %v735
  %v738 = vrot.slane %v552, 1
  %v739 = vrot.slane %v553, 1
  %v740 = vrot.slane %v554, 1
  %v741 = vrot.slane %v555, 1
  %v746 = vadd.f32 %v367, %v738
  %v747 = vadd.f32 %v369, %v739
  %v748 = vadd.f32 %v444, %v740
  %v749 = vadd.f32 %v446, %v741
  %v754 = vrot.slane %v594, 2
  %v755 = vrot.slane %v595, 2
  %v756 = vrot.slane %v596, 2
  %v757 = vrot.slane %v597, 2
  %v762 = vadd.f32 %v746, %v754
  %v763 = vadd.f32 %v747, %v755
  %v764 = vadd.f32 %v748, %v756
  %v765 = vadd.f32 %v749, %v757
  %v766 = vrot.slane %v624, 3
  %v767 = vrot.slane %v625, 3
  %v768 = vrot.slane %v626, 3
  %v769 = vrot.slane %v627, 3
  %v774 = vadd.f32 %v762, %v766
  %v775 = vadd.f32 %v763, %v767
  %v776 = vadd.f32 %v764, %v768
  %v777 = vadd.f32 %v765, %v769
  %v778 = vmul.f32 %v774, 0.224
  %v779 = vmul.f32 %v775, 0.224
  %v780 = vmul.f32 %v776, 0.224
  %v781 = vmul.f32 %v777, 0.224
  %v782 = vadd.f32 %v778, 0.456
  %v783 = vadd.f32 %v779, 0.456
  %v784 = vadd.f32 %v780, 0.456
  %v785 = vadd.f32 %v781, 0.456
  %v786 = vmax.f32 %v782, 0.0
  %v787 = vmax.f32 %v783, 0.0
  %v788 = vmax.f32 %v784, 0.0
  %v789 = vmax.f32 %v785, 0.0
  %v790 = vmin.f32 %v786, 1.0
  %v791 = vmin.f32 %v787, 1.0
  %v792 = vmin.f32 %v788, 1.0
  %v793 = vmin.f32 %v789, 1.0
  %v794 = vrot.slane %v465, 2
  %v795 = vrot.slane %v467, 2
  %v796 = vrot.slane %v469, 2
  %v797 = vrot.slane %v471, 2
  %v802 = vmul.f32 %v790, %v794
  %v803 = vmul.f32 %v791, %v795
  %v804 = vmul.f32 %v792, %v796
  %v805 = vmul.f32 %v793, %v797
  %v806 = vrot.slane %v676, 7
  %v807 = vrot.slane %v677, 7
  %v810 = vmul.f32 %v23, %v806
  %v811 = vmul.f32 %v24, %v807
  %v814 = vlaneseq
  %v815 = vshrl.u32 %v814, 7
  %v816 = vsub.s32 1, %v815
  %v817 = vrot.slane %v810, %v816
  %v818 = vlaneseq
  %v819 = vshrl.u32 %v818, 7
  %v820 = vsub.s32 5, %v819
  %v821 = vrot.slane %v810, %v820
  %v822 = vlaneseq
  %v823 = vshrl.u32 %v822, 7
  %v824 = vsub.s32 1, %v823
  %v825 = vrot.slane %v811, %v824
  %v826 = vlaneseq
  %v827 = vshrl.u32 %v826, 7
  %v828 = vsub.s32 5, %v827
  %v829 = vrot.slane %v811, %v828
  %v834 = vadd.f32 %v802, %v817
  %v835 = vadd.f32 %v803, %v821
  %v836 = vadd.f32 %v804, %v825
  %v837 = vadd.f32 %v805, %v829
  %v842 = vcombine.low %v834, %v835
  %v843 = vcombine.low %v836, %v837
  %v845 = vunpack.c.l.s4 1966171168
  %v846 = vunpack.c.0.s8 %v845
  %v847 = vlaneseq
  %v848 = vshrl.u32 %v847, 7
  %v849 = vsub.s32 %v846, %v848
  %v850 = vrot.slane %v842, %v849
  %v852 = vunpack.c.l.s4 1966171168
  %v853 = vunpack.c.0.s8 %v852
  %v854 = vlaneseq
  %v855 = vshrl.u32 %v854, 7
  %v856 = vsub.s32 %v853, %v855
  %v857 = vrot.slane %v843, %v856
  %v858 = vcombine.low %v850, %v857
  %v860 = vunpack.c.l.s4 1966171168
  %v861 = vunpack.c.0.s8 %v860
  %v862 = vlaneseq
  %v863 = vshrl.u32 %v862, 7
  %v864 = vsub.s32 %v861, %v863
  %v865 = vrot.slane %v858, %v864
  %v866 = vcombine.high %v865, %v865
  %s868 = scalar_lea.vmem %s5, 1
  %869 = vst.msk [vmem:[%s868] ss:$4 sm:$0xf] %vm512, %v866
  %v870 = vrot.slane %v552, 3
  %v871 = vrot.slane %v553, 3
  %v872 = vrot.slane %v554, 3
  %v873 = vrot.slane %v555, 3
  %v878 = vadd.f32 %v367, %v870
  %v879 = vadd.f32 %v369, %v871
  %v880 = vadd.f32 %v444, %v872
  %v881 = vadd.f32 %v446, %v873
  %v882 = vrot.slane %v594, 4
  %v883 = vrot.slane %v595, 4
  %v884 = vrot.slane %v596, 4
  %v885 = vrot.slane %v597, 4
  %v890 = vadd.f32 %v878, %v882
  %v891 = vadd.f32 %v879, %v883
  %v892 = vadd.f32 %v880, %v884
  %v893 = vadd.f32 %v881, %v885
  %v894 = vmul.f32 %v367, %v607
  %v895 = vmul.f32 %v369, %v611
  %v896 = vmul.f32 %v444, %v615
  %v897 = vmul.f32 %v446, %v619
  %v902 = vrot.slane %v894, 5
  %v903 = vrot.slane %v895, 5
  %v904 = vrot.slane %v896, 5
  %v905 = vrot.slane %v897, 5
  %v910 = vadd.f32 %v890, %v902
  %v911 = vadd.f32 %v891, %v903
  %v912 = vadd.f32 %v892, %v904
  %v913 = vadd.f32 %v893, %v905
  %v914 = vmul.f32 %v910, 0.225
  %v915 = vmul.f32 %v911, 0.225
  %v916 = vmul.f32 %v912, 0.225
  %v917 = vmul.f32 %v913, 0.225
  %v918 = vadd.f32 %v914, 0.406
  %v919 = vadd.f32 %v915, 0.406
  %v920 = vadd.f32 %v916, 0.406
  %v921 = vadd.f32 %v917, 0.406
  %v922 = vmax.f32 %v918, 0.0
  %v923 = vmax.f32 %v919, 0.0
  %v924 = vmax.f32 %v920, 0.0
  %v925 = vmax.f32 %v921, 0.0
  %v926 = vmin.f32 %v922, 1.0
  %v927 = vmin.f32 %v923, 1.0
  %v928 = vmin.f32 %v924, 1.0
  %v929 = vmin.f32 %v925, 1.0
  %v930 = vrot.slane %v465, 1
  %v931 = vrot.slane %v467, 1
  %v932 = vrot.slane %v469, 1
  %v933 = vrot.slane %v471, 1
  %v938 = vmul.f32 %v926, %v930
  %v939 = vmul.f32 %v927, %v931
  %v940 = vmul.f32 %v928, %v932
  %v941 = vmul.f32 %v929, %v933
  %v942 = vrot.slane %v676, 6
  %v943 = vrot.slane %v677, 6
  %v946 = vmul.f32 %v23, %v942
  %v947 = vmul.f32 %v24, %v943
  %v950 = vlaneseq
  %v951 = vshrl.u32 %v950, 7
  %v952 = vsub.s32 2, %v951
  %v953 = vrot.slane %v946, %v952
  %v954 = vlaneseq
  %v955 = vshrl.u32 %v954, 7
  %v956 = vsub.s32 6, %v955
  %v957 = vrot.slane %v946, %v956
  %v958 = vlaneseq
  %v959 = vshrl.u32 %v958, 7
  %v960 = vsub.s32 2, %v959
  %v961 = vrot.slane %v947, %v960
  %v962 = vlaneseq
  %v963 = vshrl.u32 %v962, 7
  %v964 = vsub.s32 6, %v963
  %v965 = vrot.slane %v947, %v964
  %v970 = vadd.f32 %v938, %v953
  %v971 = vadd.f32 %v939, %v957
  %v972 = vadd.f32 %v940, %v961
  %v973 = vadd.f32 %v941, %v965
  %v978 = vcombine.low %v970, %v971
  %v979 = vcombine.low %v972, %v973
  %v981 = vunpack.c.l.s4 1966171168
  %v982 = vunpack.c.0.s8 %v981
  %v983 = vlaneseq
  %v984 = vshrl.u32 %v983, 7
  %v985 = vsub.s32 %v982, %v984
  %v986 = vrot.slane %v978, %v985
  %v988 = vunpack.c.l.s4 1966171168
  %v989 = vunpack.c.0.s8 %v988
  %v990 = vlaneseq
  %v991 = vshrl.u32 %v990, 7
  %v992 = vsub.s32 %v989, %v991
  %v993 = vrot.slane %v979, %v992
  %v994 = vcombine.high %v986, %v993
  %v996 = vunpack.c.l.s4 1966171168
  %v997 = vunpack.c.0.s8 %v996
  %v998 = vlaneseq
  %v999 = vshrl.u32 %v998, 7
  %v1000 = vsub.s32 %v997, %v999
  %v1001 = vrot.slane %v994, %v1000
  %v1002 = vcombine.high %v1001, %v1001
  %s1004 = scalar_lea.vmem %s5, 2
  %1005 = vst.msk [vmem:[%s1004] ss:$4 sm:$0xf] %vm512, %v1002
  // Predicated region
  $region22: #{pct_net_forward.2} parent=0 // pred_check
    _
  $region23: #{pct_net_forward.2} parent=0 // pred_check_branch
    %1007 = sbr.rel (0) target = $region25
  $region24: #{pct_net_forward.2} parent=0 // pred_region
    _
  $region25: #{pct_net_forward.2} parent=0 // pred_fallthru
    _
  // Predicated region
  $region26: #{pct_net_forward.2} parent=0 // pred_check
    _
  $region27: #{pct_net_forward.2} parent=0 // pred_check_branch
    %1009 = sbr.rel (0) target = $region29
  $region28: #{pct_net_forward.2} parent=0 // pred_region
    _
  $region29: #{pct_net_forward.2} parent=0 // pred_fallthru
    _
  // Predicated region
  $region30: #{pct_net_forward.2} parent=0 // pred_check
    _
  $region31: #{pct_net_forward.2} parent=0 // pred_check_branch
    %1011 = sbr.rel (0) target = $region33
  $region32: #{pct_net_forward.2} parent=0 // pred_region
    _
  $region33: #{pct_net_forward.2} parent=0 // pred_fallthru
    _
  // Predicated region
  $region34: #{pct_net_forward.2} parent=0 // pred_check
    _
  $region35: #{pct_net_forward.2} parent=0 // pred_check_branch
    %1013 = sbr.rel (0) target = $region37
  $region36: #{pct_net_forward.2} parent=0 // pred_region
    _
  $region37: #{pct_net_forward.2} parent=0 // pred_fallthru
    _
  // Predicated region
  $region38: #{pct_net_forward.2} parent=0 // pred_check
    _
  $region39: #{pct_net_forward.2} parent=0 // pred_check_branch
    %1015 = sbr.rel (0) target = $region41
  $region40: #{pct_net_forward.2} parent=0 // pred_region
    _
  $region41: #{pct_net_forward.2} parent=0 // pred_fallthru
    _
  // Predicated region
  $region42: #{pct_net_forward.2} parent=0 // pred_check
    _
  $region43: #{pct_net_forward.2} parent=0 // pred_check_branch
    %1017 = sbr.rel (0) target = $region45
  $region44: #{pct_net_forward.2} parent=0 // pred_region
    _
  $region45: #{pct_net_forward.2} parent=0 // pred_fallthru
    _

// kernel: pct_net_forward.3
$region0: #{pct_net_forward.3}
  #allocation0 [shape = 'u32[]', space=smem, size = 0x4, offset = 0x4, fixed_abs, tag = 'smem constant byte address 0x4 - core index']
  #allocation1 [shape = 'u32[144,128]{1,0:T(1,128)}', space=vmem, size = 0x12000, scoped, tag = 'internal scratch']
  %s0 = inlined_call_operand.vmem [shape: f32[2,3,32,32], index: 0, kind: input, shape index: {}]
  %s1 = inlined_call_operand.vmem [shape: f32[2,13,16,16], index: 1, kind: input, shape index: {}]
  %s2 = inlined_call_operand.vmem [shape: f32[32,16], index: 2, kind: input, shape index: {}]
  %s3 = inlined_call_operand.vmem [shape: f32[16,32], index: 3, kind: input, shape index: {}]
  %s4 = inlined_call_operand.hbm [shape: f32[2,3,32,32], index: 4, kind: output, shape index: {0}]
  %s5 = inlined_call_operand.hbm [shape: f32[2,12,32,32], index: 5, kind: output, shape index: {1}]
  %6 = xla_tuple %s4, %s5
  %s7 = sld [smem:[#allocation0]]
  $region57: #{pct_net_forward.3} parent=0
    _
  %s9 = ssub.s32 1, %s7
  %s10 = scalar_select 0, %s9, %s7
  $region1: #{pct_net_forward.3} parent=0
    #allocation2 [shape = 'u8[98304]{0}', space=vmem, size = 0x18000, scoped, tag = 'output window, operand 0']
    #allocation3 [shape = 's32[2]{0}', space=sflag, size = 0x8, scoped, tag = 'scoped memory for pct_net_forward.3']
    #allocation4 [shape = 'u8[393216]{0}', space=vmem, size = 0x60000, scoped, tag = 'output window, operand 1']
    #allocation5 [shape = 's32[2]{0}', space=sflag, size = 0x8, scoped, tag = 'scoped memory for pct_net_forward.3']
    %11 = vsyncpa [#allocation3], 0
    %s12 = scalar_lea.sflag [#allocation3], 1
    %13 = vsyncpa %s12, 0
    %14 = vsyncpa [#allocation5], 0
    %s15 = scalar_lea.sflag [#allocation5], 1
    %16 = vsyncpa %s15, 0
    loop: start=0, step=1, limit=4
    $region2: #{pct_net_forward.3} parent=1 // loop_pre_header
      _
    $region3: #{pct_net_forward.3} parent=1 // loop_header
      %s18 = sphi 0, %s22
      %p19 = scmp.ge.s32.totalorder %s18, 4
      %s25 = sphi 0, %s44
      %s26 = sphi 0, %s40
      %s27 = sphi 0, %s36
      %s28 = sphi 0, %s25
      %s29 = sphi 0, %s26
      %s30 = sphi 0, %s27
      %s31 = sphi 0, %s28
      %s32 = sphi 0, %s29
      %s33 = sphi 0, %s30
      %s51 = sphi 0, %s53
      %s54 = sphi 0, %s51
      %s55 = sphi 0, %s54
      %s71 = sphi 0, %s55
      %s77 = sphi 0, %s79
      %s80 = sphi 0, %s77
      %s81 = sphi 0, %s80
      %s97 = sphi 0, %s81
      %s103 = sphi 0, %s105
      %s106 = sphi 0, %s103
      %s107 = sphi 0, %s106
      %s123 = sphi 0, %s107
      %s129 = sphi 0, %s131
      %s132 = sphi 0, %s129
      %s133 = sphi 0, %s132
      %s149 = sphi 0, %s133
      %s159 = sphi 0, %s161
      %s162 = sphi 0, %s159
      %s163 = sphi 0, %s162
      %s179 = sphi 0, %s163
      %s189 = sphi 0, %s191
      %s192 = sphi 0, %s189
      %s193 = sphi 0, %s192
      %s209 = sphi 0, %s193
    $region4: #{pct_net_forward.3} parent=1 // loop_header_branch
      %21 = sbr.rel (%p19) target = $region8
    $region5: #{pct_net_forward.3} parent=1 // loop_body
      %s23 = ssub.s32 %s18, 1
      %s24 = ssub.s32 %s18, 2
      %s34 = sadd.s32 1, %s27
      %p35 = scmp.ge.s32.totalorder %s34, 1
      %s36 = scalar_select %p35, 0, %s34
      %s37 = sadd.s32 1, %s26
      %s38 = scalar_select %p35, %s37, %s26
      %p39 = scmp.ge.s32.totalorder %s38, 1
      %s40 = scalar_select %p39, 0, %s38
      %s41 = sadd.s32 1, %s25
      %s42 = scalar_select %p39, %s41, %s25
      %p43 = scmp.ge.s32.totalorder %s42, 2
      %s44 = scalar_select %p43, 0, %s42
      %s45 = ssub.s32 %s25, %s44
      %s46 = ssub.s32 %s26, %s40
      %s47 = sor.u32 %s45, %s46
      %s48 = ssub.s32 %s27, %s36
      %s49 = sor.u32 %s47, %s48
      %p50 = scmp.eq.s32.totalorder %s49, 0
      %s52 = sadd.s32 %s51, 1
      %s53 = scalar_select %p50, %s51, %s52
      %p56 = pneg %p50
      %p57 = scmp.eq.s32.totalorder %s18, 1
      %p58 = por %p56, %p57
      %p59 = scmp.ne.s32.totalorder %s51, %s54
      %p60 = scmp.eq.s32.totalorder %s18, 0
      %p61 = por %p59, %p60
      %p62 = scmp.ne.s32.totalorder %s51, %s54
      %p63 = scmp.eq.s32.totalorder %s23, 1
      %p64 = por %p62, %p63
      %p65 = scmp.ne.s32.totalorder %s54, %s55
      %p66 = scmp.eq.s32.totalorder %s23, 0
      %p67 = por %p65, %p66
      %p68 = scmp.ne.s32.totalorder %s54, %s55
      %p69 = scmp.eq.s32.totalorder %s24, 1
      %p70 = por %p68, %p69
      %p72 = scmp.ne.s32.totalorder %s55, %s71
      %p73 = scmp.eq.s32.totalorder %s24, 0
      %p74 = por %p72, %p73
      %s75 = ssub.s32 %s25, %s44
      %p76 = scmp.eq.s32.totalorder %s75, 0
      %s78 = sadd.s32 %s77, 1
      %s79 = scalar_select %p76, %s77, %s78
      %p82 = pneg %p76
      %p83 = scmp.eq.s32.totalorder %s18, 1
      %p84 = por %p82, %p83
      %p85 = scmp.ne.s32.totalorder %s77, %s80
      %p86 = scmp.eq.s32.totalorder %s18, 0
      %p87 = por %p85, %p86
      %p88 = scmp.ne.s32.totalorder %s77, %s80
      %p89 = scmp.eq.s32.totalorder %s23, 1
      %p90 = por %p88, %p89
      %p91 = scmp.ne.s32.totalorder %s80, %s81
      %p92 = scmp.eq.s32.totalorder %s23, 0
      %p93 = por %p91, %p92
      %p94 = scmp.ne.s32.totalorder %s80, %s81
      %p95 = scmp.eq.s32.totalorder %s24, 1
      %p96 = por %p94, %p95
      %p98 = scmp.ne.s32.totalorder %s81, %s97
      %p99 = scmp.eq.s32.totalorder %s24, 0
      %p100 = por %p98, %p99
      %s101 = ssub.s32 %s26, %s40
      %p102 = scmp.eq.s32.totalorder %s101, 0
      %s104 = sadd.s32 %s103, 1
      %s105 = scalar_select %p102, %s103, %s104
      %p108 = pneg %p102
      %p109 = scmp.eq.s32.totalorder %s18, 1
      %p110 = por %p108, %p109
      %p111 = scmp.ne.s32.totalorder %s103, %s106
      %p112 = scmp.eq.s32.totalorder %s18, 0
      %p113 = por %p111, %p112
      %p114 = scmp.ne.s32.totalorder %s103, %s106
      %p115 = scmp.eq.s32.totalorder %s23, 1
      %p116 = por %p114, %p115
      %p117 = scmp.ne.s32.totalorder %s106, %s107
      %p118 = scmp.eq.s32.totalorder %s23, 0
      %p119 = por %p117, %p118
      %p120 = scmp.ne.s32.totalorder %s106, %s107
      %p121 = scmp.eq.s32.totalorder %s24, 1
      %p122 = por %p120, %p121
      %p124 = scmp.ne.s32.totalorder %s107, %s123
      %p125 = scmp.eq.s32.totalorder %s24, 0
      %p126 = por %p124, %p125
      %s127 = ssub.s32 %s27, %s36
      %p128 = scmp.eq.s32.totalorder %s127, 0
      %s130 = sadd.s32 %s129, 1
      %s131 = scalar_select %p128, %s129, %s130
      %p134 = pneg %p128
      %p135 = scmp.eq.s32.totalorder %s18, 1
      %p136 = por %p134, %p135
      %p137 = scmp.ne.s32.totalorder %s129, %s132
      %p138 = scmp.eq.s32.totalorder %s18, 0
      %p139 = por %p137, %p138
      %p140 = scmp.ne.s32.totalorder %s129, %s132
      %p141 = scmp.eq.s32.totalorder %s23, 1
      %p142 = por %p140, %p141
      %p143 = scmp.ne.s32.totalorder %s132, %s133
      %p144 = scmp.eq.s32.totalorder %s23, 0
      %p145 = por %p143, %p144
      %p146 = scmp.ne.s32.totalorder %s132, %s133
      %p147 = scmp.eq.s32.totalorder %s24, 1
      %p148 = por %p146, %p147
      %p150 = scmp.ne.s32.totalorder %s133, %s149
      %p151 = scmp.eq.s32.totalorder %s24, 0
      %p152 = por %p150, %p151
      %s153 = ssub.s32 %s25, %s44
      %s154 = ssub.s32 %s26, %s40
      %s155 = sor.u32 %s153, %s154
      %s156 = ssub.s32 %s27, %s36
      %s157 = sor.u32 %s155, %s156
      %p158 = scmp.eq.s32.totalorder %s157, 0
      %s160 = sadd.s32 %s159, 1
      %s161 = scalar_select %p158, %s159, %s160
      %p164 = pneg %p158
      %p165 = scmp.eq.s32.totalorder %s18, 1
      %p166 = por %p164, %p165
      %p167 = scmp.ne.s32.totalorder %s159, %s162
      %p168 = scmp.eq.s32.totalorder %s18, 0
      %p169 = por %p167, %p168
      %p170 = scmp.ne.s32.totalorder %s159, %s162
      %p171 = scmp.eq.s32.totalorder %s23, 1
      %p172 = por %p170, %p171
      %p173 = scmp.ne.s32.totalorder %s162, %s163
      %p174 = scmp.eq.s32.totalorder %s23, 0
      %p175 = por %p173, %p174
      %p176 = scmp.ne.s32.totalorder %s162, %s163
      %p177 = scmp.eq.s32.totalorder %s24, 1
      %p178 = por %p176, %p177
      %p180 = scmp.ne.s32.totalorder %s163, %s179
      %p181 = scmp.eq.s32.totalorder %s24, 0
      %p182 = por %p180, %p181
      %s183 = ssub.s32 %s25, %s44
      %s184 = ssub.s32 %s26, %s40
      %s185 = sor.u32 %s183, %s184
      %s186 = ssub.s32 %s27, %s36
      %s187 = sor.u32 %s185, %s186
      %p188 = scmp.eq.s32.totalorder %s187, 0
      %s190 = sadd.s32 %s189, 1
      %s191 = scalar_select %p188, %s189, %s190
      %p194 = pneg %p188
      %p195 = scmp.eq.s32.totalorder %s18, 1
      %p196 = por %p194, %p195
      %p197 = scmp.ne.s32.totalorder %s189, %s192
      %p198 = scmp.eq.s32.totalorder %s18, 0
      %p199 = por %p197, %p198
      %p200 = scmp.ne.s32.totalorder %s189, %s192
      %p201 = scmp.eq.s32.totalorder %s23, 1
      %p202 = por %p200, %p201
      %p203 = scmp.ne.s32.totalorder %s192, %s193
      %p204 = scmp.eq.s32.totalorder %s23, 0
      %p205 = por %p203, %p204
      %p206 = scmp.ne.s32.totalorder %s192, %s193
      %p207 = scmp.eq.s32.totalorder %s24, 1
      %p208 = por %p206, %p207
      %p210 = scmp.ne.s32.totalorder %s193, %s209
      %p211 = scmp.eq.s32.totalorder %s24, 0
      %p212 = por %p210, %p211
      %p213 = scmp.le.s32.totalorder 1, %s18
      %p214 = scmp.lt.s32.totalorder %s18, 3
      %p215 = pnand %p213, %p214
      %p216 = pneg %p215
      // Predicated region
      $region9: #{pct_net_forward.3} parent=5 // pred_check
        _
      $region10: #{pct_net_forward.3} parent=5 // pred_check_branch
        %218 = sbr.rel (%p215) target = $region12
      $region11: #{pct_net_forward.3} parent=5 // pred_region
        %s219 = ssub.s32 %s18, 1
        // Predicated region
        $region13: #{pct_net_forward.3} parent=11 // pred_check
          %p220 = pneg %p119
        $region14: #{pct_net_forward.3} parent=11 // pred_check_branch
          %222 = sbr.rel (%p220) target = $region16
        $region15: #{pct_net_forward.3} parent=11 // pred_region
          %s223 = smul.u32 4, %s29
          %p224 = scmp.lt.s32.totalorder %s223, 3
          %s225 = scalar_select %p224, %s223, 3
          %s226 = smul.addr %s225, 8
          %s227 = scalar_lea.vmem %s2, %s226
          %s228 = smul.u32 4, %s29
        $region16: #{pct_net_forward.3} parent=11 // pred_fallthru
          _
        // Predicated region
        $region17: #{pct_net_forward.3} parent=11 // pred_check
          %p229 = pneg %p145
        $region18: #{pct_net_forward.3} parent=11 // pred_check_branch
          %231 = sbr.rel (%p229) target = $region20
        $region19: #{pct_net_forward.3} parent=11 // pred_region
          %p232 = scmp.lt.s32.totalorder %s30, 0
          %s233 = scalar_select %p232, %s30, 0
          %s234 = smul.addr %s233, 8
          %s235 = scalar_lea.vmem %s3, %s234
        $region20: #{pct_net_forward.3} parent=11 // pred_fallthru
          _
      $region12: #{pct_net_forward.3} parent=5 // pred_fallthru
        _
      %p236 = scmp.lt.s32.totalorder %s18, 2
      // Predicated region
      $region21: #{pct_net_forward.3} parent=5 // pred_check
        %p237 = pneg %p236
      $region22: #{pct_net_forward.3} parent=5 // pred_check_branch
        %239 = sbr.rel (%p237) target = $region24
      $region23: #{pct_net_forward.3} parent=5 // pred_region
        // Predicated region
        $region25: #{pct_net_forward.3} parent=23 // pred_check
          %p240 = pneg %p61
        $region26: #{pct_net_forward.3} parent=23 // pred_check_branch
          %242 = sbr.rel (%p240) target = $region28
        $region27: #{pct_net_forward.3} parent=23 // pred_region
          %s243 = smul.u32 4, %s26
          %p244 = scmp.lt.s32.totalorder %s25, 1
          %s245 = scalar_select %p244, %s25, 1
          %p246 = scmp.lt.s32.totalorder %s243, 3
          %s247 = scalar_select %p246, %s243, 3
          %p248 = scmp.lt.s32.totalorder %s27, 0
          %s249 = scalar_select %p248, %s27, 0
          %s250 = sadd.s32 %s249, %s247
          %s251 = smul.addr %s245, 12
          %s252 = sadd.s32 %s250, %s251
          %s253 = smul.addr %s252, 8
          %s254 = scalar_lea.vmem %s0, %s253
          %s255 = smul.u32 4, %s26
        $region28: #{pct_net_forward.3} parent=23 // pred_fallthru
          _
        // Predicated region
        $region29: #{pct_net_forward.3} parent=23 // pred_check
          %p256 = pneg %p87
        $region30: #{pct_net_forward.3} parent=23 // pred_check_branch
          %258 = sbr.rel (%p256) target = $region32
        $region31: #{pct_net_forward.3} parent=23 // pred_region
          %p259 = scmp.lt.s32.totalorder %s25, 1
          %s260 = scalar_select %p259, %s25, 1
          %s261 = smul.addr %s260, 26
          %s262 = smul.addr %s261, 8
          %s263 = scalar_lea.vmem %s1, %s262
        $region32: #{pct_net_forward.3} parent=23 // pred_fallthru
          _
      $region24: #{pct_net_forward.3} parent=5 // pred_fallthru
        _
      %p264 = scmp.le.s32.totalorder 1, %s18
      %p265 = scmp.lt.s32.totalorder %s18, 3
      %p266 = pnand %p264, %p265
      %p267 = pneg %p266
      // Predicated region
      $region33: #{pct_net_forward.3} parent=5 // pred_check
        _
      $region34: #{pct_net_forward.3} parent=5 // pred_check_branch
        %269 = sbr.rel (%p266) target = $region36
      $region35: #{pct_net_forward.3} parent=5 // pred_region
        %s270 = ssub.s32 %s18, 1
        %s271 = smul.u32 4, %s29
        %p272 = scmp.lt.s32.totalorder %s28, 1
        %s273 = scalar_select %p272, %s28, 1
        %p274 = scmp.lt.s32.totalorder %s271, 3
        %s275 = scalar_select %p274, %s271, 3
        %p276 = scmp.lt.s32.totalorder %s30, 0
        %s277 = scalar_select %p276, %s30, 0
        %s278 = sadd.s32 %s277, %s275
        %s279 = smul.addr %s273, 12
        %s280 = sadd.s32 %s278, %s279
        %s281 = smul.addr %s280, 8
        %s282 = scalar_lea.vmem %s0, %s281
        %p283 = pneg %p67
        %p284 = pneg %p64
        %p285 = scmp.lt.s32.totalorder %s28, 1
        %s286 = scalar_select %p285, %s28, 1
        %s287 = smul.addr %s286, 26
        %s288 = smul.addr %s287, 8
        %s289 = scalar_lea.vmem %s1, %s288
        %p290 = pneg %p93
        %p291 = pneg %p90
        %s292 = smul.u32 4, %s29
        %p293 = scmp.lt.s32.totalorder %s292, 3
        %s294 = scalar_select %p293, %s292, 3
        %s295 = smul.addr %s294, 8
        %s296 = scalar_lea.vmem %s2, %s295
        %p297 = pneg %p119
        %p298 = pneg %p116
        %p299 = scmp.lt.s32.totalorder %s30, 0
        %s300 = scalar_select %p299, %s30, 0
        %s301 = smul.addr %s300, 8
        %s302 = scalar_lea.vmem %s3, %s301
        %p303 = pneg %p145
        %p304 = pneg %p142
        %p305 = pneg %p175
        %p306 = pneg %p172
        %s307 = sand.u32 %s162, 1
        %s308 = scalar_lea.sflag [#allocation3], %s307
        %s309 = sand.u32 %s162, 1
        %s310 = smul.addr %s309, 96
        %s311 = scalar_lea.vmem [#allocation2], %s310
        %p312 = pneg %p205
        %p313 = pneg %p202
        %s314 = sand.u32 %s192, 1
        %s315 = scalar_lea.sflag [#allocation5], %s314
        %s316 = sand.u32 %s192, 1
        %s317 = smul.addr %s316, 384
        %s318 = scalar_lea.vmem [#allocation4], %s317
        %s319 = smul.u32 4, %s29
        %p320 = scmp.lt.s32.totalorder %s28, 1
        %s321 = scalar_select %p320, %s28, 1
        %p322 = scmp.lt.s32.totalorder %s319, 3
        %s323 = scalar_select %p322, %s319, 3
        %p324 = scmp.lt.s32.totalorder %s30, 0
        %s325 = scalar_select %p324, %s30, 0
        %s326 = sadd.s32 %s325, %s323
        %s327 = smul.addr %s321, 12
        %s328 = sadd.s32 %s326, %s327
        %s329 = smul.addr %s328, 8
        %s330 = scalar_lea.vmem %s0, %s329
        %s331 = smul.u32 4, %s29
        %p332 = scmp.lt.s32.totalorder %s28, 1
        %s333 = scalar_select %p332, %s28, 1
        %s334 = smul.addr %s333, 26
        %s335 = smul.addr %s334, 8
        %s336 = scalar_lea.vmem %s1, %s335
        %s337 = smul.u32 4, %s29
        %p338 = scmp.lt.s32.totalorder %s337, 3
        %s339 = scalar_select %p338, %s337, 3
        %s340 = smul.addr %s339, 8
        %s341 = scalar_lea.vmem %s2, %s340
        %s342 = smul.u32 4, %s29
        %p343 = scmp.lt.s32.totalorder %s30, 0
        %s344 = scalar_select %p343, %s30, 0
        %s345 = smul.addr %s344, 8
        %s346 = scalar_lea.vmem %s3, %s345
        %s347 = smul.u32 4, %s29
        %s348 = smul.u32 4, %s29
        %v349 = vld [vmem:[%s341] sm:$0xff]
        %v350 = vld [vmem:[%s341 + $0x8] sm:$0xff]
        %v351 = vld [vmem:[%s341 + $0x10] sm:$0xff]
        %v352 = vld [vmem:[%s341 + $0x18] sm:$0xff]
        %v353 = vld [vmem:[%s346] sm:$0xff]
        %v354 = vld [vmem:[%s346 + $0x8] sm:$0xff]
        %v355 = vld [vmem:[%s336] sm:$0xff]
        %v356 = vld [vmem:[%s336 + $0x8] sm:$0xff]
        %vm357 = vcmask 130048
        %v359 = vsel %vm357, %v349, 0
        %v362 = vsel %vm357, %v350, 0
        %v365 = vsel %vm357, %v351, 0
        %v368 = vsel %vm357, %v352, 0
        %370 = vmatprep.subr.mxu0 0.0
        %371 = vmatpush1.msra.mxu0 0.0
        %372 = vmatprep.subr.mxu0 0.0
        %373 = vmatpush1.msra.mxu0 0.0
        %374 = vmatprep.subr.mxu0 0.0
        %375 = vmatpush1.msra.mxu0 0.0
        %376 = vmatprep.subr.mxu0 0.0
        %377 = vmatpush1.msra.mxu0 0.0
        %378 = vmatprep.subr.mxu0 0.0
        %379 = vmatpush1.msra.mxu0 0.0
        %380 = vmatprep.subr.mxu0 0.0
        %381 = vmatpush1.msra.mxu0 0.0
        %382 = vmatprep.subr.mxu0 0.0
        %383 = vmatpush1.msra.mxu0 0.0
        %384 = vmatprep.subr.mxu0 0.0
        %385 = vmatpush1.msra.mxu0 0.0
        %386 = vmatprep.subr.mxu0 0.0
        %387 = vmatpush1.msra.mxu0 0.0
        %388 = vmatprep.subr.mxu0 0.0
        %389 = vmatpush1.msra.mxu0 0.0
        %390 = vmatprep.subr.mxu0 0.0
        %391 = vmatpush1.msra.mxu0 0.0
        %392 = vmatprep.subr.mxu0 0.0
        %393 = vmatpush1.msra.mxu0 0.0
        %394 = vmatprep.subr.mxu0 0.0
        %395 = vmatpush1.msra.mxu0 0.0
        %396 = vmatprep.subr.mxu0 0.0
        %397 = vmatpush1.msra.mxu0 0.0
        %398 = vmatprep.subr.mxu0 0.0
        %399 = vmatpush1.msra.mxu0 %v356
        %400 = vmatprep.subr.mxu0 0.0
        %401 = vmatpush1.msra.mxu0 %v355
        %402 = vmatprep.subr.mxu0 0.0
        %403 = vmatpush2.msra.mxu0 0.0
        %404 = vmatprep.subr.mxu0 0.0
        %405 = vmatpush2.msra.mxu0 0.0
        %406 = vmatprep.subr.mxu0 0.0
        %407 = vmatpush2.msra.mxu0 0.0
        %408 = vmatprep.subr.mxu0 0.0
        %409 = vmatpush2.msra.mxu0 0.0
        %410 = vmatprep.subr.mxu0 0.0
        %411 = vmatpush2.msra.mxu0 0.0
        %412 = vmatprep.subr.mxu0 0.0
        %413 = vmatpush2.msra.mxu0 0.0
        %414 = vmatprep.subr.mxu0 0.0
        %415 = vmatpush2.msra.mxu0 0.0
        %416 = vmatprep.subr.mxu0 0.0
        %417 = vmatpush2.msra.mxu0 0.0
        %418 = vmatprep.subr.mxu0 0.0
        %419 = vmatpush2.msra.mxu0 0.0
        %420 = vmatprep.subr.mxu0 0.0
        %421 = vmatpush2.msra.mxu0 0.0
        %422 = vmatprep.subr.mxu0 0.0
        %423 = vmatpush2.msra.mxu0 0.0
        %424 = vmatprep.subr.mxu0 0.0
        %425 = vmatpush2.msra.mxu0 0.0
        %426 = vmatprep.subr.mxu0 0.0
        %427 = vmatpush2.msra.mxu0 0.0
        %428 = vmatprep.subr.mxu0 0.0
        %429 = vmatpush2.msra.mxu0 0.0
        %430 = vmatprep.subr.mxu0 0.0
        %431 = vmatpush2.msra.mxu0 0.0
        %432 = vmatprep.subr.mxu0 0.0
        %433 = vmatpush2.msra.mxu0 0.0
        %434 = vmatprep.mubr.f32.mxu0 0.0
        %435 = vmatmul.mubr.f32.gmra.mxu0 %v359
        %v436 = vpop.f32.mrf.mxu0
        %v437 = vadd.f32 0.0, %v436
        %v438 = vpop.f32.mrf.mxu0
        %439 = vmatprep.mubr.f32.mxu0 0.0
        %440 = vmatmul.mubr.f32.gmra.mxu0 %v362
        %v441 = vpop.f32.mrf.mxu0
        %v442 = vadd.f32 0.0, %v441
        %v443 = vpop.f32.mrf.mxu0
        %444 = vmatprep.mubr.f32.mxu0 0.0
        %445 = vmatmul.mubr.f32.gmra.mxu0 %v365
        %v446 = vpop.f32.mrf.mxu0
        %v447 = vadd.f32 0.0, %v446
        %v448 = vpop.f32.mrf.mxu0
        %449 = vmatprep.mubr.f32.mxu0 0.0
        %450 = vmatmul.mubr.f32.gmra.mxu0 %v368
        %v451 = vpop.f32.mrf.mxu0
        %v452 = vadd.f32 0.0, %v451
        %v453 = vpop.f32.mrf.mxu0
        %454 = vdwg.mxu0
        %v456 = vsel %vm357, %v437, 0
        %v459 = vsel %vm357, %v442, 0
        %v462 = vsel %vm357, %v447, 0
        %v465 = vsel %vm357, %v452, 0
        %467 = vmatprep.subr.mxu0 0.0
        %468 = vmatpush1.msra.mxu0 0.0
        %469 = vmatprep.subr.mxu0 0.0
        %470 = vmatpush1.msra.mxu0 0.0
        %471 = vmatprep.subr.mxu0 0.0
        %472 = vmatpush1.msra.mxu0 0.0
        %473 = vmatprep.subr.mxu0 0.0
        %474 = vmatpush1.msra.mxu0 0.0
        %475 = vmatprep.subr.mxu0 0.0
        %476 = vmatpush1.msra.mxu0 0.0
        %477 = vmatprep.subr.mxu0 0.0
        %478 = vmatpush1.msra.mxu0 0.0
        %479 = vmatprep.subr.mxu0 0.0
        %480 = vmatpush1.msra.mxu0 0.0
        %481 = vmatprep.subr.mxu0 0.0
        %482 = vmatpush1.msra.mxu0 0.0
        %483 = vmatprep.subr.mxu0 0.0
        %484 = vmatpush1.msra.mxu0 0.0
        %485 = vmatprep.subr.mxu0 0.0
        %486 = vmatpush1.msra.mxu0 0.0
        %487 = vmatprep.subr.mxu0 0.0
        %488 = vmatpush1.msra.mxu0 0.0
        %489 = vmatprep.subr.mxu0 0.0
        %490 = vmatpush1.msra.mxu0 0.0
        %491 = vmatprep.subr.mxu0 0.0
        %492 = vmatpush1.msra.mxu0 0.0
        %493 = vmatprep.subr.mxu0 0.0
        %494 = vmatpush1.msra.mxu0 0.0
        %495 = vmatprep.subr.mxu0 0.0
        %496 = vmatpush1.msra.mxu0 %v354
        %497 = vmatprep.subr.mxu0 0.0
        %498 = vmatpush1.msra.mxu0 %v353
        %499 = vmatprep.subr.mxu0 0.0
        %500 = vmatpush2.msra.mxu0 0.0
        %501 = vmatprep.subr.mxu0 0.0
        %502 = vmatpush2.msra.mxu0 0.0
        %503 = vmatprep.subr.mxu0 0.0
        %504 = vmatpush2.msra.mxu0 0.0
        %505 = vmatprep.subr.mxu0 0.0
        %506 = vmatpush2.msra.mxu0 0.0
        %507 = vmatprep.subr.mxu0 0.0
        %508 = vmatpush2.msra.mxu0 0.0
        %509 = vmatprep.subr.mxu0 0.0
        %510 = vmatpush2.msra.mxu0 0.0
        %511 = vmatprep.subr.mxu0 0.0
        %512 = vmatpush2.msra.mxu0 0.0
        %513 = vmatprep.subr.mxu0 0.0
        %514 = vmatpush2.msra.mxu0 0.0
        %515 = vmatprep.subr.mxu0 0.0
        %516 = vmatpush2.msra.mxu0 0.0
        %517 = vmatprep.subr.mxu0 0.0
        %518 = vmatpush2.msra.mxu0 0.0
        %519 = vmatprep.subr.mxu0 0.0
        %520 = vmatpush2.msra.mxu0 0.0
        %521 = vmatprep.subr.mxu0 0.0
        %522 = vmatpush2.msra.mxu0 0.0
        %523 = vmatprep.subr.mxu0 0.0
        %524 = vmatpush2.msra.mxu0 0.0
        %525 = vmatprep.subr.mxu0 0.0
        %526 = vmatpush2.msra.mxu0 0.0
        %527 = vmatprep.subr.mxu0 0.0
        %528 = vmatpush2.msra.mxu0 0.0
        %529 = vmatprep.subr.mxu0 0.0
        %530 = vmatpush2.msra.mxu0 0.0
        %531 = vmatprep.mubr.f32.mxu0 0.0
        %532 = vmatmul.mubr.f32.gmra.mxu0 %v456
        %v533 = vpop.f32.mrf.mxu0
        %v534 = vadd.f32 0.0, %v533
        %v535 = vpop.f32.mrf.mxu0
        %536 = vmatprep.mubr.f32.mxu0 0.0
        %537 = vmatmul.mubr.f32.gmra.mxu0 %v459
        %v538 = vpop.f32.mrf.mxu0
        %v539 = vadd.f32 0.0, %v538
        %v540 = vpop.f32.mrf.mxu0
        %541 = vmatprep.mubr.f32.mxu0 0.0
        %542 = vmatmul.mubr.f32.gmra.mxu0 %v462
        %v543 = vpop.f32.mrf.mxu0
        %v544 = vadd.f32 0.0, %v543
        %v545 = vpop.f32.mrf.mxu0
        %546 = vmatprep.mubr.f32.mxu0 0.0
        %547 = vmatmul.mubr.f32.gmra.mxu0 %v465
        %v548 = vpop.f32.mrf.mxu0
        %v549 = vadd.f32 0.0, %v548
        %v550 = vpop.f32.mrf.mxu0
        %551 = vdwg.mxu0
        %vm552 = vcmask 261120
        %553 = vst.msk [vmem:[%s318] sm:$0xff] %vm552, %v534
        %554 = vst.msk [vmem:[%s318 + $0x8] sm:$0xff] %vm552, %v539
        %555 = vst.msk [vmem:[%s318 + $0x10] sm:$0xff] %vm552, %v544
        %556 = vst.msk [vmem:[%s318 + $0x18] sm:$0xff] %vm552, %v549
        %s557 = scalar_lea.vmem %s336, 16
        %v558 = vld [vmem:[%s557] sm:$0xff]
        %v559 = vld [vmem:[%s557 + $0x8] sm:$0xff]
        %560 = vmatprep.subr.mxu0 0.0
        %561 = vmatpush1.msra.mxu0 0.0
        %562 = vmatprep.subr.mxu0 0.0
        %563 = vmatpush1.msra.mxu0 0.0
        %564 = vmatprep.subr.mxu0 0.0
        %565 = vmatpush1.msra.mxu0 0.0
        %566 = vmatprep.subr.mxu0 0.0
        %567 = vmatpush1.msra.mxu0 0.0
        %568 = vmatprep.subr.mxu0 0.0
        %569 = vmatpush1.msra.mxu0 0.0
        %570 = vmatprep.subr.mxu0 0.0
        %571 = vmatpush1.msra.mxu0 0.0
        %572 = vmatprep.subr.mxu0 0.0
        %573 = vmatpush1.msra.mxu0 0.0
        %574 = vmatprep.subr.mxu0 0.0
        %575 = vmatpush1.msra.mxu0 0.0
        %576 = vmatprep.subr.mxu0 0.0
        %577 = vmatpush1.msra.mxu0 0.0
        %578 = vmatprep.subr.mxu0 0.0
        %579 = vmatpush1.msra.mxu0 0.0
        %580 = vmatprep.subr.mxu0 0.0
        %581 = vmatpush1.msra.mxu0 0.0
        %582 = vmatprep.subr.mxu0 0.0
        %583 = vmatpush1.msra.mxu0 0.0
        %584 = vmatprep.subr.mxu0 0.0
        %585 = vmatpush1.msra.mxu0 0.0
        %586 = vmatprep.subr.mxu0 0.0
        %587 = vmatpush1.msra.mxu0 0.0
        %588 = vmatprep.subr.mxu0 0.0
        %589 = vmatpush1.msra.mxu0 %v559
        %590 = vmatprep.subr.mxu0 0.0
        %591 = vmatpush1.msra.mxu0 %v558
        %592 = vmatprep.subr.mxu0 0.0
        %593 = vmatpush2.msra.mxu0 0.0
        %594 = vmatprep.subr.mxu0 0.0
        %595 = vmatpush2.msra.mxu0 0.0
        %596 = vmatprep.subr.mxu0 0.0
        %597 = vmatpush2.msra.mxu0 0.0
        %598 = vmatprep.subr.mxu0 0.0
        %599 = vmatpush2.msra.mxu0 0.0
        %600 = vmatprep.subr.mxu0 0.0
        %601 = vmatpush2.msra.mxu0 0.0
        %602 = vmatprep.subr.mxu0 0.0
        %603 = vmatpush2.msra.mxu0 0.0
        %604 = vmatprep.subr.mxu0 0.0
        %605 = vmatpush2.msra.mxu0 0.0
        %606 = vmatprep.subr.mxu0 0.0
        %607 = vmatpush2.msra.mxu0 0.0
        %608 = vmatprep.subr.mxu0 0.0
        %609 = vmatpush2.msra.mxu0 0.0
        %610 = vmatprep.subr.mxu0 0.0
        %611 = vmatpush2.msra.mxu0 0.0
        %612 = vmatprep.subr.mxu0 0.0
        %613 = vmatpush2.msra.mxu0 0.0
        %614 = vmatprep.subr.mxu0 0.0
        %615 = vmatpush2.msra.mxu0 0.0
        %616 = vmatprep.subr.mxu0 0.0
        %617 = vmatpush2.msra.mxu0 0.0
        %618 = vmatprep.subr.mxu0 0.0
        %619 = vmatpush2.msra.mxu0 0.0
        %620 = vmatprep.subr.mxu0 0.0
        %621 = vmatpush2.msra.mxu0 0.0
        %622 = vmatprep.subr.mxu0 0.0
        %623 = vmatpush2.msra.mxu0 0.0
        %624 = vmatprep.mubr.f32.mxu0 0.0
        %625 = vmatmul.mubr.f32.gmra.mxu0 %v359
        %v626 = vpop.f32.mrf.mxu0
        %v627 = vadd.f32 0.0, %v626
        %v628 = vpop.f32.mrf.mxu0
        %629 = vmatprep.mubr.f32.mxu0 0.0
        %630 = vmatmul.mubr.f32.gmra.mxu0 %v362
        %v631 = vpop.f32.mrf.mxu0
        %v632 = vadd.f32 0.0, %v631
        %v633 = vpop.f32.mrf.mxu0
        %634 = vmatprep.mubr.f32.mxu0 0.0
        %635 = vmatmul.mubr.f32.gmra.mxu0 %v365
        %v636 = vpop.f32.mrf.mxu0
        %v637 = vadd.f32 0.0, %v636
        %v638 = vpop.f32.mrf.mxu0
        %639 = vmatprep.mubr.f32.mxu0 0.0
        %640 = vmatmul.mubr.f32.gmra.mxu0 %v368
        %v641 = vpop.f32.mrf.mxu0
        %v642 = vadd.f32 0.0, %v641
        %v643 = vpop.f32.mrf.mxu0
        %644 = vdwg.mxu0
        %v646 = vsel %vm357, %v627, 0
        %v649 = vsel %vm357, %v632, 0
        %v652 = vsel %vm357, %v637, 0
        %v655 = vsel %vm357, %v642, 0
        %657 = vmatprep.subr.mxu0 0.0
        %658 = vmatpush1.msra.mxu0 0.0
        %659 = vmatprep.subr.mxu0 0.0
        %660 = vmatpush1.msra.mxu0 0.0
        %661 = vmatprep.subr.mxu0 0.0
        %662 = vmatpush1.msra.mxu0 0.0
        %663 = vmatprep.subr.mxu0 0.0
        %664 = vmatpush1.msra.mxu0 0.0
        %665 = vmatprep.subr.mxu0 0.0
        %666 = vmatpush1.msra.mxu0 0.0
        %667 = vmatprep.subr.mxu0 0.0
        %668 = vmatpush1.msra.mxu0 0.0
        %669 = vmatprep.subr.mxu0 0.0
        %670 = vmatpush1.msra.mxu0 0.0
        %671 = vmatprep.subr.mxu0 0.0
        %672 = vmatpush1.msra.mxu0 0.0
        %673 = vmatprep.subr.mxu0 0.0
        %674 = vmatpush1.msra.mxu0 0.0
        %675 = vmatprep.subr.mxu0 0.0
        %676 = vmatpush1.msra.mxu0 0.0
        %677 = vmatprep.subr.mxu0 0.0
        %678 = vmatpush1.msra.mxu0 0.0
        %679 = vmatprep.subr.mxu0 0.0
        %680 = vmatpush1.msra.mxu0 0.0
        %681 = vmatprep.subr.mxu0 0.0
        %682 = vmatpush1.msra.mxu0 0.0
        %683 = vmatprep.subr.mxu0 0.0
        %684 = vmatpush1.msra.mxu0 0.0
        %685 = vmatprep.subr.mxu0 0.0
        %686 = vmatpush1.msra.mxu0 %v354
        %687 = vmatprep.subr.mxu0 0.0
        %688 = vmatpush1.msra.mxu0 %v353
        %689 = vmatprep.subr.mxu0 0.0
        %690 = vmatpush2.msra.mxu0 0.0
        %691 = vmatprep.subr.mxu0 0.0
        %692 = vmatpush2.msra.mxu0 0.0
        %693 = vmatprep.subr.mxu0 0.0
        %694 = vmatpush2.msra.mxu0 0.0
        %695 = vmatprep.subr.mxu0 0.0
        %696 = vmatpush2.msra.mxu0 0.0
        %697 = vmatprep.subr.mxu0 0.0
        %698 = vmatpush2.msra.mxu0 0.0
        %699 = vmatprep.subr.mxu0 0.0
        %700 = vmatpush2.msra.mxu0 0.0
        %701 = vmatprep.subr.mxu0 0.0
        %702 = vmatpush2.msra.mxu0 0.0
        %703 = vmatprep.subr.mxu0 0.0
        %704 = vmatpush2.msra.mxu0 0.0
        %705 = vmatprep.subr.mxu0 0.0
        %706 = vmatpush2.msra.mxu0 0.0
        %707 = vmatprep.subr.mxu0 0.0
        %708 = vmatpush2.msra.mxu0 0.0
        %709 = vmatprep.subr.mxu0 0.0
        %710 = vmatpush2.msra.mxu0 0.0
        %711 = vmatprep.subr.mxu0 0.0
        %712 = vmatpush2.msra.mxu0 0.0
        %713 = vmatprep.subr.mxu0 0.0
        %714 = vmatpush2.msra.mxu0 0.0
        %715 = vmatprep.subr.mxu0 0.0
        %716 = vmatpush2.msra.mxu0 0.0
        %717 = vmatprep.subr.mxu0 0.0
        %718 = vmatpush2.msra.mxu0 0.0
        %719 = vmatprep.subr.mxu0 0.0
        %720 = vmatpush2.msra.mxu0 0.0
        %721 = vmatprep.mubr.f32.mxu0 0.0
        %722 = vmatmul.mubr.f32.gmra.mxu0 %v646
        %v723 = vpop.f32.mrf.mxu0
        %v724 = vadd.f32 0.0, %v723
        %v725 = vpop.f32.mrf.mxu0
        %726 = vmatprep.mubr.f32.mxu0 0.0
        %727 = vmatmul.mubr.f32.gmra.mxu0 %v649
        %v728 = vpop.f32.mrf.mxu0
        %v729 = vadd.f32 0.0, %v728
        %v730 = vpop.f32.mrf.mxu0
        %731 = vmatprep.mubr.f32.mxu0 0.0
        %732 = vmatmul.mubr.f32.gmra.mxu0 %v652
        %v733 = vpop.f32.mrf.mxu0
        %v734 = vadd.f32 0.0, %v733
        %v735 = vpop.f32.mrf.mxu0
        %736 = vmatprep.mubr.f32.mxu0 0.0
        %737 = vmatmul.mubr.f32.gmra.mxu0 %v655
        %v738 = vpop.f32.mrf.mxu0
        %v739 = vadd.f32 0.0, %v738
        %v740 = vpop.f32.mrf.mxu0
        %741 = vdwg.mxu0
        %s742 = scalar_lea.vmem %s318, 32 [#allocation4]
        %743 = vst.msk [vmem:[%s742] sm:$0xff] %vm552, %v724
        %744 = vst.msk [vmem:[%s742 + $0x8] sm:$0xff] %vm552, %v729
        %745 = vst.msk [vmem:[%s742 + $0x10] sm:$0xff] %vm552, %v734
        %746 = vst.msk [vmem:[%s742 + $0x18] sm:$0xff] %vm552, %v739
        %s747 = scalar_lea.vmem %s336, 32
        %v748 = vld [vmem:[%s747] sm:$0xff]
        %v749 = vld [vmem:[%s747 + $0x8] sm:$0xff]
        %750 = vmatprep.subr.mxu0 0.0
        %751 = vmatpush1.msra.mxu0 0.0
        %752 = vmatprep.subr.mxu0 0.0
        %753 = vmatpush1.msra.mxu0 0.0
        %754 = vmatprep.subr.mxu0 0.0
        %755 = vmatpush1.msra.mxu0 0.0
        %756 = vmatprep.subr.mxu0 0.0
        %757 = vmatpush1.msra.mxu0 0.0
        %758 = vmatprep.subr.mxu0 0.0
        %759 = vmatpush1.msra.mxu0 0.0
        %760 = vmatprep.subr.mxu0 0.0
        %761 = vmatpush1.msra.mxu0 0.0
        %762 = vmatprep.subr.mxu0 0.0
        %763 = vmatpush1.msra.mxu0 0.0
        %764 = vmatprep.subr.mxu0 0.0
        %765 = vmatpush1.msra.mxu0 0.0
        %766 = vmatprep.subr.mxu0 0.0
        %767 = vmatpush1.msra.mxu0 0.0
        %768 = vmatprep.subr.mxu0 0.0
        %769 = vmatpush1.msra.mxu0 0.0
        %770 = vmatprep.subr.mxu0 0.0
        %771 = vmatpush1.msra.mxu0 0.0
        %772 = vmatprep.subr.mxu0 0.0
        %773 = vmatpush1.msra.mxu0 0.0
        %774 = vmatprep.subr.mxu0 0.0
        %775 = vmatpush1.msra.mxu0 0.0
        %776 = vmatprep.subr.mxu0 0.0
        %777 = vmatpush1.msra.mxu0 0.0
        %778 = vmatprep.subr.mxu0 0.0
        %779 = vmatpush1.msra.mxu0 %v749
        %780 = vmatprep.subr.mxu0 0.0
        %781 = vmatpush1.msra.mxu0 %v748
        %782 = vmatprep.subr.mxu0 0.0
        %783 = vmatpush2.msra.mxu0 0.0
        %784 = vmatprep.subr.mxu0 0.0
        %785 = vmatpush2.msra.mxu0 0.0
        %786 = vmatprep.subr.mxu0 0.0
        %787 = vmatpush2.msra.mxu0 0.0
        %788 = vmatprep.subr.mxu0 0.0
        %789 = vmatpush2.msra.mxu0 0.0
        %790 = vmatprep.subr.mxu0 0.0
        %791 = vmatpush2.msra.mxu0 0.0
        %792 = vmatprep.subr.mxu0 0.0
        %793 = vmatpush2.msra.mxu0 0.0
        %794 = vmatprep.subr.mxu0 0.0
        %795 = vmatpush2.msra.mxu0 0.0
        %796 = vmatprep.subr.mxu0 0.0
        %797 = vmatpush2.msra.mxu0 0.0
        %798 = vmatprep.subr.mxu0 0.0
        %799 = vmatpush2.msra.mxu0 0.0
        %800 = vmatprep.subr.mxu0 0.0
        %801 = vmatpush2.msra.mxu0 0.0
        %802 = vmatprep.subr.mxu0 0.0
        %803 = vmatpush2.msra.mxu0 0.0
        %804 = vmatprep.subr.mxu0 0.0
        %805 = vmatpush2.msra.mxu0 0.0
        %806 = vmatprep.subr.mxu0 0.0
        %807 = vmatpush2.msra.mxu0 0.0
        %808 = vmatprep.subr.mxu0 0.0
        %809 = vmatpush2.msra.mxu0 0.0
        %810 = vmatprep.subr.mxu0 0.0
        %811 = vmatpush2.msra.mxu0 0.0
        %812 = vmatprep.subr.mxu0 0.0
        %813 = vmatpush2.msra.mxu0 0.0
        %814 = vmatprep.mubr.f32.mxu0 0.0
        %815 = vmatmul.mubr.f32.gmra.mxu0 %v359
        %v816 = vpop.f32.mrf.mxu0
        %v817 = vadd.f32 0.0, %v816
        %v818 = vpop.f32.mrf.mxu0
        %819 = vmatprep.mubr.f32.mxu0 0.0
        %820 = vmatmul.mubr.f32.gmra.mxu0 %v362
        %v821 = vpop.f32.mrf.mxu0
        %v822 = vadd.f32 0.0, %v821
        %v823 = vpop.f32.mrf.mxu0
        %824 = vmatprep.mubr.f32.mxu0 0.0
        %825 = vmatmul.mubr.f32.gmra.mxu0 %v365
        %v826 = vpop.f32.mrf.mxu0
        %v827 = vadd.f32 0.0, %v826
        %v828 = vpop.f32.mrf.mxu0
        %829 = vmatprep.mubr.f32.mxu0 0.0
        %830 = vmatmul.mubr.f32.gmra.mxu0 %v368
        %v831 = vpop.f32.mrf.mxu0
        %v832 = vadd.f32 0.0, %v831
        %v833 = vpop.f32.mrf.mxu0
        %834 = vdwg.mxu0
        %v836 = vsel %vm357, %v817, 0
        %v839 = vsel %vm357, %v822, 0
        %v842 = vsel %vm357, %v827, 0
        %v845 = vsel %vm357, %v832, 0
        %847 = vmatprep.subr.mxu0 0.0
        %848 = vmatpush1.msra.mxu0 0.0
        %849 = vmatprep.subr.mxu0 0.0
        %850 = vmatpush1.msra.mxu0 0.0
        %851 = vmatprep.subr.mxu0 0.0
        %852 = vmatpush1.msra.mxu0 0.0
        %853 = vmatprep.subr.mxu0 0.0
        %854 = vmatpush1.msra.mxu0 0.0
        %855 = vmatprep.subr.mxu0 0.0
        %856 = vmatpush1.msra.mxu0 0.0
        %857 = vmatprep.subr.mxu0 0.0
        %858 = vmatpush1.msra.mxu0 0.0
        %859 = vmatprep.subr.mxu0 0.0
        %860 = vmatpush1.msra.mxu0 0.0
        %861 = vmatprep.subr.mxu0 0.0
        %862 = vmatpush1.msra.mxu0 0.0
        %863 = vmatprep.subr.mxu0 0.0
        %864 = vmatpush1.msra.mxu0 0.0
        %865 = vmatprep.subr.mxu0 0.0
        %866 = vmatpush1.msra.mxu0 0.0
        %867 = vmatprep.subr.mxu0 0.0
        %868 = vmatpush1.msra.mxu0 0.0
        %869 = vmatprep.subr.mxu0 0.0
        %870 = vmatpush1.msra.mxu0 0.0
        %871 = vmatprep.subr.mxu0 0.0
        %872 = vmatpush1.msra.mxu0 0.0
        %873 = vmatprep.subr.mxu0 0.0
        %874 = vmatpush1.msra.mxu0 0.0
        %875 = vmatprep.subr.mxu0 0.0
        %876 = vmatpush1.msra.mxu0 %v354
        %877 = vmatprep.subr.mxu0 0.0
        %878 = vmatpush1.msra.mxu0 %v353
        %879 = vmatprep.subr.mxu0 0.0
        %880 = vmatpush2.msra.mxu0 0.0
        %881 = vmatprep.subr.mxu0 0.0
        %882 = vmatpush2.msra.mxu0 0.0
        %883 = vmatprep.subr.mxu0 0.0
        %884 = vmatpush2.msra.mxu0 0.0
        %885 = vmatprep.subr.mxu0 0.0
        %886 = vmatpush2.msra.mxu0 0.0
        %887 = vmatprep.subr.mxu0 0.0
        %888 = vmatpush2.msra.mxu0 0.0
        %889 = vmatprep.subr.mxu0 0.0
        %890 = vmatpush2.msra.mxu0 0.0
        %891 = vmatprep.subr.mxu0 0.0
        %892 = vmatpush2.msra.mxu0 0.0
        %893 = vmatprep.subr.mxu0 0.0
        %894 = vmatpush2.msra.mxu0 0.0
        %895 = vmatprep.subr.mxu0 0.0
        %896 = vmatpush2.msra.mxu0 0.0
        %897 = vmatprep.subr.mxu0 0.0
        %898 = vmatpush2.msra.mxu0 0.0
        %899 = vmatprep.subr.mxu0 0.0
        %900 = vmatpush2.msra.mxu0 0.0
        %901 = vmatprep.subr.mxu0 0.0
        %902 = vmatpush2.msra.mxu0 0.0
        %903 = vmatprep.subr.mxu0 0.0
        %904 = vmatpush2.msra.mxu0 0.0
        %905 = vmatprep.subr.mxu0 0.0
        %906 = vmatpush2.msra.mxu0 0.0
        %907 = vmatprep.subr.mxu0 0.0
        %908 = vmatpush2.msra.mxu0 0.0
        %909 = vmatprep.subr.mxu0 0.0
        %910 = vmatpush2.msra.mxu0 0.0
        %911 = vmatprep.mubr.f32.mxu0 0.0
        %912 = vmatmul.mubr.f32.gmra.mxu0 %v836
        %v913 = vpop.f32.mrf.mxu0
        %v914 = vadd.f32 0.0, %v913
        %v915 = vpop.f32.mrf.mxu0
        %916 = vmatprep.mubr.f32.mxu0 0.0
        %917 = vmatmul.mubr.f32.gmra.mxu0 %v839
        %v918 = vpop.f32.mrf.mxu0
        %v919 = vadd.f32 0.0, %v918
        %v920 = vpop.f32.mrf.mxu0
        %921 = vmatprep.mubr.f32.mxu0 0.0
        %922 = vmatmul.mubr.f32.gmra.mxu0 %v842
        %v923 = vpop.f32.mrf.mxu0
        %v924 = vadd.f32 0.0, %v923
        %v925 = vpop.f32.mrf.mxu0
        %926 = vmatprep.mubr.f32.mxu0 0.0
        %927 = vmatmul.mubr.f32.gmra.mxu0 %v845
        %v928 = vpop.f32.mrf.mxu0
        %v929 = vadd.f32 0.0, %v928
        %v930 = vpop.f32.mrf.mxu0
        %931 = vdwg.mxu0
        %s932 = scalar_lea.vmem %s318, 64 [#allocation4]
        %933 = vst.msk [vmem:[%s932] sm:$0xff] %vm552, %v914
        %934 = vst.msk [vmem:[%s932 + $0x8] sm:$0xff] %vm552, %v919
        %935 = vst.msk [vmem:[%s932 + $0x10] sm:$0xff] %vm552, %v924
        %936 = vst.msk [vmem:[%s932 + $0x18] sm:$0xff] %vm552, %v929
        %s937 = scalar_lea.vmem %s336, 48
        %v938 = vld [vmem:[%s937] sm:$0xff]
        %v939 = vld [vmem:[%s937 + $0x8] sm:$0xff]
        %940 = vmatprep.subr.mxu0 0.0
        %941 = vmatpush1.msra.mxu0 0.0
        %942 = vmatprep.subr.mxu0 0.0
        %943 = vmatpush1.msra.mxu0 0.0
        %944 = vmatprep.subr.mxu0 0.0
        %945 = vmatpush1.msra.mxu0 0.0
        %946 = vmatprep.subr.mxu0 0.0
        %947 = vmatpush1.msra.mxu0 0.0
        %948 = vmatprep.subr.mxu0 0.0
        %949 = vmatpush1.msra.mxu0 0.0
        %950 = vmatprep.subr.mxu0 0.0
        %951 = vmatpush1.msra.mxu0 0.0
        %952 = vmatprep.subr.mxu0 0.0
        %953 = vmatpush1.msra.mxu0 0.0
        %954 = vmatprep.subr.mxu0 0.0
        %955 = vmatpush1.msra.mxu0 0.0
        %956 = vmatprep.subr.mxu0 0.0
        %957 = vmatpush1.msra.mxu0 0.0
        %958 = vmatprep.subr.mxu0 0.0
        %959 = vmatpush1.msra.mxu0 0.0
        %960 = vmatprep.subr.mxu0 0.0
        %961 = vmatpush1.msra.mxu0 0.0
        %962 = vmatprep.subr.mxu0 0.0
        %963 = vmatpush1.msra.mxu0 0.0
        %964 = vmatprep.subr.mxu0 0.0
        %965 = vmatpush1.msra.mxu0 0.0
        %966 = vmatprep.subr.mxu0 0.0
        %967 = vmatpush1.msra.mxu0 0.0
        %968 = vmatprep.subr.mxu0 0.0
        %969 = vmatpush1.msra.mxu0 %v939
        %970 = vmatprep.subr.mxu0 0.0
        %971 = vmatpush1.msra.mxu0 %v938
        %972 = vmatprep.subr.mxu0 0.0
        %973 = vmatpush2.msra.mxu0 0.0
        %974 = vmatprep.subr.mxu0 0.0
        %975 = vmatpush2.msra.mxu0 0.0
        %976 = vmatprep.subr.mxu0 0.0
        %977 = vmatpush2.msra.mxu0 0.0
        %978 = vmatprep.subr.mxu0 0.0
        %979 = vmatpush2.msra.mxu0 0.0
        %980 = vmatprep.subr.mxu0 0.0
        %981 = vmatpush2.msra.mxu0 0.0
        %982 = vmatprep.subr.mxu0 0.0
        %983 = vmatpush2.msra.mxu0 0.0
        %984 = vmatprep.subr.mxu0 0.0
        %985 = vmatpush2.msra.mxu0 0.0
        %986 = vmatprep.subr.mxu0 0.0
        %987 = vmatpush2.msra.mxu0 0.0
        %988 = vmatprep.subr.mxu0 0.0
        %989 = vmatpush2.msra.mxu0 0.0
        %990 = vmatprep.subr.mxu0 0.0
        %991 = vmatpush2.msra.mxu0 0.0
        %992 = vmatprep.subr.mxu0 0.0
        %993 = vmatpush2.msra.mxu0 0.0
        %994 = vmatprep.subr.mxu0 0.0
        %995 = vmatpush2.msra.mxu0 0.0
        %996 = vmatprep.subr.mxu0 0.0
        %997 = vmatpush2.msra.mxu0 0.0
        %998 = vmatprep.subr.mxu0 0.0
        %999 = vmatpush2.msra.mxu0 0.0
        %1000 = vmatprep.subr.mxu0 0.0
        %1001 = vmatpush2.msra.mxu0 0.0
        %1002 = vmatprep.subr.mxu0 0.0
        %1003 = vmatpush2.msra.mxu0 0.0
        %1004 = vmatprep.mubr.f32.mxu0 0.0
        %1005 = vmatmul.mubr.f32.gmra.mxu0 %v359
        %v1006 = vpop.f32.mrf.mxu0
        %v1007 = vadd.f32 0.0, %v1006
        %v1008 = vpop.f32.mrf.mxu0
        %1009 = vmatprep.mubr.f32.mxu0 0.0
        %1010 = vmatmul.mubr.f32.gmra.mxu0 %v362
        %v1011 = vpop.f32.mrf.mxu0
        %v1012 = vadd.f32 0.0, %v1011
        %v1013 = vpop.f32.mrf.mxu0
        %1014 = vmatprep.mubr.f32.mxu0 0.0
        %1015 = vmatmul.mubr.f32.gmra.mxu0 %v365
        %v1016 = vpop.f32.mrf.mxu0
        %v1017 = vadd.f32 0.0, %v1016
        %v1018 = vpop.f32.mrf.mxu0
        %1019 = vmatprep.mubr.f32.mxu0 0.0
        %1020 = vmatmul.mubr.f32.gmra.mxu0 %v368
        %v1021 = vpop.f32.mrf.mxu0
        %v1022 = vadd.f32 0.0, %v1021
        %v1023 = vpop.f32.mrf.mxu0
        %1024 = vdwg.mxu0
        %v1026 = vsel %vm357, %v1007, 0
        %v1029 = vsel %vm357, %v1012, 0
        %v1032 = vsel %vm357, %v1017, 0
        %v1035 = vsel %vm357, %v1022, 0
        %1037 = vmatprep.subr.mxu0 0.0
        %1038 = vmatpush1.msra.mxu0 0.0
        %1039 = vmatprep.subr.mxu0 0.0
        %1040 = vmatpush1.msra.mxu0 0.0
        %1041 = vmatprep.subr.mxu0 0.0
        %1042 = vmatpush1.msra.mxu0 0.0
        %1043 = vmatprep.subr.mxu0 0.0
        %1044 = vmatpush1.msra.mxu0 0.0
        %1045 = vmatprep.subr.mxu0 0.0
        %1046 = vmatpush1.msra.mxu0 0.0
        %1047 = vmatprep.subr.mxu0 0.0
        %1048 = vmatpush1.msra.mxu0 0.0
        %1049 = vmatprep.subr.mxu0 0.0
        %1050 = vmatpush1.msra.mxu0 0.0
        %1051 = vmatprep.subr.mxu0 0.0
        %1052 = vmatpush1.msra.mxu0 0.0
        %1053 = vmatprep.subr.mxu0 0.0
        %1054 = vmatpush1.msra.mxu0 0.0
        %1055 = vmatprep.subr.mxu0 0.0
        %1056 = vmatpush1.msra.mxu0 0.0
        %1057 = vmatprep.subr.mxu0 0.0
        %1058 = vmatpush1.msra.mxu0 0.0
        %1059 = vmatprep.subr.mxu0 0.0
        %1060 = vmatpush1.msra.mxu0 0.0
        %1061 = vmatprep.subr.mxu0 0.0
        %1062 = vmatpush1.msra.mxu0 0.0
        %1063 = vmatprep.subr.mxu0 0.0
        %1064 = vmatpush1.msra.mxu0 0.0
        %1065 = vmatprep.subr.mxu0 0.0
        %1066 = vmatpush1.msra.mxu0 %v354
        %1067 = vmatprep.subr.mxu0 0.0
        %1068 = vmatpush1.msra.mxu0 %v353
        %1069 = vmatprep.subr.mxu0 0.0
        %1070 = vmatpush2.msra.mxu0 0.0
        %1071 = vmatprep.subr.mxu0 0.0
        %1072 = vmatpush2.msra.mxu0 0.0
        %1073 = vmatprep.subr.mxu0 0.0
        %1074 = vmatpush2.msra.mxu0 0.0
        %1075 = vmatprep.subr.mxu0 0.0
        %1076 = vmatpush2.msra.mxu0 0.0
        %1077 = vmatprep.subr.mxu0 0.0
        %1078 = vmatpush2.msra.mxu0 0.0
        %1079 = vmatprep.subr.mxu0 0.0
        %1080 = vmatpush2.msra.mxu0 0.0
        %1081 = vmatprep.subr.mxu0 0.0
        %1082 = vmatpush2.msra.mxu0 0.0
        %1083 = vmatprep.subr.mxu0 0.0
        %1084 = vmatpush2.msra.mxu0 0.0
        %1085 = vmatprep.subr.mxu0 0.0
        %1086 = vmatpush2.msra.mxu0 0.0
        %1087 = vmatprep.subr.mxu0 0.0
        %1088 = vmatpush2.msra.mxu0 0.0
        %1089 = vmatprep.subr.mxu0 0.0
        %1090 = vmatpush2.msra.mxu0 0.0
        %1091 = vmatprep.subr.mxu0 0.0
        %1092 = vmatpush2.msra.mxu0 0.0
        %1093 = vmatprep.subr.mxu0 0.0
        %1094 = vmatpush2.msra.mxu0 0.0
        %1095 = vmatprep.subr.mxu0 0.0
        %1096 = vmatpush2.msra.mxu0 0.0
        %1097 = vmatprep.subr.mxu0 0.0
        %1098 = vmatpush2.msra.mxu0 0.0
        %1099 = vmatprep.subr.mxu0 0.0
        %1100 = vmatpush2.msra.mxu0 0.0
        %1101 = vmatprep.mubr.f32.mxu0 0.0
        %1102 = vmatmul.mubr.f32.gmra.mxu0 %v1026
        %v1103 = vpop.f32.mrf.mxu0
        %v1104 = vadd.f32 0.0, %v1103
        %v1105 = vpop.f32.mrf.mxu0
        %1106 = vmatprep.mubr.f32.mxu0 0.0
        %1107 = vmatmul.mubr.f32.gmra.mxu0 %v1029
        %v1108 = vpop.f32.mrf.mxu0
        %v1109 = vadd.f32 0.0, %v1108
        %v1110 = vpop.f32.mrf.mxu0
        %1111 = vmatprep.mubr.f32.mxu0 0.0
        %1112 = vmatmul.mubr.f32.gmra.mxu0 %v1032
        %v1113 = vpop.f32.mrf.mxu0
        %v1114 = vadd.f32 0.0, %v1113
        %v1115 = vpop.f32.mrf.mxu0
        %1116 = vmatprep.mubr.f32.mxu0 0.0
        %1117 = vmatmul.mubr.f32.gmra.mxu0 %v1035
        %v1118 = vpop.f32.mrf.mxu0
        %v1119 = vadd.f32 0.0, %v1118
        %v1120 = vpop.f32.mrf.mxu0
        %1121 = vdwg.mxu0
        %s1122 = scalar_lea.vmem %s318, 96 [#allocation4]
        %1123 = vst.msk [vmem:[%s1122] sm:$0xff] %vm552, %v1104
        %1124 = vst.msk [vmem:[%s1122 + $0x8] sm:$0xff] %vm552, %v1109
        %1125 = vst.msk [vmem:[%s1122 + $0x10] sm:$0xff] %vm552, %v1114
        %1126 = vst.msk [vmem:[%s1122 + $0x18] sm:$0xff] %vm552, %v1119
        %s1127 = scalar_lea.vmem %s336, 64
        %v1128 = vld [vmem:[%s1127] sm:$0xff]
        %v1129 = vld [vmem:[%s1127 + $0x8] sm:$0xff]
        %1130 = vmatprep.subr.mxu0 0.0
        %1131 = vmatpush1.msra.mxu0 0.0
        %1132 = vmatprep.subr.mxu0 0.0
        %1133 = vmatpush1.msra.mxu0 0.0
        %1134 = vmatprep.subr.mxu0 0.0
        %1135 = vmatpush1.msra.mxu0 0.0
        %1136 = vmatprep.subr.mxu0 0.0
        %1137 = vmatpush1.msra.mxu0 0.0
        %1138 = vmatprep.subr.mxu0 0.0
        %1139 = vmatpush1.msra.mxu0 0.0
        %1140 = vmatprep.subr.mxu0 0.0
        %1141 = vmatpush1.msra.mxu0 0.0
        %1142 = vmatprep.subr.mxu0 0.0
        %1143 = vmatpush1.msra.mxu0 0.0
        %1144 = vmatprep.subr.mxu0 0.0
        %1145 = vmatpush1.msra.mxu0 0.0
        %1146 = vmatprep.subr.mxu0 0.0
        %1147 = vmatpush1.msra.mxu0 0.0
        %1148 = vmatprep.subr.mxu0 0.0
        %1149 = vmatpush1.msra.mxu0 0.0
        %1150 = vmatprep.subr.mxu0 0.0
        %1151 = vmatpush1.msra.mxu0 0.0
        %1152 = vmatprep.subr.mxu0 0.0
        %1153 = vmatpush1.msra.mxu0 0.0
        %1154 = vmatprep.subr.mxu0 0.0
        %1155 = vmatpush1.msra.mxu0 0.0
        %1156 = vmatprep.subr.mxu0 0.0
        %1157 = vmatpush1.msra.mxu0 0.0
        %1158 = vmatprep.subr.mxu0 0.0
        %1159 = vmatpush1.msra.mxu0 %v1129
        %1160 = vmatprep.subr.mxu0 0.0
        %1161 = vmatpush1.msra.mxu0 %v1128
        %1162 = vmatprep.subr.mxu0 0.0
        %1163 = vmatpush2.msra.mxu0 0.0
        %1164 = vmatprep.subr.mxu0 0.0
        %1165 = vmatpush2.msra.mxu0 0.0
        %1166 = vmatprep.subr.mxu0 0.0
        %1167 = vmatpush2.msra.mxu0 0.0
        %1168 = vmatprep.subr.mxu0 0.0
        %1169 = vmatpush2.msra.mxu0 0.0
        %1170 = vmatprep.subr.mxu0 0.0
        %1171 = vmatpush2.msra.mxu0 0.0
        %1172 = vmatprep.subr.mxu0 0.0
        %1173 = vmatpush2.msra.mxu0 0.0
        %1174 = vmatprep.subr.mxu0 0.0
        %1175 = vmatpush2.msra.mxu0 0.0
        %1176 = vmatprep.subr.mxu0 0.0
        %1177 = vmatpush2.msra.mxu0 0.0
        %1178 = vmatprep.subr.mxu0 0.0
        %1179 = vmatpush2.msra.mxu0 0.0
        %1180 = vmatprep.subr.mxu0 0.0
        %1181 = vmatpush2.msra.mxu0 0.0
        %1182 = vmatprep.subr.mxu0 0.0
        %1183 = vmatpush2.msra.mxu0 0.0
        %1184 = vmatprep.subr.mxu0 0.0
        %1185 = vmatpush2.msra.mxu0 0.0
        %1186 = vmatprep.subr.mxu0 0.0
        %1187 = vmatpush2.msra.mxu0 0.0
        %1188 = vmatprep.subr.mxu0 0.0
        %1189 = vmatpush2.msra.mxu0 0.0
        %1190 = vmatprep.subr.mxu0 0.0
        %1191 = vmatpush2.msra.mxu0 0.0
        %1192 = vmatprep.subr.mxu0 0.0
        %1193 = vmatpush2.msra.mxu0 0.0
        %1194 = vmatprep.mubr.f32.mxu0 0.0
        %1195 = vmatmul.mubr.f32.gmra.mxu0 %v359
        %v1196 = vpop.f32.mrf.mxu0
        %v1197 = vadd.f32 0.0, %v1196
        %v1198 = vpop.f32.mrf.mxu0
        %1199 = vmatprep.mubr.f32.mxu0 0.0
        %1200 = vmatmul.mubr.f32.gmra.mxu0 %v362
        %v1201 = vpop.f32.mrf.mxu0
        %v1202 = vadd.f32 0.0, %v1201
        %v1203 = vpop.f32.mrf.mxu0
        %1204 = vmatprep.mubr.f32.mxu0 0.0
        %1205 = vmatmul.mubr.f32.gmra.mxu0 %v365
        %v1206 = vpop.f32.mrf.mxu0
        %v1207 = vadd.f32 0.0, %v1206
        %v1208 = vpop.f32.mrf.mxu0
        %1209 = vmatprep.mubr.f32.mxu0 0.0
        %1210 = vmatmul.mubr.f32.gmra.mxu0 %v368
        %v1211 = vpop.f32.mrf.mxu0
        %v1212 = vadd.f32 0.0, %v1211
        %v1213 = vpop.f32.mrf.mxu0
        %1214 = vdwg.mxu0
        %v1216 = vsel %vm357, %v1197, 0
        %v1219 = vsel %vm357, %v1202, 0
        %v1222 = vsel %vm357, %v1207, 0
        %v1225 = vsel %vm357, %v1212, 0
        %1227 = vmatprep.subr.mxu0 0.0
        %1228 = vmatpush1.msra.mxu0 0.0
        %1229 = vmatprep.subr.mxu0 0.0
        %1230 = vmatpush1.msra.mxu0 0.0
        %1231 = vmatprep.subr.mxu0 0.0
        %1232 = vmatpush1.msra.mxu0 0.0
        %1233 = vmatprep.subr.mxu0 0.0
        %1234 = vmatpush1.msra.mxu0 0.0
        %1235 = vmatprep.subr.mxu0 0.0
        %1236 = vmatpush1.msra.mxu0 0.0
        %1237 = vmatprep.subr.mxu0 0.0
        %1238 = vmatpush1.msra.mxu0 0.0
        %1239 = vmatprep.subr.mxu0 0.0
        %1240 = vmatpush1.msra.mxu0 0.0
        %1241 = vmatprep.subr.mxu0 0.0
        %1242 = vmatpush1.msra.mxu0 0.0
        %1243 = vmatprep.subr.mxu0 0.0
        %1244 = vmatpush1.msra.mxu0 0.0
        %1245 = vmatprep.subr.mxu0 0.0
        %1246 = vmatpush1.msra.mxu0 0.0
        %1247 = vmatprep.subr.mxu0 0.0
        %1248 = vmatpush1.msra.mxu0 0.0
        %1249 = vmatprep.subr.mxu0 0.0
        %1250 = vmatpush1.msra.mxu0 0.0
        %1251 = vmatprep.subr.mxu0 0.0
        %1252 = vmatpush1.msra.mxu0 0.0
        %1253 = vmatprep.subr.mxu0 0.0
        %1254 = vmatpush1.msra.mxu0 0.0
        %1255 = vmatprep.subr.mxu0 0.0
        %1256 = vmatpush1.msra.mxu0 %v354
        %1257 = vmatprep.subr.mxu0 0.0
        %1258 = vmatpush1.msra.mxu0 %v353
        %1259 = vmatprep.subr.mxu0 0.0
        %1260 = vmatpush2.msra.mxu0 0.0
        %1261 = vmatprep.subr.mxu0 0.0
        %1262 = vmatpush2.msra.mxu0 0.0
        %1263 = vmatprep.subr.mxu0 0.0
        %1264 = vmatpush2.msra.mxu0 0.0
        %1265 = vmatprep.subr.mxu0 0.0
        %1266 = vmatpush2.msra.mxu0 0.0
        %1267 = vmatprep.subr.mxu0 0.0
        %1268 = vmatpush2.msra.mxu0 0.0
        %1269 = vmatprep.subr.mxu0 0.0
        %1270 = vmatpush2.msra.mxu0 0.0
        %1271 = vmatprep.subr.mxu0 0.0
        %1272 = vmatpush2.msra.mxu0 0.0
        %1273 = vmatprep.subr.mxu0 0.0
        %1274 = vmatpush2.msra.mxu0 0.0
        %1275 = vmatprep.subr.mxu0 0.0
        %1276 = vmatpush2.msra.mxu0 0.0
        %1277 = vmatprep.subr.mxu0 0.0
        %1278 = vmatpush2.msra.mxu0 0.0
        %1279 = vmatprep.subr.mxu0 0.0
        %1280 = vmatpush2.msra.mxu0 0.0
        %1281 = vmatprep.subr.mxu0 0.0
        %1282 = vmatpush2.msra.mxu0 0.0
        %1283 = vmatprep.subr.mxu0 0.0
        %1284 = vmatpush2.msra.mxu0 0.0
        %1285 = vmatprep.subr.mxu0 0.0
        %1286 = vmatpush2.msra.mxu0 0.0
        %1287 = vmatprep.subr.mxu0 0.0
        %1288 = vmatpush2.msra.mxu0 0.0
        %1289 = vmatprep.subr.mxu0 0.0
        %1290 = vmatpush2.msra.mxu0 0.0
        %1291 = vmatprep.mubr.f32.mxu0 0.0
        %1292 = vmatmul.mubr.f32.gmra.mxu0 %v1216
        %v1293 = vpop.f32.mrf.mxu0
        %v1294 = vadd.f32 0.0, %v1293
        %v1295 = vpop.f32.mrf.mxu0
        %1296 = vmatprep.mubr.f32.mxu0 0.0
        %1297 = vmatmul.mubr.f32.gmra.mxu0 %v1219
        %v1298 = vpop.f32.mrf.mxu0
        %v1299 = vadd.f32 0.0, %v1298
        %v1300 = vpop.f32.mrf.mxu0
        %1301 = vmatprep.mubr.f32.mxu0 0.0
        %1302 = vmatmul.mubr.f32.gmra.mxu0 %v1222
        %v1303 = vpop.f32.mrf.mxu0
        %v1304 = vadd.f32 0.0, %v1303
        %v1305 = vpop.f32.mrf.mxu0
        %1306 = vmatprep.mubr.f32.mxu0 0.0
        %1307 = vmatmul.mubr.f32.gmra.mxu0 %v1225
        %v1308 = vpop.f32.mrf.mxu0
        %v1309 = vadd.f32 0.0, %v1308
        %v1310 = vpop.f32.mrf.mxu0
        %1311 = vdwg.mxu0
        %s1312 = scalar_lea.vmem %s318, 128 [#allocation4]
        %1313 = vst.msk [vmem:[%s1312] sm:$0xff] %vm552, %v1294
        %1314 = vst.msk [vmem:[%s1312 + $0x8] sm:$0xff] %vm552, %v1299
        %1315 = vst.msk [vmem:[%s1312 + $0x10] sm:$0xff] %vm552, %v1304
        %1316 = vst.msk [vmem:[%s1312 + $0x18] sm:$0xff] %vm552, %v1309
        %s1317 = scalar_lea.vmem %s336, 80
        %v1318 = vld [vmem:[%s1317] sm:$0xff]
        %v1319 = vld [vmem:[%s1317 + $0x8] sm:$0xff]
        %1320 = vmatprep.subr.mxu0 0.0
        %1321 = vmatpush1.msra.mxu0 0.0
        %1322 = vmatprep.subr.mxu0 0.0
        %1323 = vmatpush1.msra.mxu0 0.0
        %1324 = vmatprep.subr.mxu0 0.0
        %1325 = vmatpush1.msra.mxu0 0.0
        %1326 = vmatprep.subr.mxu0 0.0
        %1327 = vmatpush1.msra.mxu0 0.0
        %1328 = vmatprep.subr.mxu0 0.0
        %1329 = vmatpush1.msra.mxu0 0.0
        %1330 = vmatprep.subr.mxu0 0.0
        %1331 = vmatpush1.msra.mxu0 0.0
        %1332 = vmatprep.subr.mxu0 0.0
        %1333 = vmatpush1.msra.mxu0 0.0
        %1334 = vmatprep.subr.mxu0 0.0
        %1335 = vmatpush1.msra.mxu0 0.0
        %1336 = vmatprep.subr.mxu0 0.0
        %1337 = vmatpush1.msra.mxu0 0.0
        %1338 = vmatprep.subr.mxu0 0.0
        %1339 = vmatpush1.msra.mxu0 0.0
        %1340 = vmatprep.subr.mxu0 0.0
        %1341 = vmatpush1.msra.mxu0 0.0
        %1342 = vmatprep.subr.mxu0 0.0
        %1343 = vmatpush1.msra.mxu0 0.0
        %1344 = vmatprep.subr.mxu0 0.0
        %1345 = vmatpush1.msra.mxu0 0.0
        %1346 = vmatprep.subr.mxu0 0.0
        %1347 = vmatpush1.msra.mxu0 0.0
        %1348 = vmatprep.subr.mxu0 0.0
        %1349 = vmatpush1.msra.mxu0 %v1319
        %1350 = vmatprep.subr.mxu0 0.0
        %1351 = vmatpush1.msra.mxu0 %v1318
        %1352 = vmatprep.subr.mxu0 0.0
        %1353 = vmatpush2.msra.mxu0 0.0
        %1354 = vmatprep.subr.mxu0 0.0
        %1355 = vmatpush2.msra.mxu0 0.0
        %1356 = vmatprep.subr.mxu0 0.0
        %1357 = vmatpush2.msra.mxu0 0.0
        %1358 = vmatprep.subr.mxu0 0.0
        %1359 = vmatpush2.msra.mxu0 0.0
        %1360 = vmatprep.subr.mxu0 0.0
        %1361 = vmatpush2.msra.mxu0 0.0
        %1362 = vmatprep.subr.mxu0 0.0
        %1363 = vmatpush2.msra.mxu0 0.0
        %1364 = vmatprep.subr.mxu0 0.0
        %1365 = vmatpush2.msra.mxu0 0.0
        %1366 = vmatprep.subr.mxu0 0.0
        %1367 = vmatpush2.msra.mxu0 0.0
        %1368 = vmatprep.subr.mxu0 0.0
        %1369 = vmatpush2.msra.mxu0 0.0
        %1370 = vmatprep.subr.mxu0 0.0
        %1371 = vmatpush2.msra.mxu0 0.0
        %1372 = vmatprep.subr.mxu0 0.0
        %1373 = vmatpush2.msra.mxu0 0.0
        %1374 = vmatprep.subr.mxu0 0.0
        %1375 = vmatpush2.msra.mxu0 0.0
        %1376 = vmatprep.subr.mxu0 0.0
        %1377 = vmatpush2.msra.mxu0 0.0
        %1378 = vmatprep.subr.mxu0 0.0
        %1379 = vmatpush2.msra.mxu0 0.0
        %1380 = vmatprep.subr.mxu0 0.0
        %1381 = vmatpush2.msra.mxu0 0.0
        %1382 = vmatprep.subr.mxu0 0.0
        %1383 = vmatpush2.msra.mxu0 0.0
        %1384 = vmatprep.mubr.f32.mxu0 0.0
        %1385 = vmatmul.mubr.f32.gmra.mxu0 %v359
        %v1386 = vpop.f32.mrf.mxu0
        %v1387 = vadd.f32 0.0, %v1386
        %v1388 = vpop.f32.mrf.mxu0
        %1389 = vmatprep.mubr.f32.mxu0 0.0
        %1390 = vmatmul.mubr.f32.gmra.mxu0 %v362
        %v1391 = vpop.f32.mrf.mxu0
        %v1392 = vadd.f32 0.0, %v1391
        %v1393 = vpop.f32.mrf.mxu0
        %1394 = vmatprep.mubr.f32.mxu0 0.0
        %1395 = vmatmul.mubr.f32.gmra.mxu0 %v365
        %v1396 = vpop.f32.mrf.mxu0
        %v1397 = vadd.f32 0.0, %v1396
        %v1398 = vpop.f32.mrf.mxu0
        %1399 = vmatprep.mubr.f32.mxu0 0.0
        %1400 = vmatmul.mubr.f32.gmra.mxu0 %v368
        %v1401 = vpop.f32.mrf.mxu0
        %v1402 = vadd.f32 0.0, %v1401
        %v1403 = vpop.f32.mrf.mxu0
        %1404 = vdwg.mxu0
        %v1406 = vsel %vm357, %v1387, 0
        %v1409 = vsel %vm357, %v1392, 0
        %v1412 = vsel %vm357, %v1397, 0
        %v1415 = vsel %vm357, %v1402, 0
        %1417 = vmatprep.subr.mxu0 0.0
        %1418 = vmatpush1.msra.mxu0 0.0
        %1419 = vmatprep.subr.mxu0 0.0
        %1420 = vmatpush1.msra.mxu0 0.0
        %1421 = vmatprep.subr.mxu0 0.0
        %1422 = vmatpush1.msra.mxu0 0.0
        %1423 = vmatprep.subr.mxu0 0.0
        %1424 = vmatpush1.msra.mxu0 0.0
        %1425 = vmatprep.subr.mxu0 0.0
        %1426 = vmatpush1.msra.mxu0 0.0
        %1427 = vmatprep.subr.mxu0 0.0
        %1428 = vmatpush1.msra.mxu0 0.0
        %1429 = vmatprep.subr.mxu0 0.0
        %1430 = vmatpush1.msra.mxu0 0.0
        %1431 = vmatprep.subr.mxu0 0.0
        %1432 = vmatpush1.msra.mxu0 0.0
        %1433 = vmatprep.subr.mxu0 0.0
        %1434 = vmatpush1.msra.mxu0 0.0
        %1435 = vmatprep.subr.mxu0 0.0
        %1436 = vmatpush1.msra.mxu0 0.0
        %1437 = vmatprep.subr.mxu0 0.0
        %1438 = vmatpush1.msra.mxu0 0.0
        %1439 = vmatprep.subr.mxu0 0.0
        %1440 = vmatpush1.msra.mxu0 0.0
        %1441 = vmatprep.subr.mxu0 0.0
        %1442 = vmatpush1.msra.mxu0 0.0
        %1443 = vmatprep.subr.mxu0 0.0
        %1444 = vmatpush1.msra.mxu0 0.0
        %1445 = vmatprep.subr.mxu0 0.0
        %1446 = vmatpush1.msra.mxu0 %v354
        %1447 = vmatprep.subr.mxu0 0.0
        %1448 = vmatpush1.msra.mxu0 %v353
        %1449 = vmatprep.subr.mxu0 0.0
        %1450 = vmatpush2.msra.mxu0 0.0
        %1451 = vmatprep.subr.mxu0 0.0
        %1452 = vmatpush2.msra.mxu0 0.0
        %1453 = vmatprep.subr.mxu0 0.0
        %1454 = vmatpush2.msra.mxu0 0.0
        %1455 = vmatprep.subr.mxu0 0.0
        %1456 = vmatpush2.msra.mxu0 0.0
        %1457 = vmatprep.subr.mxu0 0.0
        %1458 = vmatpush2.msra.mxu0 0.0
        %1459 = vmatprep.subr.mxu0 0.0
        %1460 = vmatpush2.msra.mxu0 0.0
        %1461 = vmatprep.subr.mxu0 0.0
        %1462 = vmatpush2.msra.mxu0 0.0
        %1463 = vmatprep.subr.mxu0 0.0
        %1464 = vmatpush2.msra.mxu0 0.0
        %1465 = vmatprep.subr.mxu0 0.0
        %1466 = vmatpush2.msra.mxu0 0.0
        %1467 = vmatprep.subr.mxu0 0.0
        %1468 = vmatpush2.msra.mxu0 0.0
        %1469 = vmatprep.subr.mxu0 0.0
        %1470 = vmatpush2.msra.mxu0 0.0
        %1471 = vmatprep.subr.mxu0 0.0
        %1472 = vmatpush2.msra.mxu0 0.0
        %1473 = vmatprep.subr.mxu0 0.0
        %1474 = vmatpush2.msra.mxu0 0.0
        %1475 = vmatprep.subr.mxu0 0.0
        %1476 = vmatpush2.msra.mxu0 0.0
        %1477 = vmatprep.subr.mxu0 0.0
        %1478 = vmatpush2.msra.mxu0 0.0
        %1479 = vmatprep.subr.mxu0 0.0
        %1480 = vmatpush2.msra.mxu0 0.0
        %1481 = vmatprep.mubr.f32.mxu0 0.0
        %1482 = vmatmul.mubr.f32.gmra.mxu0 %v1406
        %v1483 = vpop.f32.mrf.mxu0
        %v1484 = vadd.f32 0.0, %v1483
        %v1485 = vpop.f32.mrf.mxu0
        %1486 = vmatprep.mubr.f32.mxu0 0.0
        %1487 = vmatmul.mubr.f32.gmra.mxu0 %v1409
        %v1488 = vpop.f32.mrf.mxu0
        %v1489 = vadd.f32 0.0, %v1488
        %v1490 = vpop.f32.mrf.mxu0
        %1491 = vmatprep.mubr.f32.mxu0 0.0
        %1492 = vmatmul.mubr.f32.gmra.mxu0 %v1412
        %v1493 = vpop.f32.mrf.mxu0
        %v1494 = vadd.f32 0.0, %v1493
        %v1495 = vpop.f32.mrf.mxu0
        %1496 = vmatprep.mubr.f32.mxu0 0.0
        %1497 = vmatmul.mubr.f32.gmra.mxu0 %v1415
        %v1498 = vpop.f32.mrf.mxu0
        %v1499 = vadd.f32 0.0, %v1498
        %v1500 = vpop.f32.mrf.mxu0
        %1501 = vdwg.mxu0
        %s1502 = scalar_lea.vmem %s318, 160 [#allocation4]
        %1503 = vst.msk [vmem:[%s1502] sm:$0xff] %vm552, %v1484
        %1504 = vst.msk [vmem:[%s1502 + $0x8] sm:$0xff] %vm552, %v1489
        %1505 = vst.msk [vmem:[%s1502 + $0x10] sm:$0xff] %vm552, %v1494
        %1506 = vst.msk [vmem:[%s1502 + $0x18] sm:$0xff] %vm552, %v1499
        %s1507 = scalar_lea.vmem %s336, 96
        %v1508 = vld [vmem:[%s1507] sm:$0xff]
        %v1509 = vld [vmem:[%s1507 + $0x8] sm:$0xff]
        %1510 = vmatprep.subr.mxu0 0.0
        %1511 = vmatpush1.msra.mxu0 0.0
        %1512 = vmatprep.subr.mxu0 0.0
        %1513 = vmatpush1.msra.mxu0 0.0
        %1514 = vmatprep.subr.mxu0 0.0
        %1515 = vmatpush1.msra.mxu0 0.0
        %1516 = vmatprep.subr.mxu0 0.0
        %1517 = vmatpush1.msra.mxu0 0.0
        %1518 = vmatprep.subr.mxu0 0.0
        %1519 = vmatpush1.msra.mxu0 0.0
        %1520 = vmatprep.subr.mxu0 0.0
        %1521 = vmatpush1.msra.mxu0 0.0
        %1522 = vmatprep.subr.mxu0 0.0
        %1523 = vmatpush1.msra.mxu0 0.0
        %1524 = vmatprep.subr.mxu0 0.0
        %1525 = vmatpush1.msra.mxu0 0.0
        %1526 = vmatprep.subr.mxu0 0.0
        %1527 = vmatpush1.msra.mxu0 0.0
        %1528 = vmatprep.subr.mxu0 0.0
        %1529 = vmatpush1.msra.mxu0 0.0
        %1530 = vmatprep.subr.mxu0 0.0
        %1531 = vmatpush1.msra.mxu0 0.0
        %1532 = vmatprep.subr.mxu0 0.0
        %1533 = vmatpush1.msra.mxu0 0.0
        %1534 = vmatprep.subr.mxu0 0.0
        %1535 = vmatpush1.msra.mxu0 0.0
        %1536 = vmatprep.subr.mxu0 0.0
        %1537 = vmatpush1.msra.mxu0 0.0
        %1538 = vmatprep.subr.mxu0 0.0
        %1539 = vmatpush1.msra.mxu0 %v1509
        %1540 = vmatprep.subr.mxu0 0.0
        %1541 = vmatpush1.msra.mxu0 %v1508
        %1542 = vmatprep.subr.mxu0 0.0
        %1543 = vmatpush2.msra.mxu0 0.0
        %1544 = vmatprep.subr.mxu0 0.0
        %1545 = vmatpush2.msra.mxu0 0.0
        %1546 = vmatprep.subr.mxu0 0.0
        %1547 = vmatpush2.msra.mxu0 0.0
        %1548 = vmatprep.subr.mxu0 0.0
        %1549 = vmatpush2.msra.mxu0 0.0
        %1550 = vmatprep.subr.mxu0 0.0
        %1551 = vmatpush2.msra.mxu0 0.0
        %1552 = vmatprep.subr.mxu0 0.0
        %1553 = vmatpush2.msra.mxu0 0.0
        %1554 = vmatprep.subr.mxu0 0.0
        %1555 = vmatpush2.msra.mxu0 0.0
        %1556 = vmatprep.subr.mxu0 0.0
        %1557 = vmatpush2.msra.mxu0 0.0
        %1558 = vmatprep.subr.mxu0 0.0
        %1559 = vmatpush2.msra.mxu0 0.0
        %1560 = vmatprep.subr.mxu0 0.0
        %1561 = vmatpush2.msra.mxu0 0.0
        %1562 = vmatprep.subr.mxu0 0.0
        %1563 = vmatpush2.msra.mxu0 0.0
        %1564 = vmatprep.subr.mxu0 0.0
        %1565 = vmatpush2.msra.mxu0 0.0
        %1566 = vmatprep.subr.mxu0 0.0
        %1567 = vmatpush2.msra.mxu0 0.0
        %1568 = vmatprep.subr.mxu0 0.0
        %1569 = vmatpush2.msra.mxu0 0.0
        %1570 = vmatprep.subr.mxu0 0.0
        %1571 = vmatpush2.msra.mxu0 0.0
        %1572 = vmatprep.subr.mxu0 0.0
        %1573 = vmatpush2.msra.mxu0 0.0
        %1574 = vmatprep.mubr.f32.mxu0 0.0
        %1575 = vmatmul.mubr.f32.gmra.mxu0 %v359
        %v1576 = vpop.f32.mrf.mxu0
        %v1577 = vadd.f32 0.0, %v1576
        %v1578 = vpop.f32.mrf.mxu0
        %1579 = vmatprep.mubr.f32.mxu0 0.0
        %1580 = vmatmul.mubr.f32.gmra.mxu0 %v362
        %v1581 = vpop.f32.mrf.mxu0
        %v1582 = vadd.f32 0.0, %v1581
        %v1583 = vpop.f32.mrf.mxu0
        %1584 = vmatprep.mubr.f32.mxu0 0.0
        %1585 = vmatmul.mubr.f32.gmra.mxu0 %v365
        %v1586 = vpop.f32.mrf.mxu0
        %v1587 = vadd.f32 0.0, %v1586
        %v1588 = vpop.f32.mrf.mxu0
        %1589 = vmatprep.mubr.f32.mxu0 0.0
        %1590 = vmatmul.mubr.f32.gmra.mxu0 %v368
        %v1591 = vpop.f32.mrf.mxu0
        %v1592 = vadd.f32 0.0, %v1591
        %v1593 = vpop.f32.mrf.mxu0
        %1594 = vdwg.mxu0
        %v1596 = vsel %vm357, %v1577, 0
        %v1599 = vsel %vm357, %v1582, 0
        %v1602 = vsel %vm357, %v1587, 0
        %v1605 = vsel %vm357, %v1592, 0
        %1607 = vmatprep.subr.mxu0 0.0
        %1608 = vmatpush1.msra.mxu0 0.0
        %1609 = vmatprep.subr.mxu0 0.0
        %1610 = vmatpush1.msra.mxu0 0.0
        %1611 = vmatprep.subr.mxu0 0.0
        %1612 = vmatpush1.msra.mxu0 0.0
        %1613 = vmatprep.subr.mxu0 0.0
        %1614 = vmatpush1.msra.mxu0 0.0
        %1615 = vmatprep.subr.mxu0 0.0
        %1616 = vmatpush1.msra.mxu0 0.0
        %1617 = vmatprep.subr.mxu0 0.0
        %1618 = vmatpush1.msra.mxu0 0.0
        %1619 = vmatprep.subr.mxu0 0.0
        %1620 = vmatpush1.msra.mxu0 0.0
        %1621 = vmatprep.subr.mxu0 0.0
        %1622 = vmatpush1.msra.mxu0 0.0
        %1623 = vmatprep.subr.mxu0 0.0
        %1624 = vmatpush1.msra.mxu0 0.0
        %1625 = vmatprep.subr.mxu0 0.0
        %1626 = vmatpush1.msra.mxu0 0.0
        %1627 = vmatprep.subr.mxu0 0.0
        %1628 = vmatpush1.msra.mxu0 0.0
        %1629 = vmatprep.subr.mxu0 0.0
        %1630 = vmatpush1.msra.mxu0 0.0
        %1631 = vmatprep.subr.mxu0 0.0
        %1632 = vmatpush1.msra.mxu0 0.0
        %1633 = vmatprep.subr.mxu0 0.0
        %1634 = vmatpush1.msra.mxu0 0.0
        %1635 = vmatprep.subr.mxu0 0.0
        %1636 = vmatpush1.msra.mxu0 %v354
        %1637 = vmatprep.subr.mxu0 0.0
        %1638 = vmatpush1.msra.mxu0 %v353
        %1639 = vmatprep.subr.mxu0 0.0
        %1640 = vmatpush2.msra.mxu0 0.0
        %1641 = vmatprep.subr.mxu0 0.0
        %1642 = vmatpush2.msra.mxu0 0.0
        %1643 = vmatprep.subr.mxu0 0.0
        %1644 = vmatpush2.msra.mxu0 0.0
        %1645 = vmatprep.subr.mxu0 0.0
        %1646 = vmatpush2.msra.mxu0 0.0
        %1647 = vmatprep.subr.mxu0 0.0
        %1648 = vmatpush2.msra.mxu0 0.0
        %1649 = vmatprep.subr.mxu0 0.0
        %1650 = vmatpush2.msra.mxu0 0.0
        %1651 = vmatprep.subr.mxu0 0.0
        %1652 = vmatpush2.msra.mxu0 0.0
        %1653 = vmatprep.subr.mxu0 0.0
        %1654 = vmatpush2.msra.mxu0 0.0
        %1655 = vmatprep.subr.mxu0 0.0
        %1656 = vmatpush2.msra.mxu0 0.0
        %1657 = vmatprep.subr.mxu0 0.0
        %1658 = vmatpush2.msra.mxu0 0.0
        %1659 = vmatprep.subr.mxu0 0.0
        %1660 = vmatpush2.msra.mxu0 0.0
        %1661 = vmatprep.subr.mxu0 0.0
        %1662 = vmatpush2.msra.mxu0 0.0
        %1663 = vmatprep.subr.mxu0 0.0
        %1664 = vmatpush2.msra.mxu0 0.0
        %1665 = vmatprep.subr.mxu0 0.0
        %1666 = vmatpush2.msra.mxu0 0.0
        %1667 = vmatprep.subr.mxu0 0.0
        %1668 = vmatpush2.msra.mxu0 0.0
        %1669 = vmatprep.subr.mxu0 0.0
        %1670 = vmatpush2.msra.mxu0 0.0
        %1671 = vmatprep.mubr.f32.mxu0 0.0
        %1672 = vmatmul.mubr.f32.gmra.mxu0 %v1596
        %v1673 = vpop.f32.mrf.mxu0
        %v1674 = vadd.f32 0.0, %v1673
        %v1675 = vpop.f32.mrf.mxu0
        %1676 = vmatprep.mubr.f32.mxu0 0.0
        %1677 = vmatmul.mubr.f32.gmra.mxu0 %v1599
        %v1678 = vpop.f32.mrf.mxu0
        %v1679 = vadd.f32 0.0, %v1678
        %v1680 = vpop.f32.mrf.mxu0
        %1681 = vmatprep.mubr.f32.mxu0 0.0
        %1682 = vmatmul.mubr.f32.gmra.mxu0 %v1602
        %v1683 = vpop.f32.mrf.mxu0
        %v1684 = vadd.f32 0.0, %v1683
        %v1685 = vpop.f32.mrf.mxu0
        %1686 = vmatprep.mubr.f32.mxu0 0.0
        %1687 = vmatmul.mubr.f32.gmra.mxu0 %v1605
        %v1688 = vpop.f32.mrf.mxu0
        %v1689 = vadd.f32 0.0, %v1688
        %v1690 = vpop.f32.mrf.mxu0
        %1691 = vdwg.mxu0
        %s1692 = scalar_lea.vmem %s318, 192 [#allocation4]
        %1693 = vst.msk [vmem:[%s1692] sm:$0xff] %vm552, %v1674
        %1694 = vst.msk [vmem:[%s1692 + $0x8] sm:$0xff] %vm552, %v1679
        %1695 = vst.msk [vmem:[%s1692 + $0x10] sm:$0xff] %vm552, %v1684
        %1696 = vst.msk [vmem:[%s1692 + $0x18] sm:$0xff] %vm552, %v1689
        %s1697 = scalar_lea.vmem %s336, 112
        %v1698 = vld [vmem:[%s1697] sm:$0xff]
        %v1699 = vld [vmem:[%s1697 + $0x8] sm:$0xff]
        %1700 = vmatprep.subr.mxu0 0.0
        %1701 = vmatpush1.msra.mxu0 0.0
        %1702 = vmatprep.subr.mxu0 0.0
        %1703 = vmatpush1.msra.mxu0 0.0
        %1704 = vmatprep.subr.mxu0 0.0
        %1705 = vmatpush1.msra.mxu0 0.0
        %1706 = vmatprep.subr.mxu0 0.0
        %1707 = vmatpush1.msra.mxu0 0.0
        %1708 = vmatprep.subr.mxu0 0.0
        %1709 = vmatpush1.msra.mxu0 0.0
        %1710 = vmatprep.subr.mxu0 0.0
        %1711 = vmatpush1.msra.mxu0 0.0
        %1712 = vmatprep.subr.mxu0 0.0
        %1713 = vmatpush1.msra.mxu0 0.0
        %1714 = vmatprep.subr.mxu0 0.0
        %1715 = vmatpush1.msra.mxu0 0.0
        %1716 = vmatprep.subr.mxu0 0.0
        %1717 = vmatpush1.msra.mxu0 0.0
        %1718 = vmatprep.subr.mxu0 0.0
        %1719 = vmatpush1.msra.mxu0 0.0
        %1720 = vmatprep.subr.mxu0 0.0
        %1721 = vmatpush1.msra.mxu0 0.0
        %1722 = vmatprep.subr.mxu0 0.0
        %1723 = vmatpush1.msra.mxu0 0.0
        %1724 = vmatprep.subr.mxu0 0.0
        %1725 = vmatpush1.msra.mxu0 0.0
        %1726 = vmatprep.subr.mxu0 0.0
        %1727 = vmatpush1.msra.mxu0 0.0
        %1728 = vmatprep.subr.mxu0 0.0
        %1729 = vmatpush1.msra.mxu0 %v1699
        %1730 = vmatprep.subr.mxu0 0.0
        %1731 = vmatpush1.msra.mxu0 %v1698
        %1732 = vmatprep.subr.mxu0 0.0
        %1733 = vmatpush2.msra.mxu0 0.0
        %1734 = vmatprep.subr.mxu0 0.0
        %1735 = vmatpush2.msra.mxu0 0.0
        %1736 = vmatprep.subr.mxu0 0.0
        %1737 = vmatpush2.msra.mxu0 0.0
        %1738 = vmatprep.subr.mxu0 0.0
        %1739 = vmatpush2.msra.mxu0 0.0
        %1740 = vmatprep.subr.mxu0 0.0
        %1741 = vmatpush2.msra.mxu0 0.0
        %1742 = vmatprep.subr.mxu0 0.0
        %1743 = vmatpush2.msra.mxu0 0.0
        %1744 = vmatprep.subr.mxu0 0.0
        %1745 = vmatpush2.msra.mxu0 0.0
        %1746 = vmatprep.subr.mxu0 0.0
        %1747 = vmatpush2.msra.mxu0 0.0
        %1748 = vmatprep.subr.mxu0 0.0
        %1749 = vmatpush2.msra.mxu0 0.0
        %1750 = vmatprep.subr.mxu0 0.0
        %1751 = vmatpush2.msra.mxu0 0.0
        %1752 = vmatprep.subr.mxu0 0.0
        %1753 = vmatpush2.msra.mxu0 0.0
        %1754 = vmatprep.subr.mxu0 0.0
        %1755 = vmatpush2.msra.mxu0 0.0
        %1756 = vmatprep.subr.mxu0 0.0
        %1757 = vmatpush2.msra.mxu0 0.0
        %1758 = vmatprep.subr.mxu0 0.0
        %1759 = vmatpush2.msra.mxu0 0.0
        %1760 = vmatprep.subr.mxu0 0.0
        %1761 = vmatpush2.msra.mxu0 0.0
        %1762 = vmatprep.subr.mxu0 0.0
        %1763 = vmatpush2.msra.mxu0 0.0
        %1764 = vmatprep.mubr.f32.mxu0 0.0
        %1765 = vmatmul.mubr.f32.gmra.mxu0 %v359
        %v1766 = vpop.f32.mrf.mxu0
        %v1767 = vadd.f32 0.0, %v1766
        %v1768 = vpop.f32.mrf.mxu0
        %1769 = vmatprep.mubr.f32.mxu0 0.0
        %1770 = vmatmul.mubr.f32.gmra.mxu0 %v362
        %v1771 = vpop.f32.mrf.mxu0
        %v1772 = vadd.f32 0.0, %v1771
        %v1773 = vpop.f32.mrf.mxu0
        %1774 = vmatprep.mubr.f32.mxu0 0.0
        %1775 = vmatmul.mubr.f32.gmra.mxu0 %v365
        %v1776 = vpop.f32.mrf.mxu0
        %v1777 = vadd.f32 0.0, %v1776
        %v1778 = vpop.f32.mrf.mxu0
        %1779 = vmatprep.mubr.f32.mxu0 0.0
        %1780 = vmatmul.mubr.f32.gmra.mxu0 %v368
        %v1781 = vpop.f32.mrf.mxu0
        %v1782 = vadd.f32 0.0, %v1781
        %v1783 = vpop.f32.mrf.mxu0
        %1784 = vdwg.mxu0
        %v1786 = vsel %vm357, %v1767, 0
        %v1789 = vsel %vm357, %v1772, 0
        %v1792 = vsel %vm357, %v1777, 0
        %v1795 = vsel %vm357, %v1782, 0
        %1797 = vmatprep.subr.mxu0 0.0
        %1798 = vmatpush1.msra.mxu0 0.0
        %1799 = vmatprep.subr.mxu0 0.0
        %1800 = vmatpush1.msra.mxu0 0.0
        %1801 = vmatprep.subr.mxu0 0.0
        %1802 = vmatpush1.msra.mxu0 0.0
        %1803 = vmatprep.subr.mxu0 0.0
        %1804 = vmatpush1.msra.mxu0 0.0
        %1805 = vmatprep.subr.mxu0 0.0
        %1806 = vmatpush1.msra.mxu0 0.0
        %1807 = vmatprep.subr.mxu0 0.0
        %1808 = vmatpush1.msra.mxu0 0.0
        %1809 = vmatprep.subr.mxu0 0.0
        %1810 = vmatpush1.msra.mxu0 0.0
        %1811 = vmatprep.subr.mxu0 0.0
        %1812 = vmatpush1.msra.mxu0 0.0
        %1813 = vmatprep.subr.mxu0 0.0
        %1814 = vmatpush1.msra.mxu0 0.0
        %1815 = vmatprep.subr.mxu0 0.0
        %1816 = vmatpush1.msra.mxu0 0.0
        %1817 = vmatprep.subr.mxu0 0.0
        %1818 = vmatpush1.msra.mxu0 0.0
        %1819 = vmatprep.subr.mxu0 0.0
        %1820 = vmatpush1.msra.mxu0 0.0
        %1821 = vmatprep.subr.mxu0 0.0
        %1822 = vmatpush1.msra.mxu0 0.0
        %1823 = vmatprep.subr.mxu0 0.0
        %1824 = vmatpush1.msra.mxu0 0.0
        %1825 = vmatprep.subr.mxu0 0.0
        %1826 = vmatpush1.msra.mxu0 %v354
        %1827 = vmatprep.subr.mxu0 0.0
        %1828 = vmatpush1.msra.mxu0 %v353
        %1829 = vmatprep.subr.mxu0 0.0
        %1830 = vmatpush2.msra.mxu0 0.0
        %1831 = vmatprep.subr.mxu0 0.0
        %1832 = vmatpush2.msra.mxu0 0.0
        %1833 = vmatprep.subr.mxu0 0.0
        %1834 = vmatpush2.msra.mxu0 0.0
        %1835 = vmatprep.subr.mxu0 0.0
        %1836 = vmatpush2.msra.mxu0 0.0
        %1837 = vmatprep.subr.mxu0 0.0
        %1838 = vmatpush2.msra.mxu0 0.0
        %1839 = vmatprep.subr.mxu0 0.0
        %1840 = vmatpush2.msra.mxu0 0.0
        %1841 = vmatprep.subr.mxu0 0.0
        %1842 = vmatpush2.msra.mxu0 0.0
        %1843 = vmatprep.subr.mxu0 0.0
        %1844 = vmatpush2.msra.mxu0 0.0
        %1845 = vmatprep.subr.mxu0 0.0
        %1846 = vmatpush2.msra.mxu0 0.0
        %1847 = vmatprep.subr.mxu0 0.0
        %1848 = vmatpush2.msra.mxu0 0.0
        %1849 = vmatprep.subr.mxu0 0.0
        %1850 = vmatpush2.msra.mxu0 0.0
        %1851 = vmatprep.subr.mxu0 0.0
        %1852 = vmatpush2.msra.mxu0 0.0
        %1853 = vmatprep.subr.mxu0 0.0
        %1854 = vmatpush2.msra.mxu0 0.0
        %1855 = vmatprep.subr.mxu0 0.0
        %1856 = vmatpush2.msra.mxu0 0.0
        %1857 = vmatprep.subr.mxu0 0.0
        %1858 = vmatpush2.msra.mxu0 0.0
        %1859 = vmatprep.subr.mxu0 0.0
        %1860 = vmatpush2.msra.mxu0 0.0
        %1861 = vmatprep.mubr.f32.mxu0 0.0
        %1862 = vmatmul.mubr.f32.gmra.mxu0 %v1786
        %v1863 = vpop.f32.mrf.mxu0
        %v1864 = vadd.f32 0.0, %v1863
        %v1865 = vpop.f32.mrf.mxu0
        %1866 = vmatprep.mubr.f32.mxu0 0.0
        %1867 = vmatmul.mubr.f32.gmra.mxu0 %v1789
        %v1868 = vpop.f32.mrf.mxu0
        %v1869 = vadd.f32 0.0, %v1868
        %v1870 = vpop.f32.mrf.mxu0
        %1871 = vmatprep.mubr.f32.mxu0 0.0
        %1872 = vmatmul.mubr.f32.gmra.mxu0 %v1792
        %v1873 = vpop.f32.mrf.mxu0
        %v1874 = vadd.f32 0.0, %v1873
        %v1875 = vpop.f32.mrf.mxu0
        %1876 = vmatprep.mubr.f32.mxu0 0.0
        %1877 = vmatmul.mubr.f32.gmra.mxu0 %v1795
        %v1878 = vpop.f32.mrf.mxu0
        %v1879 = vadd.f32 0.0, %v1878
        %v1880 = vpop.f32.mrf.mxu0
        %1881 = vdwg.mxu0
        %s1882 = scalar_lea.vmem %s318, 224 [#allocation4]
        %1883 = vst.msk [vmem:[%s1882] sm:$0xff] %vm552, %v1864
        %1884 = vst.msk [vmem:[%s1882 + $0x8] sm:$0xff] %vm552, %v1869
        %1885 = vst.msk [vmem:[%s1882 + $0x10] sm:$0xff] %vm552, %v1874
        %1886 = vst.msk [vmem:[%s1882 + $0x18] sm:$0xff] %vm552, %v1879
        %s1887 = scalar_lea.vmem %s336, 128
        %v1888 = vld [vmem:[%s1887] sm:$0xff]
        %v1889 = vld [vmem:[%s1887 + $0x8] sm:$0xff]
        %1890 = vmatprep.subr.mxu0 0.0
        %1891 = vmatpush1.msra.mxu0 0.0
        %1892 = vmatprep.subr.mxu0 0.0
        %1893 = vmatpush1.msra.mxu0 0.0
        %1894 = vmatprep.subr.mxu0 0.0
        %1895 = vmatpush1.msra.mxu0 0.0
        %1896 = vmatprep.subr.mxu0 0.0
        %1897 = vmatpush1.msra.mxu0 0.0
        %1898 = vmatprep.subr.mxu0 0.0
        %1899 = vmatpush1.msra.mxu0 0.0
        %1900 = vmatprep.subr.mxu0 0.0
        %1901 = vmatpush1.msra.mxu0 0.0
        %1902 = vmatprep.subr.mxu0 0.0
        %1903 = vmatpush1.msra.mxu0 0.0
        %1904 = vmatprep.subr.mxu0 0.0
        %1905 = vmatpush1.msra.mxu0 0.0
        %1906 = vmatprep.subr.mxu0 0.0
        %1907 = vmatpush1.msra.mxu0 0.0
        %1908 = vmatprep.subr.mxu0 0.0
        %1909 = vmatpush1.msra.mxu0 0.0
        %1910 = vmatprep.subr.mxu0 0.0
        %1911 = vmatpush1.msra.mxu0 0.0
        %1912 = vmatprep.subr.mxu0 0.0
        %1913 = vmatpush1.msra.mxu0 0.0
        %1914 = vmatprep.subr.mxu0 0.0
        %1915 = vmatpush1.msra.mxu0 0.0
        %1916 = vmatprep.subr.mxu0 0.0
        %1917 = vmatpush1.msra.mxu0 0.0
        %1918 = vmatprep.subr.mxu0 0.0
        %1919 = vmatpush1.msra.mxu0 %v1889
        %1920 = vmatprep.subr.mxu0 0.0
        %1921 = vmatpush1.msra.mxu0 %v1888
        %1922 = vmatprep.subr.mxu0 0.0
        %1923 = vmatpush2.msra.mxu0 0.0
        %1924 = vmatprep.subr.mxu0 0.0
        %1925 = vmatpush2.msra.mxu0 0.0
        %1926 = vmatprep.subr.mxu0 0.0
        %1927 = vmatpush2.msra.mxu0 0.0
        %1928 = vmatprep.subr.mxu0 0.0
        %1929 = vmatpush2.msra.mxu0 0.0
        %1930 = vmatprep.subr.mxu0 0.0
        %1931 = vmatpush2.msra.mxu0 0.0
        %1932 = vmatprep.subr.mxu0 0.0
        %1933 = vmatpush2.msra.mxu0 0.0
        %1934 = vmatprep.subr.mxu0 0.0
        %1935 = vmatpush2.msra.mxu0 0.0
        %1936 = vmatprep.subr.mxu0 0.0
        %1937 = vmatpush2.msra.mxu0 0.0
        %1938 = vmatprep.subr.mxu0 0.0
        %1939 = vmatpush2.msra.mxu0 0.0
        %1940 = vmatprep.subr.mxu0 0.0
        %1941 = vmatpush2.msra.mxu0 0.0
        %1942 = vmatprep.subr.mxu0 0.0
        %1943 = vmatpush2.msra.mxu0 0.0
        %1944 = vmatprep.subr.mxu0 0.0
        %1945 = vmatpush2.msra.mxu0 0.0
        %1946 = vmatprep.subr.mxu0 0.0
        %1947 = vmatpush2.msra.mxu0 0.0
        %1948 = vmatprep.subr.mxu0 0.0
        %1949 = vmatpush2.msra.mxu0 0.0
        %1950 = vmatprep.subr.mxu0 0.0
        %1951 = vmatpush2.msra.mxu0 0.0
        %1952 = vmatprep.subr.mxu0 0.0
        %1953 = vmatpush2.msra.mxu0 0.0
        %1954 = vmatprep.mubr.f32.mxu0 0.0
        %1955 = vmatmul.mubr.f32.gmra.mxu0 %v359
        %v1956 = vpop.f32.mrf.mxu0
        %v1957 = vadd.f32 0.0, %v1956
        %v1958 = vpop.f32.mrf.mxu0
        %1959 = vmatprep.mubr.f32.mxu0 0.0
        %1960 = vmatmul.mubr.f32.gmra.mxu0 %v362
        %v1961 = vpop.f32.mrf.mxu0
        %v1962 = vadd.f32 0.0, %v1961
        %v1963 = vpop.f32.mrf.mxu0
        %1964 = vmatprep.mubr.f32.mxu0 0.0
        %1965 = vmatmul.mubr.f32.gmra.mxu0 %v365
        %v1966 = vpop.f32.mrf.mxu0
        %v1967 = vadd.f32 0.0, %v1966
        %v1968 = vpop.f32.mrf.mxu0
        %1969 = vmatprep.mubr.f32.mxu0 0.0
        %1970 = vmatmul.mubr.f32.gmra.mxu0 %v368
        %v1971 = vpop.f32.mrf.mxu0
        %v1972 = vadd.f32 0.0, %v1971
        %v1973 = vpop.f32.mrf.mxu0
        %1974 = vdwg.mxu0
        %v1976 = vsel %vm357, %v1957, 0
        %v1979 = vsel %vm357, %v1962, 0
        %v1982 = vsel %vm357, %v1967, 0
        %v1985 = vsel %vm357, %v1972, 0
        %1987 = vmatprep.subr.mxu0 0.0
        %1988 = vmatpush1.msra.mxu0 0.0
        %1989 = vmatprep.subr.mxu0 0.0
        %1990 = vmatpush1.msra.mxu0 0.0
        %1991 = vmatprep.subr.mxu0 0.0
        %1992 = vmatpush1.msra.mxu0 0.0
        %1993 = vmatprep.subr.mxu0 0.0
        %1994 = vmatpush1.msra.mxu0 0.0
        %1995 = vmatprep.subr.mxu0 0.0
        %1996 = vmatpush1.msra.mxu0 0.0
        %1997 = vmatprep.subr.mxu0 0.0
        %1998 = vmatpush1.msra.mxu0 0.0
        %1999 = vmatprep.subr.mxu0 0.0
        %2000 = vmatpush1.msra.mxu0 0.0
        %2001 = vmatprep.subr.mxu0 0.0
        %2002 = vmatpush1.msra.mxu0 0.0
        %2003 = vmatprep.subr.mxu0 0.0
        %2004 = vmatpush1.msra.mxu0 0.0
        %2005 = vmatprep.subr.mxu0 0.0
        %2006 = vmatpush1.msra.mxu0 0.0
        %2007 = vmatprep.subr.mxu0 0.0
        %2008 = vmatpush1.msra.mxu0 0.0
        %2009 = vmatprep.subr.mxu0 0.0
        %2010 = vmatpush1.msra.mxu0 0.0
        %2011 = vmatprep.subr.mxu0 0.0
        %2012 = vmatpush1.msra.mxu0 0.0
        %2013 = vmatprep.subr.mxu0 0.0
        %2014 = vmatpush1.msra.mxu0 0.0
        %2015 = vmatprep.subr.mxu0 0.0
        %2016 = vmatpush1.msra.mxu0 %v354
        %2017 = vmatprep.subr.mxu0 0.0
        %2018 = vmatpush1.msra.mxu0 %v353
        %2019 = vmatprep.subr.mxu0 0.0
        %2020 = vmatpush2.msra.mxu0 0.0
        %2021 = vmatprep.subr.mxu0 0.0
        %2022 = vmatpush2.msra.mxu0 0.0
        %2023 = vmatprep.subr.mxu0 0.0
        %2024 = vmatpush2.msra.mxu0 0.0
        %2025 = vmatprep.subr.mxu0 0.0
        %2026 = vmatpush2.msra.mxu0 0.0
        %2027 = vmatprep.subr.mxu0 0.0
        %2028 = vmatpush2.msra.mxu0 0.0
        %2029 = vmatprep.subr.mxu0 0.0
        %2030 = vmatpush2.msra.mxu0 0.0
        %2031 = vmatprep.subr.mxu0 0.0
        %2032 = vmatpush2.msra.mxu0 0.0
        %2033 = vmatprep.subr.mxu0 0.0
        %2034 = vmatpush2.msra.mxu0 0.0
        %2035 = vmatprep.subr.mxu0 0.0
        %2036 = vmatpush2.msra.mxu0 0.0
        %2037 = vmatprep.subr.mxu0 0.0
        %2038 = vmatpush2.msra.mxu0 0.0
        %2039 = vmatprep.subr.mxu0 0.0
        %2040 = vmatpush2.msra.mxu0 0.0
        %2041 = vmatprep.subr.mxu0 0.0
        %2042 = vmatpush2.msra.mxu0 0.0
        %2043 = vmatprep.subr.mxu0 0.0
        %2044 = vmatpush2.msra.mxu0 0.0
        %2045 = vmatprep.subr.mxu0 0.0
        %2046 = vmatpush2.msra.mxu0 0.0
        %2047 = vmatprep.subr.mxu0 0.0
        %2048 = vmatpush2.msra.mxu0 0.0
        %2049 = vmatprep.subr.mxu0 0.0
        %2050 = vmatpush2.msra.mxu0 0.0
        %2051 = vmatprep.mubr.f32.mxu0 0.0
        %2052 = vmatmul.mubr.f32.gmra.mxu0 %v1976
        %v2053 = vpop.f32.mrf.mxu0
        %v2054 = vadd.f32 0.0, %v2053
        %v2055 = vpop.f32.mrf.mxu0
        %2056 = vmatprep.mubr.f32.mxu0 0.0
        %2057 = vmatmul.mubr.f32.gmra.mxu0 %v1979
        %v2058 = vpop.f32.mrf.mxu0
        %v2059 = vadd.f32 0.0, %v2058
        %v2060 = vpop.f32.mrf.mxu0
        %2061 = vmatprep.mubr.f32.mxu0 0.0
        %2062 = vmatmul.mubr.f32.gmra.mxu0 %v1982
        %v2063 = vpop.f32.mrf.mxu0
        %v2064 = vadd.f32 0.0, %v2063
        %v2065 = vpop.f32.mrf.mxu0
        %2066 = vmatprep.mubr.f32.mxu0 0.0
        %2067 = vmatmul.mubr.f32.gmra.mxu0 %v1985
        %v2068 = vpop.f32.mrf.mxu0
        %v2069 = vadd.f32 0.0, %v2068
        %v2070 = vpop.f32.mrf.mxu0
        %2071 = vdwg.mxu0
        %s2072 = scalar_lea.vmem %s318, 256 [#allocation4]
        %2073 = vst.msk [vmem:[%s2072] sm:$0xff] %vm552, %v2054
        %2074 = vst.msk [vmem:[%s2072 + $0x8] sm:$0xff] %vm552, %v2059
        %2075 = vst.msk [vmem:[%s2072 + $0x10] sm:$0xff] %vm552, %v2064
        %2076 = vst.msk [vmem:[%s2072 + $0x18] sm:$0xff] %vm552, %v2069
        %s2077 = scalar_lea.vmem %s336, 144
        %v2078 = vld [vmem:[%s2077] sm:$0xff]
        %v2079 = vld [vmem:[%s2077 + $0x8] sm:$0xff]
        %2080 = vmatprep.subr.mxu0 0.0
        %2081 = vmatpush1.msra.mxu0 0.0
        %2082 = vmatprep.subr.mxu0 0.0
        %2083 = vmatpush1.msra.mxu0 0.0
        %2084 = vmatprep.subr.mxu0 0.0
        %2085 = vmatpush1.msra.mxu0 0.0
        %2086 = vmatprep.subr.mxu0 0.0
        %2087 = vmatpush1.msra.mxu0 0.0
        %2088 = vmatprep.subr.mxu0 0.0
        %2089 = vmatpush1.msra.mxu0 0.0
        %2090 = vmatprep.subr.mxu0 0.0
        %2091 = vmatpush1.msra.mxu0 0.0
        %2092 = vmatprep.subr.mxu0 0.0
        %2093 = vmatpush1.msra.mxu0 0.0
        %2094 = vmatprep.subr.mxu0 0.0
        %2095 = vmatpush1.msra.mxu0 0.0
        %2096 = vmatprep.subr.mxu0 0.0
        %2097 = vmatpush1.msra.mxu0 0.0
        %2098 = vmatprep.subr.mxu0 0.0
        %2099 = vmatpush1.msra.mxu0 0.0
        %2100 = vmatprep.subr.mxu0 0.0
        %2101 = vmatpush1.msra.mxu0 0.0
        %2102 = vmatprep.subr.mxu0 0.0
        %2103 = vmatpush1.msra.mxu0 0.0
        %2104 = vmatprep.subr.mxu0 0.0
        %2105 = vmatpush1.msra.mxu0 0.0
        %2106 = vmatprep.subr.mxu0 0.0
        %2107 = vmatpush1.msra.mxu0 0.0
        %2108 = vmatprep.subr.mxu0 0.0
        %2109 = vmatpush1.msra.mxu0 %v2079
        %2110 = vmatprep.subr.mxu0 0.0
        %2111 = vmatpush1.msra.mxu0 %v2078
        %2112 = vmatprep.subr.mxu0 0.0
        %2113 = vmatpush2.msra.mxu0 0.0
        %2114 = vmatprep.subr.mxu0 0.0
        %2115 = vmatpush2.msra.mxu0 0.0
        %2116 = vmatprep.subr.mxu0 0.0
        %2117 = vmatpush2.msra.mxu0 0.0
        %2118 = vmatprep.subr.mxu0 0.0
        %2119 = vmatpush2.msra.mxu0 0.0
        %2120 = vmatprep.subr.mxu0 0.0
        %2121 = vmatpush2.msra.mxu0 0.0
        %2122 = vmatprep.subr.mxu0 0.0
        %2123 = vmatpush2.msra.mxu0 0.0
        %2124 = vmatprep.subr.mxu0 0.0
        %2125 = vmatpush2.msra.mxu0 0.0
        %2126 = vmatprep.subr.mxu0 0.0
        %2127 = vmatpush2.msra.mxu0 0.0
        %2128 = vmatprep.subr.mxu0 0.0
        %2129 = vmatpush2.msra.mxu0 0.0
        %2130 = vmatprep.subr.mxu0 0.0
        %2131 = vmatpush2.msra.mxu0 0.0
        %2132 = vmatprep.subr.mxu0 0.0
        %2133 = vmatpush2.msra.mxu0 0.0
        %2134 = vmatprep.subr.mxu0 0.0
        %2135 = vmatpush2.msra.mxu0 0.0
        %2136 = vmatprep.subr.mxu0 0.0
        %2137 = vmatpush2.msra.mxu0 0.0
        %2138 = vmatprep.subr.mxu0 0.0
        %2139 = vmatpush2.msra.mxu0 0.0
        %2140 = vmatprep.subr.mxu0 0.0
        %2141 = vmatpush2.msra.mxu0 0.0
        %2142 = vmatprep.subr.mxu0 0.0
        %2143 = vmatpush2.msra.mxu0 0.0
        %2144 = vmatprep.mubr.f32.mxu0 0.0
        %2145 = vmatmul.mubr.f32.gmra.mxu0 %v359
        %v2146 = vpop.f32.mrf.mxu0
        %v2147 = vadd.f32 0.0, %v2146
        %v2148 = vpop.f32.mrf.mxu0
        %2149 = vmatprep.mubr.f32.mxu0 0.0
        %2150 = vmatmul.mubr.f32.gmra.mxu0 %v362
        %v2151 = vpop.f32.mrf.mxu0
        %v2152 = vadd.f32 0.0, %v2151
        %v2153 = vpop.f32.mrf.mxu0
        %2154 = vmatprep.mubr.f32.mxu0 0.0
        %2155 = vmatmul.mubr.f32.gmra.mxu0 %v365
        %v2156 = vpop.f32.mrf.mxu0
        %v2157 = vadd.f32 0.0, %v2156
        %v2158 = vpop.f32.mrf.mxu0
        %2159 = vmatprep.mubr.f32.mxu0 0.0
        %2160 = vmatmul.mubr.f32.gmra.mxu0 %v368
        %v2161 = vpop.f32.mrf.mxu0
        %v2162 = vadd.f32 0.0, %v2161
        %v2163 = vpop.f32.mrf.mxu0
        %2164 = vdwg.mxu0
        %v2166 = vsel %vm357, %v2147, 0
        %v2169 = vsel %vm357, %v2152, 0
        %v2172 = vsel %vm357, %v2157, 0
        %v2175 = vsel %vm357, %v2162, 0
        %2177 = vmatprep.subr.mxu0 0.0
        %2178 = vmatpush1.msra.mxu0 0.0
        %2179 = vmatprep.subr.mxu0 0.0
        %2180 = vmatpush1.msra.mxu0 0.0
        %2181 = vmatprep.subr.mxu0 0.0
        %2182 = vmatpush1.msra.mxu0 0.0
        %2183 = vmatprep.subr.mxu0 0.0
        %2184 = vmatpush1.msra.mxu0 0.0
        %2185 = vmatprep.subr.mxu0 0.0
        %2186 = vmatpush1.msra.mxu0 0.0
        %2187 = vmatprep.subr.mxu0 0.0
        %2188 = vmatpush1.msra.mxu0 0.0
        %2189 = vmatprep.subr.mxu0 0.0
        %2190 = vmatpush1.msra.mxu0 0.0
        %2191 = vmatprep.subr.mxu0 0.0
        %2192 = vmatpush1.msra.mxu0 0.0
        %2193 = vmatprep.subr.mxu0 0.0
        %2194 = vmatpush1.msra.mxu0 0.0
        %2195 = vmatprep.subr.mxu0 0.0
        %2196 = vmatpush1.msra.mxu0 0.0
        %2197 = vmatprep.subr.mxu0 0.0
        %2198 = vmatpush1.msra.mxu0 0.0
        %2199 = vmatprep.subr.mxu0 0.0
        %2200 = vmatpush1.msra.mxu0 0.0
        %2201 = vmatprep.subr.mxu0 0.0
        %2202 = vmatpush1.msra.mxu0 0.0
        %2203 = vmatprep.subr.mxu0 0.0
        %2204 = vmatpush1.msra.mxu0 0.0
        %2205 = vmatprep.subr.mxu0 0.0
        %2206 = vmatpush1.msra.mxu0 %v354
        %2207 = vmatprep.subr.mxu0 0.0
        %2208 = vmatpush1.msra.mxu0 %v353
        %2209 = vmatprep.subr.mxu0 0.0
        %2210 = vmatpush2.msra.mxu0 0.0
        %2211 = vmatprep.subr.mxu0 0.0
        %2212 = vmatpush2.msra.mxu0 0.0
        %2213 = vmatprep.subr.mxu0 0.0
        %2214 = vmatpush2.msra.mxu0 0.0
        %2215 = vmatprep.subr.mxu0 0.0
        %2216 = vmatpush2.msra.mxu0 0.0
        %2217 = vmatprep.subr.mxu0 0.0
        %2218 = vmatpush2.msra.mxu0 0.0
        %2219 = vmatprep.subr.mxu0 0.0
        %2220 = vmatpush2.msra.mxu0 0.0
        %2221 = vmatprep.subr.mxu0 0.0
        %2222 = vmatpush2.msra.mxu0 0.0
        %2223 = vmatprep.subr.mxu0 0.0
        %2224 = vmatpush2.msra.mxu0 0.0
        %2225 = vmatprep.subr.mxu0 0.0
        %2226 = vmatpush2.msra.mxu0 0.0
        %2227 = vmatprep.subr.mxu0 0.0
        %2228 = vmatpush2.msra.mxu0 0.0
        %2229 = vmatprep.subr.mxu0 0.0
        %2230 = vmatpush2.msra.mxu0 0.0
        %2231 = vmatprep.subr.mxu0 0.0
        %2232 = vmatpush2.msra.mxu0 0.0
        %2233 = vmatprep.subr.mxu0 0.0
        %2234 = vmatpush2.msra.mxu0 0.0
        %2235 = vmatprep.subr.mxu0 0.0
        %2236 = vmatpush2.msra.mxu0 0.0
        %2237 = vmatprep.subr.mxu0 0.0
        %2238 = vmatpush2.msra.mxu0 0.0
        %2239 = vmatprep.subr.mxu0 0.0
        %2240 = vmatpush2.msra.mxu0 0.0
        %2241 = vmatprep.mubr.f32.mxu0 0.0
        %2242 = vmatmul.mubr.f32.gmra.mxu0 %v2166
        %v2243 = vpop.f32.mrf.mxu0
        %v2244 = vadd.f32 0.0, %v2243
        %v2245 = vpop.f32.mrf.mxu0
        %2246 = vmatprep.mubr.f32.mxu0 0.0
        %2247 = vmatmul.mubr.f32.gmra.mxu0 %v2169
        %v2248 = vpop.f32.mrf.mxu0
        %v2249 = vadd.f32 0.0, %v2248
        %v2250 = vpop.f32.mrf.mxu0
        %2251 = vmatprep.mubr.f32.mxu0 0.0
        %2252 = vmatmul.mubr.f32.gmra.mxu0 %v2172
        %v2253 = vpop.f32.mrf.mxu0
        %v2254 = vadd.f32 0.0, %v2253
        %v2255 = vpop.f32.mrf.mxu0
        %2256 = vmatprep.mubr.f32.mxu0 0.0
        %2257 = vmatmul.mubr.f32.gmra.mxu0 %v2175
        %v2258 = vpop.f32.mrf.mxu0
        %v2259 = vadd.f32 0.0, %v2258
        %v2260 = vpop.f32.mrf.mxu0
        %2261 = vdwg.mxu0
        %s2262 = scalar_lea.vmem %s318, 288 [#allocation4]
        %2263 = vst.msk [vmem:[%s2262] sm:$0xff] %vm552, %v2244
        %2264 = vst.msk [vmem:[%s2262 + $0x8] sm:$0xff] %vm552, %v2249
        %2265 = vst.msk [vmem:[%s2262 + $0x10] sm:$0xff] %vm552, %v2254
        %2266 = vst.msk [vmem:[%s2262 + $0x18] sm:$0xff] %vm552, %v2259
        %s2267 = scalar_lea.vmem %s336, 160
        %v2268 = vld [vmem:[%s2267] sm:$0xff]
        %v2269 = vld [vmem:[%s2267 + $0x8] sm:$0xff]
        %2270 = vmatprep.subr.mxu0 0.0
        %2271 = vmatpush1.msra.mxu0 0.0
        %2272 = vmatprep.subr.mxu0 0.0
        %2273 = vmatpush1.msra.mxu0 0.0
        %2274 = vmatprep.subr.mxu0 0.0
        %2275 = vmatpush1.msra.mxu0 0.0
        %2276 = vmatprep.subr.mxu0 0.0
        %2277 = vmatpush1.msra.mxu0 0.0
        %2278 = vmatprep.subr.mxu0 0.0
        %2279 = vmatpush1.msra.mxu0 0.0
        %2280 = vmatprep.subr.mxu0 0.0
        %2281 = vmatpush1.msra.mxu0 0.0
        %2282 = vmatprep.subr.mxu0 0.0
        %2283 = vmatpush1.msra.mxu0 0.0
        %2284 = vmatprep.subr.mxu0 0.0
        %2285 = vmatpush1.msra.mxu0 0.0
        %2286 = vmatprep.subr.mxu0 0.0
        %2287 = vmatpush1.msra.mxu0 0.0
        %2288 = vmatprep.subr.mxu0 0.0
        %2289 = vmatpush1.msra.mxu0 0.0
        %2290 = vmatprep.subr.mxu0 0.0
        %2291 = vmatpush1.msra.mxu0 0.0
        %2292 = vmatprep.subr.mxu0 0.0
        %2293 = vmatpush1.msra.mxu0 0.0
        %2294 = vmatprep.subr.mxu0 0.0
        %2295 = vmatpush1.msra.mxu0 0.0
        %2296 = vmatprep.subr.mxu0 0.0
        %2297 = vmatpush1.msra.mxu0 0.0
        %2298 = vmatprep.subr.mxu0 0.0
        %2299 = vmatpush1.msra.mxu0 %v2269
        %2300 = vmatprep.subr.mxu0 0.0
        %2301 = vmatpush1.msra.mxu0 %v2268
        %2302 = vmatprep.subr.mxu0 0.0
        %2303 = vmatpush2.msra.mxu0 0.0
        %2304 = vmatprep.subr.mxu0 0.0
        %2305 = vmatpush2.msra.mxu0 0.0
        %2306 = vmatprep.subr.mxu0 0.0
        %2307 = vmatpush2.msra.mxu0 0.0
        %2308 = vmatprep.subr.mxu0 0.0
        %2309 = vmatpush2.msra.mxu0 0.0
        %2310 = vmatprep.subr.mxu0 0.0
        %2311 = vmatpush2.msra.mxu0 0.0
        %2312 = vmatprep.subr.mxu0 0.0
        %2313 = vmatpush2.msra.mxu0 0.0
        %2314 = vmatprep.subr.mxu0 0.0
        %2315 = vmatpush2.msra.mxu0 0.0
        %2316 = vmatprep.subr.mxu0 0.0
        %2317 = vmatpush2.msra.mxu0 0.0
        %2318 = vmatprep.subr.mxu0 0.0
        %2319 = vmatpush2.msra.mxu0 0.0
        %2320 = vmatprep.subr.mxu0 0.0
        %2321 = vmatpush2.msra.mxu0 0.0
        %2322 = vmatprep.subr.mxu0 0.0
        %2323 = vmatpush2.msra.mxu0 0.0
        %2324 = vmatprep.subr.mxu0 0.0
        %2325 = vmatpush2.msra.mxu0 0.0
        %2326 = vmatprep.subr.mxu0 0.0
        %2327 = vmatpush2.msra.mxu0 0.0
        %2328 = vmatprep.subr.mxu0 0.0
        %2329 = vmatpush2.msra.mxu0 0.0
        %2330 = vmatprep.subr.mxu0 0.0
        %2331 = vmatpush2.msra.mxu0 0.0
        %2332 = vmatprep.subr.mxu0 0.0
        %2333 = vmatpush2.msra.mxu0 0.0
        %2334 = vmatprep.mubr.f32.mxu0 0.0
        %2335 = vmatmul.mubr.f32.gmra.mxu0 %v359
        %v2336 = vpop.f32.mrf.mxu0
        %v2337 = vadd.f32 0.0, %v2336
        %v2338 = vpop.f32.mrf.mxu0
        %2339 = vmatprep.mubr.f32.mxu0 0.0
        %2340 = vmatmul.mubr.f32.gmra.mxu0 %v362
        %v2341 = vpop.f32.mrf.mxu0
        %v2342 = vadd.f32 0.0, %v2341
        %v2343 = vpop.f32.mrf.mxu0
        %2344 = vmatprep.mubr.f32.mxu0 0.0
        %2345 = vmatmul.mubr.f32.gmra.mxu0 %v365
        %v2346 = vpop.f32.mrf.mxu0
        %v2347 = vadd.f32 0.0, %v2346
        %v2348 = vpop.f32.mrf.mxu0
        %2349 = vmatprep.mubr.f32.mxu0 0.0
        %2350 = vmatmul.mubr.f32.gmra.mxu0 %v368
        %v2351 = vpop.f32.mrf.mxu0
        %v2352 = vadd.f32 0.0, %v2351
        %v2353 = vpop.f32.mrf.mxu0
        %2354 = vdwg.mxu0
        %v2356 = vsel %vm357, %v2337, 0
        %v2359 = vsel %vm357, %v2342, 0
        %v2362 = vsel %vm357, %v2347, 0
        %v2365 = vsel %vm357, %v2352, 0
        %2367 = vmatprep.subr.mxu0 0.0
        %2368 = vmatpush1.msra.mxu0 0.0
        %2369 = vmatprep.subr.mxu0 0.0
        %2370 = vmatpush1.msra.mxu0 0.0
        %2371 = vmatprep.subr.mxu0 0.0
        %2372 = vmatpush1.msra.mxu0 0.0
        %2373 = vmatprep.subr.mxu0 0.0
        %2374 = vmatpush1.msra.mxu0 0.0
        %2375 = vmatprep.subr.mxu0 0.0
        %2376 = vmatpush1.msra.mxu0 0.0
        %2377 = vmatprep.subr.mxu0 0.0
        %2378 = vmatpush1.msra.mxu0 0.0
        %2379 = vmatprep.subr.mxu0 0.0
        %2380 = vmatpush1.msra.mxu0 0.0
        %2381 = vmatprep.subr.mxu0 0.0
        %2382 = vmatpush1.msra.mxu0 0.0
        %2383 = vmatprep.subr.mxu0 0.0
        %2384 = vmatpush1.msra.mxu0 0.0
        %2385 = vmatprep.subr.mxu0 0.0
        %2386 = vmatpush1.msra.mxu0 0.0
        %2387 = vmatprep.subr.mxu0 0.0
        %2388 = vmatpush1.msra.mxu0 0.0
        %2389 = vmatprep.subr.mxu0 0.0
        %2390 = vmatpush1.msra.mxu0 0.0
        %2391 = vmatprep.subr.mxu0 0.0
        %2392 = vmatpush1.msra.mxu0 0.0
        %2393 = vmatprep.subr.mxu0 0.0
        %2394 = vmatpush1.msra.mxu0 0.0
        %2395 = vmatprep.subr.mxu0 0.0
        %2396 = vmatpush1.msra.mxu0 %v354
        %2397 = vmatprep.subr.mxu0 0.0
        %2398 = vmatpush1.msra.mxu0 %v353
        %2399 = vmatprep.subr.mxu0 0.0
        %2400 = vmatpush2.msra.mxu0 0.0
        %2401 = vmatprep.subr.mxu0 0.0
        %2402 = vmatpush2.msra.mxu0 0.0
        %2403 = vmatprep.subr.mxu0 0.0
        %2404 = vmatpush2.msra.mxu0 0.0
        %2405 = vmatprep.subr.mxu0 0.0
        %2406 = vmatpush2.msra.mxu0 0.0
        %2407 = vmatprep.subr.mxu0 0.0
        %2408 = vmatpush2.msra.mxu0 0.0
        %2409 = vmatprep.subr.mxu0 0.0
        %2410 = vmatpush2.msra.mxu0 0.0
        %2411 = vmatprep.subr.mxu0 0.0
        %2412 = vmatpush2.msra.mxu0 0.0
        %2413 = vmatprep.subr.mxu0 0.0
        %2414 = vmatpush2.msra.mxu0 0.0
        %2415 = vmatprep.subr.mxu0 0.0
        %2416 = vmatpush2.msra.mxu0 0.0
        %2417 = vmatprep.subr.mxu0 0.0
        %2418 = vmatpush2.msra.mxu0 0.0
        %2419 = vmatprep.subr.mxu0 0.0
        %2420 = vmatpush2.msra.mxu0 0.0
        %2421 = vmatprep.subr.mxu0 0.0
        %2422 = vmatpush2.msra.mxu0 0.0
        %2423 = vmatprep.subr.mxu0 0.0
        %2424 = vmatpush2.msra.mxu0 0.0
        %2425 = vmatprep.subr.mxu0 0.0
        %2426 = vmatpush2.msra.mxu0 0.0
        %2427 = vmatprep.subr.mxu0 0.0
        %2428 = vmatpush2.msra.mxu0 0.0
        %2429 = vmatprep.subr.mxu0 0.0
        %2430 = vmatpush2.msra.mxu0 0.0
        %2431 = vmatprep.mubr.f32.mxu0 0.0
        %2432 = vmatmul.mubr.f32.gmra.mxu0 %v2356
        %v2433 = vpop.f32.mrf.mxu0
        %v2434 = vadd.f32 0.0, %v2433
        %v2435 = vpop.f32.mrf.mxu0
        %2436 = vmatprep.mubr.f32.mxu0 0.0
        %2437 = vmatmul.mubr.f32.gmra.mxu0 %v2359
        %v2438 = vpop.f32.mrf.mxu0
        %v2439 = vadd.f32 0.0, %v2438
        %v2440 = vpop.f32.mrf.mxu0
        %2441 = vmatprep.mubr.f32.mxu0 0.0
        %2442 = vmatmul.mubr.f32.gmra.mxu0 %v2362
        %v2443 = vpop.f32.mrf.mxu0
        %v2444 = vadd.f32 0.0, %v2443
        %v2445 = vpop.f32.mrf.mxu0
        %2446 = vmatprep.mubr.f32.mxu0 0.0
        %2447 = vmatmul.mubr.f32.gmra.mxu0 %v2365
        %v2448 = vpop.f32.mrf.mxu0
        %v2449 = vadd.f32 0.0, %v2448
        %v2450 = vpop.f32.mrf.mxu0
        %2451 = vdwg.mxu0
        %s2452 = scalar_lea.vmem %s318, 320 [#allocation4]
        %2453 = vst.msk [vmem:[%s2452] sm:$0xff] %vm552, %v2434
        %2454 = vst.msk [vmem:[%s2452 + $0x8] sm:$0xff] %vm552, %v2439
        %2455 = vst.msk [vmem:[%s2452 + $0x10] sm:$0xff] %vm552, %v2444
        %2456 = vst.msk [vmem:[%s2452 + $0x18] sm:$0xff] %vm552, %v2449
        %s2457 = scalar_lea.vmem %s336, 176
        %v2458 = vld [vmem:[%s2457] sm:$0xff]
        %v2459 = vld [vmem:[%s2457 + $0x8] sm:$0xff]
        %2460 = vmatprep.subr.mxu0 0.0
        %2461 = vmatpush1.msra.mxu0 0.0
        %2462 = vmatprep.subr.mxu0 0.0
        %2463 = vmatpush1.msra.mxu0 0.0
        %2464 = vmatprep.subr.mxu0 0.0
        %2465 = vmatpush1.msra.mxu0 0.0
        %2466 = vmatprep.subr.mxu0 0.0
        %2467 = vmatpush1.msra.mxu0 0.0
        %2468 = vmatprep.subr.mxu0 0.0
        %2469 = vmatpush1.msra.mxu0 0.0
        %2470 = vmatprep.subr.mxu0 0.0
        %2471 = vmatpush1.msra.mxu0 0.0
        %2472 = vmatprep.subr.mxu0 0.0
        %2473 = vmatpush1.msra.mxu0 0.0
        %2474 = vmatprep.subr.mxu0 0.0
        %2475 = vmatpush1.msra.mxu0 0.0
        %2476 = vmatprep.subr.mxu0 0.0
        %2477 = vmatpush1.msra.mxu0 0.0
        %2478 = vmatprep.subr.mxu0 0.0
        %2479 = vmatpush1.msra.mxu0 0.0
        %2480 = vmatprep.subr.mxu0 0.0
        %2481 = vmatpush1.msra.mxu0 0.0
        %2482 = vmatprep.subr.mxu0 0.0
        %2483 = vmatpush1.msra.mxu0 0.0
        %2484 = vmatprep.subr.mxu0 0.0
        %2485 = vmatpush1.msra.mxu0 0.0
        %2486 = vmatprep.subr.mxu0 0.0
        %2487 = vmatpush1.msra.mxu0 0.0
        %2488 = vmatprep.subr.mxu0 0.0
        %2489 = vmatpush1.msra.mxu0 %v2459
        %2490 = vmatprep.subr.mxu0 0.0
        %2491 = vmatpush1.msra.mxu0 %v2458
        %2492 = vmatprep.subr.mxu0 0.0
        %2493 = vmatpush2.msra.mxu0 0.0
        %2494 = vmatprep.subr.mxu0 0.0
        %2495 = vmatpush2.msra.mxu0 0.0
        %2496 = vmatprep.subr.mxu0 0.0
        %2497 = vmatpush2.msra.mxu0 0.0
        %2498 = vmatprep.subr.mxu0 0.0
        %2499 = vmatpush2.msra.mxu0 0.0
        %2500 = vmatprep.subr.mxu0 0.0
        %2501 = vmatpush2.msra.mxu0 0.0
        %2502 = vmatprep.subr.mxu0 0.0
        %2503 = vmatpush2.msra.mxu0 0.0
        %2504 = vmatprep.subr.mxu0 0.0
        %2505 = vmatpush2.msra.mxu0 0.0
        %2506 = vmatprep.subr.mxu0 0.0
        %2507 = vmatpush2.msra.mxu0 0.0
        %2508 = vmatprep.subr.mxu0 0.0
        %2509 = vmatpush2.msra.mxu0 0.0
        %2510 = vmatprep.subr.mxu0 0.0
        %2511 = vmatpush2.msra.mxu0 0.0
        %2512 = vmatprep.subr.mxu0 0.0
        %2513 = vmatpush2.msra.mxu0 0.0
        %2514 = vmatprep.subr.mxu0 0.0
        %2515 = vmatpush2.msra.mxu0 0.0
        %2516 = vmatprep.subr.mxu0 0.0
        %2517 = vmatpush2.msra.mxu0 0.0
        %2518 = vmatprep.subr.mxu0 0.0
        %2519 = vmatpush2.msra.mxu0 0.0
        %2520 = vmatprep.subr.mxu0 0.0
        %2521 = vmatpush2.msra.mxu0 0.0
        %2522 = vmatprep.subr.mxu0 0.0
        %2523 = vmatpush2.msra.mxu0 0.0
        %2524 = vmatprep.mubr.f32.mxu0 0.0
        %2525 = vmatmul.mubr.f32.gmra.mxu0 %v359
        %v2526 = vpop.f32.mrf.mxu0
        %v2527 = vadd.f32 0.0, %v2526
        %v2528 = vpop.f32.mrf.mxu0
        %2529 = vmatprep.mubr.f32.mxu0 0.0
        %2530 = vmatmul.mubr.f32.gmra.mxu0 %v362
        %v2531 = vpop.f32.mrf.mxu0
        %v2532 = vadd.f32 0.0, %v2531
        %v2533 = vpop.f32.mrf.mxu0
        %2534 = vmatprep.mubr.f32.mxu0 0.0
        %2535 = vmatmul.mubr.f32.gmra.mxu0 %v365
        %v2536 = vpop.f32.mrf.mxu0
        %v2537 = vadd.f32 0.0, %v2536
        %v2538 = vpop.f32.mrf.mxu0
        %2539 = vmatprep.mubr.f32.mxu0 0.0
        %2540 = vmatmul.mubr.f32.gmra.mxu0 %v368
        %v2541 = vpop.f32.mrf.mxu0
        %v2542 = vadd.f32 0.0, %v2541
        %v2543 = vpop.f32.mrf.mxu0
        %2544 = vdwg.mxu0
        %v2546 = vsel %vm357, %v2527, 0
        %v2549 = vsel %vm357, %v2532, 0
        %v2552 = vsel %vm357, %v2537, 0
        %v2555 = vsel %vm357, %v2542, 0
        %2557 = vmatprep.subr.mxu0 0.0
        %2558 = vmatpush1.msra.mxu0 0.0
        %2559 = vmatprep.subr.mxu0 0.0
        %2560 = vmatpush1.msra.mxu0 0.0
        %2561 = vmatprep.subr.mxu0 0.0
        %2562 = vmatpush1.msra.mxu0 0.0
        %2563 = vmatprep.subr.mxu0 0.0
        %2564 = vmatpush1.msra.mxu0 0.0
        %2565 = vmatprep.subr.mxu0 0.0
        %2566 = vmatpush1.msra.mxu0 0.0
        %2567 = vmatprep.subr.mxu0 0.0
        %2568 = vmatpush1.msra.mxu0 0.0
        %2569 = vmatprep.subr.mxu0 0.0
        %2570 = vmatpush1.msra.mxu0 0.0
        %2571 = vmatprep.subr.mxu0 0.0
        %2572 = vmatpush1.msra.mxu0 0.0
        %2573 = vmatprep.subr.mxu0 0.0
        %2574 = vmatpush1.msra.mxu0 0.0
        %2575 = vmatprep.subr.mxu0 0.0
        %2576 = vmatpush1.msra.mxu0 0.0
        %2577 = vmatprep.subr.mxu0 0.0
        %2578 = vmatpush1.msra.mxu0 0.0
        %2579 = vmatprep.subr.mxu0 0.0
        %2580 = vmatpush1.msra.mxu0 0.0
        %2581 = vmatprep.subr.mxu0 0.0
        %2582 = vmatpush1.msra.mxu0 0.0
        %2583 = vmatprep.subr.mxu0 0.0
        %2584 = vmatpush1.msra.mxu0 0.0
        %2585 = vmatprep.subr.mxu0 0.0
        %2586 = vmatpush1.msra.mxu0 %v354
        %2587 = vmatprep.subr.mxu0 0.0
        %2588 = vmatpush1.msra.mxu0 %v353
        %2589 = vmatprep.subr.mxu0 0.0
        %2590 = vmatpush2.msra.mxu0 0.0
        %2591 = vmatprep.subr.mxu0 0.0
        %2592 = vmatpush2.msra.mxu0 0.0
        %2593 = vmatprep.subr.mxu0 0.0
        %2594 = vmatpush2.msra.mxu0 0.0
        %2595 = vmatprep.subr.mxu0 0.0
        %2596 = vmatpush2.msra.mxu0 0.0
        %2597 = vmatprep.subr.mxu0 0.0
        %2598 = vmatpush2.msra.mxu0 0.0
        %2599 = vmatprep.subr.mxu0 0.0
        %2600 = vmatpush2.msra.mxu0 0.0
        %2601 = vmatprep.subr.mxu0 0.0
        %2602 = vmatpush2.msra.mxu0 0.0
        %2603 = vmatprep.subr.mxu0 0.0
        %2604 = vmatpush2.msra.mxu0 0.0
        %2605 = vmatprep.subr.mxu0 0.0
        %2606 = vmatpush2.msra.mxu0 0.0
        %2607 = vmatprep.subr.mxu0 0.0
        %2608 = vmatpush2.msra.mxu0 0.0
        %2609 = vmatprep.subr.mxu0 0.0
        %2610 = vmatpush2.msra.mxu0 0.0
        %2611 = vmatprep.subr.mxu0 0.0
        %2612 = vmatpush2.msra.mxu0 0.0
        %2613 = vmatprep.subr.mxu0 0.0
        %2614 = vmatpush2.msra.mxu0 0.0
        %2615 = vmatprep.subr.mxu0 0.0
        %2616 = vmatpush2.msra.mxu0 0.0
        %2617 = vmatprep.subr.mxu0 0.0
        %2618 = vmatpush2.msra.mxu0 0.0
        %2619 = vmatprep.subr.mxu0 0.0
        %2620 = vmatpush2.msra.mxu0 0.0
        %2621 = vmatprep.mubr.f32.mxu0 0.0
        %2622 = vmatmul.mubr.f32.gmra.mxu0 %v2546
        %v2623 = vpop.f32.mrf.mxu0
        %v2624 = vadd.f32 0.0, %v2623
        %v2625 = vpop.f32.mrf.mxu0
        %2626 = vmatprep.mubr.f32.mxu0 0.0
        %2627 = vmatmul.mubr.f32.gmra.mxu0 %v2549
        %v2628 = vpop.f32.mrf.mxu0
        %v2629 = vadd.f32 0.0, %v2628
        %v2630 = vpop.f32.mrf.mxu0
        %2631 = vmatprep.mubr.f32.mxu0 0.0
        %2632 = vmatmul.mubr.f32.gmra.mxu0 %v2552
        %v2633 = vpop.f32.mrf.mxu0
        %v2634 = vadd.f32 0.0, %v2633
        %v2635 = vpop.f32.mrf.mxu0
        %2636 = vmatprep.mubr.f32.mxu0 0.0
        %2637 = vmatmul.mubr.f32.gmra.mxu0 %v2555
        %v2638 = vpop.f32.mrf.mxu0
        %v2639 = vadd.f32 0.0, %v2638
        %v2640 = vpop.f32.mrf.mxu0
        %2641 = vdwg.mxu0
        %s2642 = scalar_lea.vmem %s318, 352 [#allocation4]
        %2643 = vst.msk [vmem:[%s2642] sm:$0xff] %vm552, %v2624
        %2644 = vst.msk [vmem:[%s2642 + $0x8] sm:$0xff] %vm552, %v2629
        %2645 = vst.msk [vmem:[%s2642 + $0x10] sm:$0xff] %vm552, %v2634
        %2646 = vst.msk [vmem:[%s2642 + $0x18] sm:$0xff] %vm552, %v2639
        %s2647 = scalar_lea.vmem %s336, 192
        %v2648 = vld [vmem:[%s2647] sm:$0xff]
        %v2649 = vld [vmem:[%s2647 + $0x8] sm:$0xff]
        %2650 = vmatprep.subr.mxu0 0.0
        %2651 = vmatpush1.msra.mxu0 0.0
        %2652 = vmatprep.subr.mxu0 0.0
        %2653 = vmatpush1.msra.mxu0 0.0
        %2654 = vmatprep.subr.mxu0 0.0
        %2655 = vmatpush1.msra.mxu0 0.0
        %2656 = vmatprep.subr.mxu0 0.0
        %2657 = vmatpush1.msra.mxu0 0.0
        %2658 = vmatprep.subr.mxu0 0.0
        %2659 = vmatpush1.msra.mxu0 0.0
        %2660 = vmatprep.subr.mxu0 0.0
        %2661 = vmatpush1.msra.mxu0 0.0
        %2662 = vmatprep.subr.mxu0 0.0
        %2663 = vmatpush1.msra.mxu0 0.0
        %2664 = vmatprep.subr.mxu0 0.0
        %2665 = vmatpush1.msra.mxu0 0.0
        %2666 = vmatprep.subr.mxu0 0.0
        %2667 = vmatpush1.msra.mxu0 0.0
        %2668 = vmatprep.subr.mxu0 0.0
        %2669 = vmatpush1.msra.mxu0 0.0
        %2670 = vmatprep.subr.mxu0 0.0
        %2671 = vmatpush1.msra.mxu0 0.0
        %2672 = vmatprep.subr.mxu0 0.0
        %2673 = vmatpush1.msra.mxu0 0.0
        %2674 = vmatprep.subr.mxu0 0.0
        %2675 = vmatpush1.msra.mxu0 0.0
        %2676 = vmatprep.subr.mxu0 0.0
        %2677 = vmatpush1.msra.mxu0 0.0
        %2678 = vmatprep.subr.mxu0 0.0
        %2679 = vmatpush1.msra.mxu0 %v2649
        %2680 = vmatprep.subr.mxu0 0.0
        %2681 = vmatpush1.msra.mxu0 %v2648
        %2682 = vmatprep.subr.mxu0 0.0
        %2683 = vmatpush2.msra.mxu0 0.0
        %2684 = vmatprep.subr.mxu0 0.0
        %2685 = vmatpush2.msra.mxu0 0.0
        %2686 = vmatprep.subr.mxu0 0.0
        %2687 = vmatpush2.msra.mxu0 0.0
        %2688 = vmatprep.subr.mxu0 0.0
        %2689 = vmatpush2.msra.mxu0 0.0
        %2690 = vmatprep.subr.mxu0 0.0
        %2691 = vmatpush2.msra.mxu0 0.0
        %2692 = vmatprep.subr.mxu0 0.0
        %2693 = vmatpush2.msra.mxu0 0.0
        %2694 = vmatprep.subr.mxu0 0.0
        %2695 = vmatpush2.msra.mxu0 0.0
        %2696 = vmatprep.subr.mxu0 0.0
        %2697 = vmatpush2.msra.mxu0 0.0
        %2698 = vmatprep.subr.mxu0 0.0
        %2699 = vmatpush2.msra.mxu0 0.0
        %2700 = vmatprep.subr.mxu0 0.0
        %2701 = vmatpush2.msra.mxu0 0.0
        %2702 = vmatprep.subr.mxu0 0.0
        %2703 = vmatpush2.msra.mxu0 0.0
        %2704 = vmatprep.subr.mxu0 0.0
        %2705 = vmatpush2.msra.mxu0 0.0
        %2706 = vmatprep.subr.mxu0 0.0
        %2707 = vmatpush2.msra.mxu0 0.0
        %2708 = vmatprep.subr.mxu0 0.0
        %2709 = vmatpush2.msra.mxu0 0.0
        %2710 = vmatprep.subr.mxu0 0.0
        %2711 = vmatpush2.msra.mxu0 0.0
        %2712 = vmatprep.subr.mxu0 0.0
        %2713 = vmatpush2.msra.mxu0 0.0
        %2714 = vmatprep.mubr.f32.mxu0 0.0
        %2715 = vmatmul.mubr.f32.gmra.mxu0 %v359
        %v2716 = vpop.f32.mrf.mxu0
        %v2717 = vadd.f32 0.0, %v2716
        %v2718 = vpop.f32.mrf.mxu0
        %2719 = vmatprep.mubr.f32.mxu0 0.0
        %2720 = vmatmul.mubr.f32.gmra.mxu0 %v362
        %v2721 = vpop.f32.mrf.mxu0
        %v2722 = vadd.f32 0.0, %v2721
        %v2723 = vpop.f32.mrf.mxu0
        %2724 = vmatprep.mubr.f32.mxu0 0.0
        %2725 = vmatmul.mubr.f32.gmra.mxu0 %v365
        %v2726 = vpop.f32.mrf.mxu0
        %v2727 = vadd.f32 0.0, %v2726
        %v2728 = vpop.f32.mrf.mxu0
        %2729 = vmatprep.mubr.f32.mxu0 0.0
        %2730 = vmatmul.mubr.f32.gmra.mxu0 %v368
        %v2731 = vpop.f32.mrf.mxu0
        %v2732 = vadd.f32 0.0, %v2731
        %v2733 = vpop.f32.mrf.mxu0
        %2734 = vdwg.mxu0
        %v2736 = vsel %vm357, %v2717, 0
        %v2739 = vsel %vm357, %v2722, 0
        %v2742 = vsel %vm357, %v2727, 0
        %v2745 = vsel %vm357, %v2732, 0
        %2747 = vmatprep.subr.mxu0 0.0
        %2748 = vmatpush1.msra.mxu0 0.0
        %2749 = vmatprep.subr.mxu0 0.0
        %2750 = vmatpush1.msra.mxu0 0.0
        %2751 = vmatprep.subr.mxu0 0.0
        %2752 = vmatpush1.msra.mxu0 0.0
        %2753 = vmatprep.subr.mxu0 0.0
        %2754 = vmatpush1.msra.mxu0 0.0
        %2755 = vmatprep.subr.mxu0 0.0
        %2756 = vmatpush1.msra.mxu0 0.0
        %2757 = vmatprep.subr.mxu0 0.0
        %2758 = vmatpush1.msra.mxu0 0.0
        %2759 = vmatprep.subr.mxu0 0.0
        %2760 = vmatpush1.msra.mxu0 0.0
        %2761 = vmatprep.subr.mxu0 0.0
        %2762 = vmatpush1.msra.mxu0 0.0
        %2763 = vmatprep.subr.mxu0 0.0
        %2764 = vmatpush1.msra.mxu0 0.0
        %2765 = vmatprep.subr.mxu0 0.0
        %2766 = vmatpush1.msra.mxu0 0.0
        %2767 = vmatprep.subr.mxu0 0.0
        %2768 = vmatpush1.msra.mxu0 0.0
        %2769 = vmatprep.subr.mxu0 0.0
        %2770 = vmatpush1.msra.mxu0 0.0
        %2771 = vmatprep.subr.mxu0 0.0
        %2772 = vmatpush1.msra.mxu0 0.0
        %2773 = vmatprep.subr.mxu0 0.0
        %2774 = vmatpush1.msra.mxu0 0.0
        %2775 = vmatprep.subr.mxu0 0.0
        %2776 = vmatpush1.msra.mxu0 %v354
        %2777 = vmatprep.subr.mxu0 0.0
        %2778 = vmatpush1.msra.mxu0 %v353
        %2779 = vmatprep.subr.mxu0 0.0
        %2780 = vmatpush2.msra.mxu0 0.0
        %2781 = vmatprep.subr.mxu0 0.0
        %2782 = vmatpush2.msra.mxu0 0.0
        %2783 = vmatprep.subr.mxu0 0.0
        %2784 = vmatpush2.msra.mxu0 0.0
        %2785 = vmatprep.subr.mxu0 0.0
        %2786 = vmatpush2.msra.mxu0 0.0
        %2787 = vmatprep.subr.mxu0 0.0
        %2788 = vmatpush2.msra.mxu0 0.0
        %2789 = vmatprep.subr.mxu0 0.0
        %2790 = vmatpush2.msra.mxu0 0.0
        %2791 = vmatprep.subr.mxu0 0.0
        %2792 = vmatpush2.msra.mxu0 0.0
        %2793 = vmatprep.subr.mxu0 0.0
        %2794 = vmatpush2.msra.mxu0 0.0
        %2795 = vmatprep.subr.mxu0 0.0
        %2796 = vmatpush2.msra.mxu0 0.0
        %2797 = vmatprep.subr.mxu0 0.0
        %2798 = vmatpush2.msra.mxu0 0.0
        %2799 = vmatprep.subr.mxu0 0.0
        %2800 = vmatpush2.msra.mxu0 0.0
        %2801 = vmatprep.subr.mxu0 0.0
        %2802 = vmatpush2.msra.mxu0 0.0
        %2803 = vmatprep.subr.mxu0 0.0
        %2804 = vmatpush2.msra.mxu0 0.0
        %2805 = vmatprep.subr.mxu0 0.0
        %2806 = vmatpush2.msra.mxu0 0.0
        %2807 = vmatprep.subr.mxu0 0.0
        %2808 = vmatpush2.msra.mxu0 0.0
        %2809 = vmatprep.subr.mxu0 0.0
        %2810 = vmatpush2.msra.mxu0 0.0
        %2811 = vmatprep.mubr.f32.mxu0 0.0
        %2812 = vmatmul.mubr.f32.gmra.mxu0 %v2736
        %v2813 = vpop.f32.mrf.mxu0
        %v2814 = vadd.f32 0.0, %v2813
        %v2815 = vpop.f32.mrf.mxu0
        %2816 = vmatprep.mubr.f32.mxu0 0.0
        %2817 = vmatmul.mubr.f32.gmra.mxu0 %v2739
        %v2818 = vpop.f32.mrf.mxu0
        %v2819 = vadd.f32 0.0, %v2818
        %v2820 = vpop.f32.mrf.mxu0
        %2821 = vmatprep.mubr.f32.mxu0 0.0
        %2822 = vmatmul.mubr.f32.gmra.mxu0 %v2742
        %v2823 = vpop.f32.mrf.mxu0
        %v2824 = vadd.f32 0.0, %v2823
        %v2825 = vpop.f32.mrf.mxu0
        %2826 = vmatprep.mubr.f32.mxu0 0.0
        %2827 = vmatmul.mubr.f32.gmra.mxu0 %v2745
        %v2828 = vpop.f32.mrf.mxu0
        %v2829 = vadd.f32 0.0, %v2828
        %v2830 = vpop.f32.mrf.mxu0
        %2831 = vdwg.mxu0
        %v2832 = vsub.f32 1.0, %v2814
        %v2833 = vsub.f32 1.0, %v2819
        %v2834 = vsub.f32 1.0, %v2824
        %v2835 = vsub.f32 1.0, %v2829
        %v2836 = vld [vmem:[%s2262] sm:$0xff]
        %v2837 = vld [vmem:[%s2262 + $0x8] sm:$0xff]
        %v2838 = vld [vmem:[%s2262 + $0x10] sm:$0xff]
        %v2839 = vld [vmem:[%s2262 + $0x18] sm:$0xff]
        %v2840 = vld [vmem:[%s330] sm:$0xff]
        %v2841 = vld [vmem:[%s330 + $0x8] sm:$0xff]
        %v2842 = vld [vmem:[%s330 + $0x10] sm:$0xff]
        %v2843 = vld [vmem:[%s330 + $0x18] sm:$0xff]
        %v2844 = vsub.f32 %v2840, 0.485
        %v2845 = vsub.f32 %v2841, 0.485
        %v2846 = vsub.f32 %v2842, 0.485
        %v2847 = vsub.f32 %v2843, 0.485
        %v2848 = vmul.f32 %v2844, 4.366812
        %v2849 = vmul.f32 %v2845, 4.366812
        %v2850 = vmul.f32 %v2846, 4.366812
        %v2851 = vmul.f32 %v2847, 4.366812
        %v2852 = vld [vmem:[%s318] sm:$0xff]
        %v2853 = vld [vmem:[%s318 + $0x8] sm:$0xff]
        %v2854 = vld [vmem:[%s318 + $0x10] sm:$0xff]
        %v2855 = vld [vmem:[%s318 + $0x18] sm:$0xff]
        %v2856 = vmul.f32 %v2852, %v2848
        %v2857 = vmul.f32 %v2853, %v2849
        %v2858 = vmul.f32 %v2854, %v2850
        %v2859 = vmul.f32 %v2855, %v2851
        %v2860 = vadd.f32 %v2836, %v2856
        %v2861 = vadd.f32 %v2837, %v2857
        %v2862 = vadd.f32 %v2838, %v2858
        %v2863 = vadd.f32 %v2839, %v2859
        %s2864 = scalar_lea.vmem %s330, 32
        %v2865 = vld [vmem:[%s2864] sm:$0xff]
        %v2866 = vld [vmem:[%s2864 + $0x8] sm:$0xff]
        %v2867 = vld [vmem:[%s2864 + $0x10] sm:$0xff]
        %v2868 = vld [vmem:[%s2864 + $0x18] sm:$0xff]
        %v2869 = vsub.f32 %v2865, 0.456
        %v2870 = vsub.f32 %v2866, 0.456
        %v2871 = vsub.f32 %v2867, 0.456
        %v2872 = vsub.f32 %v2868, 0.456
        %v2873 = vmul.f32 %v2869, 4.464286
        %v2874 = vmul.f32 %v2870, 4.464286
        %v2875 = vmul.f32 %v2871, 4.464286
        %v2876 = vmul.f32 %v2872, 4.464286
        %v2877 = vld [vmem:[%s742] sm:$0xff]
        %v2878 = vld [vmem:[%s742 + $0x8] sm:$0xff]
        %v2879 = vld [vmem:[%s742 + $0x10] sm:$0xff]
        %v2880 = vld [vmem:[%s742 + $0x18] sm:$0xff]
        %v2881 = vmul.f32 %v2877, %v2873
        %v2882 = vmul.f32 %v2878, %v2874
        %v2883 = vmul.f32 %v2879, %v2875
        %v2884 = vmul.f32 %v2880, %v2876
        %v2885 = vadd.f32 %v2860, %v2881
        %v2886 = vadd.f32 %v2861, %v2882
        %v2887 = vadd.f32 %v2862, %v2883
        %v2888 = vadd.f32 %v2863, %v2884
        %s2889 = scalar_lea.vmem %s330, 64
        %v2890 = vld [vmem:[%s2889] sm:$0xff]
        %v2891 = vld [vmem:[%s2889 + $0x8] sm:$0xff]
        %v2892 = vld [vmem:[%s2889 + $0x10] sm:$0xff]
        %v2893 = vld [vmem:[%s2889 + $0x18] sm:$0xff]
        %v2894 = vsub.f32 %v2890, 0.406
        %v2895 = vsub.f32 %v2891, 0.406
        %v2896 = vsub.f32 %v2892, 0.406
        %v2897 = vsub.f32 %v2893, 0.406
        %v2898 = vmul.f32 %v2894, 4.4444447
        %v2899 = vmul.f32 %v2895, 4.4444447
        %v2900 = vmul.f32 %v2896, 4.4444447
        %v2901 = vmul.f32 %v2897, 4.4444447
        %v2902 = vld [vmem:[%s932] sm:$0xff]
        %v2903 = vld [vmem:[%s932 + $0x8] sm:$0xff]
        %v2904 = vld [vmem:[%s932 + $0x10] sm:$0xff]
        %v2905 = vld [vmem:[%s932 + $0x18] sm:$0xff]
        %v2906 = vmul.f32 %v2902, %v2898
        %v2907 = vmul.f32 %v2903, %v2899
        %v2908 = vmul.f32 %v2904, %v2900
        %v2909 = vmul.f32 %v2905, %v2901
        %v2910 = vadd.f32 %v2885, %v2906
        %v2911 = vadd.f32 %v2886, %v2907
        %v2912 = vadd.f32 %v2887, %v2908
        %v2913 = vadd.f32 %v2888, %v2909
        %v2914 = vmul.f32 %v2910, 0.229
        %v2915 = vmul.f32 %v2911, 0.229
        %v2916 = vmul.f32 %v2912, 0.229
        %v2917 = vmul.f32 %v2913, 0.229
        %v2918 = vadd.f32 %v2914, 0.485
        %v2919 = vadd.f32 %v2915, 0.485
        %v2920 = vadd.f32 %v2916, 0.485
        %v2921 = vadd.f32 %v2917, 0.485
        %v2922 = vmax.f32 %v2918, 0.0
        %v2923 = vmax.f32 %v2919, 0.0
        %v2924 = vmax.f32 %v2920, 0.0
        %v2925 = vmax.f32 %v2921, 0.0
        %v2926 = vmin.f32 %v2922, 1.0
        %v2927 = vmin.f32 %v2923, 1.0
        %v2928 = vmin.f32 %v2924, 1.0
        %v2929 = vmin.f32 %v2925, 1.0
        %v2930 = vmul.f32 %v2926, %v2814
        %v2931 = vmul.f32 %v2927, %v2819
        %v2932 = vmul.f32 %v2928, %v2824
        %v2933 = vmul.f32 %v2929, %v2829
        %v2934 = vmul.f32 %v2840, %v2832
        %v2935 = vmul.f32 %v2841, %v2833
        %v2936 = vmul.f32 %v2842, %v2834
        %v2937 = vmul.f32 %v2843, %v2835
        %v2938 = vadd.f32 %v2930, %v2934
        %v2939 = vadd.f32 %v2931, %v2935
        %v2940 = vadd.f32 %v2932, %v2936
        %v2941 = vadd.f32 %v2933, %v2937
        %2942 = vst.msk [vmem:[%s311] sm:$0xff] %vm552, %v2938
        %2943 = vst.msk [vmem:[%s311 + $0x8] sm:$0xff] %vm552, %v2939
        %2944 = vst.msk [vmem:[%s311 + $0x10] sm:$0xff] %vm552, %v2940
        %2945 = vst.msk [vmem:[%s311 + $0x18] sm:$0xff] %vm552, %v2941
        %v2946 = vld [vmem:[%s2452] sm:$0xff]
        %v2947 = vld [vmem:[%s2452 + $0x8] sm:$0xff]
        %v2948 = vld [vmem:[%s2452 + $0x10] sm:$0xff]
        %v2949 = vld [vmem:[%s2452 + $0x18] sm:$0xff]
        %v2950 = vld [vmem:[%s330] sm:$0xff]
        %v2951 = vld [vmem:[%s330 + $0x8] sm:$0xff]
        %v2952 = vld [vmem:[%s330 + $0x10] sm:$0xff]
        %v2953 = vld [vmem:[%s330 + $0x18] sm:$0xff]
        %v2954 = vsub.f32 %v2950, 0.485
        %v2955 = vsub.f32 %v2951, 0.485
        %v2956 = vsub.f32 %v2952, 0.485
        %v2957 = vsub.f32 %v2953, 0.485
        %v2958 = vmul.f32 %v2954, 4.366812
        %v2959 = vmul.f32 %v2955, 4.366812
        %v2960 = vmul.f32 %v2956, 4.366812
        %v2961 = vmul.f32 %v2957, 4.366812
        %v2962 = vld [vmem:[%s1122] sm:$0xff]
        %v2963 = vld [vmem:[%s1122 + $0x8] sm:$0xff]
        %v2964 = vld [vmem:[%s1122 + $0x10] sm:$0xff]
        %v2965 = vld [vmem:[%s1122 + $0x18] sm:$0xff]
        %v2966 = vmul.f32 %v2962, %v2958
        %v2967 = vmul.f32 %v2963, %v2959
        %v2968 = vmul.f32 %v2964, %v2960
        %v2969 = vmul.f32 %v2965, %v2961
        %v2970 = vadd.f32 %v2946, %v2966
        %v2971 = vadd.f32 %v2947, %v2967
        %v2972 = vadd.f32 %v2948, %v2968
        %v2973 = vadd.f32 %v2949, %v2969
        %v2974 = vld [vmem:[%s2864] sm:$0xff]
        %v2975 = vld [vmem:[%s2864 + $0x8] sm:$0xff]
        %v2976 = vld [vmem:[%s2864 + $0x10] sm:$0xff]
        %v2977 = vld [vmem:[%s2864 + $0x18] sm:$0xff]
        %v2978 = vsub.f32 %v2974, 0.456
        %v2979 = vsub.f32 %v2975, 0.456
        %v2980 = vsub.f32 %v2976, 0.456
        %v2981 = vsub.f32 %v2977, 0.456
        %v2982 = vmul.f32 %v2978, 4.464286
        %v2983 = vmul.f32 %v2979, 4.464286
        %v2984 = vmul.f32 %v2980, 4.464286
        %v2985 = vmul.f32 %v2981, 4.464286
        %v2986 = vld [vmem:[%s1312] sm:$0xff]
        %v2987 = vld [vmem:[%s1312 + $0x8] sm:$0xff]
        %v2988 = vld [vmem:[%s1312 + $0x10] sm:$0xff]
        %v2989 = vld [vmem:[%s1312 + $0x18] sm:$0xff]
        %v2990 = vmul.f32 %v2986, %v2982
        %v2991 = vmul.f32 %v2987, %v2983
        %v2992 = vmul.f32 %v2988, %v2984
        %v2993 = vmul.f32 %v2989, %v2985
        %v2994 = vadd.f32 %v2970, %v2990
        %v2995 = vadd.f32 %v2971, %v2991
        %v2996 = vadd.f32 %v2972, %v2992
        %v2997 = vadd.f32 %v2973, %v2993
        %v2998 = vld [vmem:[%s2889] sm:$0xff]
        %v2999 = vld [vmem:[%s2889 + $0x8] sm:$0xff]
        %v3000 = vld [vmem:[%s2889 + $0x10] sm:$0xff]
        %v3001 = vld [vmem:[%s2889 + $0x18] sm:$0xff]
        %v3002 = vsub.f32 %v2998, 0.406
        %v3003 = vsub.f32 %v2999, 0.406
        %v3004 = vsub.f32 %v3000, 0.406
        %v3005 = vsub.f32 %v3001, 0.406
        %v3006 = vmul.f32 %v3002, 4.4444447
        %v3007 = vmul.f32 %v3003, 4.4444447
        %v3008 = vmul.f32 %v3004, 4.4444447
        %v3009 = vmul.f32 %v3005, 4.4444447
        %v3010 = vld [vmem:[%s1502] sm:$0xff]
        %v3011 = vld [vmem:[%s1502 + $0x8] sm:$0xff]
        %v3012 = vld [vmem:[%s1502 + $0x10] sm:$0xff]
        %v3013 = vld [vmem:[%s1502 + $0x18] sm:$0xff]
        %v3014 = vmul.f32 %v3010, %v3006
        %v3015 = vmul.f32 %v3011, %v3007
        %v3016 = vmul.f32 %v3012, %v3008
        %v3017 = vmul.f32 %v3013, %v3009
        %v3018 = vadd.f32 %v2994, %v3014
        %v3019 = vadd.f32 %v2995, %v3015
        %v3020 = vadd.f32 %v2996, %v3016
        %v3021 = vadd.f32 %v2997, %v3017
        %v3022 = vmul.f32 %v3018, 0.224
        %v3023 = vmul.f32 %v3019, 0.224
        %v3024 = vmul.f32 %v3020, 0.224
        %v3025 = vmul.f32 %v3021, 0.224
        %v3026 = vadd.f32 %v3022, 0.456
        %v3027 = vadd.f32 %v3023, 0.456
        %v3028 = vadd.f32 %v3024, 0.456
        %v3029 = vadd.f32 %v3025, 0.456
        %v3030 = vmax.f32 %v3026, 0.0
        %v3031 = vmax.f32 %v3027, 0.0
        %v3032 = vmax.f32 %v3028, 0.0
        %v3033 = vmax.f32 %v3029, 0.0
        %v3034 = vmin.f32 %v3030, 1.0
        %v3035 = vmin.f32 %v3031, 1.0
        %v3036 = vmin.f32 %v3032, 1.0
        %v3037 = vmin.f32 %v3033, 1.0
        %v3038 = vmul.f32 %v3034, %v2814
        %v3039 = vmul.f32 %v3035, %v2819
        %v3040 = vmul.f32 %v3036, %v2824
        %v3041 = vmul.f32 %v3037, %v2829
        %v3042 = vmul.f32 %v2974, %v2832
        %v3043 = vmul.f32 %v2975, %v2833
        %v3044 = vmul.f32 %v2976, %v2834
        %v3045 = vmul.f32 %v2977, %v2835
        %v3046 = vadd.f32 %v3038, %v3042
        %v3047 = vadd.f32 %v3039, %v3043
        %v3048 = vadd.f32 %v3040, %v3044
        %v3049 = vadd.f32 %v3041, %v3045
        %s3050 = scalar_lea.vmem %s311, 32 [#allocation2]
        %3051 = vst.msk [vmem:[%s3050] sm:$0xff] %vm552, %v3046
        %3052 = vst.msk [vmem:[%s3050 + $0x8] sm:$0xff] %vm552, %v3047
        %3053 = vst.msk [vmem:[%s3050 + $0x10] sm:$0xff] %vm552, %v3048
        %3054 = vst.msk [vmem:[%s3050 + $0x18] sm:$0xff] %vm552, %v3049
        %v3055 = vld [vmem:[%s2642] sm:$0xff]
        %v3056 = vld [vmem:[%s2642 + $0x8] sm:$0xff]
        %v3057 = vld [vmem:[%s2642 + $0x10] sm:$0xff]
        %v3058 = vld [vmem:[%s2642 + $0x18] sm:$0xff]
        %v3059 = vld [vmem:[%s330] sm:$0xff]
        %v3060 = vld [vmem:[%s330 + $0x8] sm:$0xff]
        %v3061 = vld [vmem:[%s330 + $0x10] sm:$0xff]
        %v3062 = vld [vmem:[%s330 + $0x18] sm:$0xff]
        %v3063 = vsub.f32 %v3059, 0.485
        %v3064 = vsub.f32 %v3060, 0.485
        %v3065 = vsub.f32 %v3061, 0.485
        %v3066 = vsub.f32 %v3062, 0.485
        %v3067 = vmul.f32 %v3063, 4.366812
        %v3068 = vmul.f32 %v3064, 4.366812
        %v3069 = vmul.f32 %v3065, 4.366812
        %v3070 = vmul.f32 %v3066, 4.366812
        %v3071 = vld [vmem:[%s1692] sm:$0xff]
        %v3072 = vld [vmem:[%s1692 + $0x8] sm:$0xff]
        %v3073 = vld [vmem:[%s1692 + $0x10] sm:$0xff]
        %v3074 = vld [vmem:[%s1692 + $0x18] sm:$0xff]
        %v3075 = vmul.f32 %v3071, %v3067
        %v3076 = vmul.f32 %v3072, %v3068
        %v3077 = vmul.f32 %v3073, %v3069
        %v3078 = vmul.f32 %v3074, %v3070
        %v3079 = vadd.f32 %v3055, %v3075
        %v3080 = vadd.f32 %v3056, %v3076
        %v3081 = vadd.f32 %v3057, %v3077
        %v3082 = vadd.f32 %v3058, %v3078
        %v3083 = vld [vmem:[%s2864] sm:$0xff]
        %v3084 = vld [vmem:[%s2864 + $0x8] sm:$0xff]
        %v3085 = vld [vmem:[%s2864 + $0x10] sm:$0xff]
        %v3086 = vld [vmem:[%s2864 + $0x18] sm:$0xff]
        %v3087 = vsub.f32 %v3083, 0.456
        %v3088 = vsub.f32 %v3084, 0.456
        %v3089 = vsub.f32 %v3085, 0.456
        %v3090 = vsub.f32 %v3086, 0.456
        %v3091 = vmul.f32 %v3087, 4.464286
        %v3092 = vmul.f32 %v3088, 4.464286
        %v3093 = vmul.f32 %v3089, 4.464286
        %v3094 = vmul.f32 %v3090, 4.464286
        %v3095 = vld [vmem:[%s1882] sm:$0xff]
        %v3096 = vld [vmem:[%s1882 + $0x8] sm:$0xff]
        %v3097 = vld [vmem:[%s1882 + $0x10] sm:$0xff]
        %v3098 = vld [vmem:[%s1882 + $0x18] sm:$0xff]
        %v3099 = vmul.f32 %v3095, %v3091
        %v3100 = vmul.f32 %v3096, %v3092
        %v3101 = vmul.f32 %v3097, %v3093
        %v3102 = vmul.f32 %v3098, %v3094
        %v3103 = vadd.f32 %v3079, %v3099
        %v3104 = vadd.f32 %v3080, %v3100
        %v3105 = vadd.f32 %v3081, %v3101
        %v3106 = vadd.f32 %v3082, %v3102
        %v3107 = vld [vmem:[%s2889] sm:$0xff]
        %v3108 = vld [vmem:[%s2889 + $0x8] sm:$0xff]
        %v3109 = vld [vmem:[%s2889 + $0x10] sm:$0xff]
        %v3110 = vld [vmem:[%s2889 + $0x18] sm:$0xff]
        %v3111 = vsub.f32 %v3107, 0.406
        %v3112 = vsub.f32 %v3108, 0.406
        %v3113 = vsub.f32 %v3109, 0.406
        %v3114 = vsub.f32 %v3110, 0.406
        %v3115 = vmul.f32 %v3111, 4.4444447
        %v3116 = vmul.f32 %v3112, 4.4444447
        %v3117 = vmul.f32 %v3113, 4.4444447
        %v3118 = vmul.f32 %v3114, 4.4444447
        %v3119 = vld [vmem:[%s2072] sm:$0xff]
        %v3120 = vld [vmem:[%s2072 + $0x8] sm:$0xff]
        %v3121 = vld [vmem:[%s2072 + $0x10] sm:$0xff]
        %v3122 = vld [vmem:[%s2072 + $0x18] sm:$0xff]
        %v3123 = vmul.f32 %v3119, %v3115
        %v3124 = vmul.f32 %v3120, %v3116
        %v3125 = vmul.f32 %v3121, %v3117
        %v3126 = vmul.f32 %v3122, %v3118
        %v3127 = vadd.f32 %v3103, %v3123
        %v3128 = vadd.f32 %v3104, %v3124
        %v3129 = vadd.f32 %v3105, %v3125
        %v3130 = vadd.f32 %v3106, %v3126
        %v3131 = vmul.f32 %v3127, 0.225
        %v3132 = vmul.f32 %v3128, 0.225
        %v3133 = vmul.f32 %v3129, 0.225
        %v3134 = vmul.f32 %v3130, 0.225
        %v3135 = vadd.f32 %v3131, 0.406
        %v3136 = vadd.f32 %v3132, 0.406
        %v3137 = vadd.f32 %v3133, 0.406
        %v3138 = vadd.f32 %v3134, 0.406
        %v3139 = vmax.f32 %v3135, 0.0
        %v3140 = vmax.f32 %v3136, 0.0
        %v3141 = vmax.f32 %v3137, 0.0
        %v3142 = vmax.f32 %v3138, 0.0
        %v3143 = vmin.f32 %v3139, 1.0
        %v3144 = vmin.f32 %v3140, 1.0
        %v3145 = vmin.f32 %v3141, 1.0
        %v3146 = vmin.f32 %v3142, 1.0
        %v3147 = vmul.f32 %v3143, %v2814
        %v3148 = vmul.f32 %v3144, %v2819
        %v3149 = vmul.f32 %v3145, %v2824
        %v3150 = vmul.f32 %v3146, %v2829
        %v3151 = vmul.f32 %v3107, %v2832
        %v3152 = vmul.f32 %v3108, %v2833
        %v3153 = vmul.f32 %v3109, %v2834
        %v3154 = vmul.f32 %v3110, %v2835
        %v3155 = vadd.f32 %v3147, %v3151
        %v3156 = vadd.f32 %v3148, %v3152
        %v3157 = vadd.f32 %v3149, %v3153
        %v3158 = vadd.f32 %v3150, %v3154
        %s3159 = scalar_lea.vmem %s311, 64 [#allocation2]
        %3160 = vst.msk [vmem:[%s3159] sm:$0xff] %vm552, %v3155
        %3161 = vst.msk [vmem:[%s3159 + $0x8] sm:$0xff] %vm552, %v3156
        %3162 = vst.msk [vmem:[%s3159 + $0x10] sm:$0xff] %vm552, %v3157
        %3163 = vst.msk [vmem:[%s3159 + $0x18] sm:$0xff] %vm552, %v3158
        %s3164 = sand.u32 %s162, 1
        %s3165 = scalar_lea.sflag [#allocation3], %s3164
        %s3166 = sand.u32 %s162, 1
        %s3167 = smul.addr %s3166, 96
        %s3168 = scalar_lea.vmem [#allocation2], %s3167
        %s3169 = sand.u32 %s192, 1
        %s3170 = scalar_lea.sflag [#allocation5], %s3169
        %s3171 = sand.u32 %s192, 1
        %s3172 = smul.addr %s3171, 384
        %s3173 = scalar_lea.vmem [#allocation4], %s3172
        // Predicated region
        $region37: #{pct_net_forward.3} parent=35 // pred_check
          %p3174 = pneg %p172
        $region38: #{pct_net_forward.3} parent=35 // pred_check_branch
          %3176 = sbr.rel (%p3174) target = $region40
        $region39: #{pct_net_forward.3} parent=35 // pred_region
          %s3177 = smul.u32 4, %s29
          %s3179 = ssub.s32 1536, 1536
          %3180 = vsyncadd %s3165, %s3179
          %s3181 = sadd.s32 %s30, %s3177
          %s3182 = smul.addr %s28, 12
          %s3183 = sadd.s32 %s3181, %s3182
          %s3184 = smul.addr %s3183, 128
          %s3185 = scalar_lea.hbm %s4, %s3184
          %s3186 = sshll.u32 %s3168, 4
          %s3187 = int_to_ptr.vmem [resolvable:$true] %s3186
          %3192 = dma.vmem_to_hbm [thread:$0]  %s3187, 1536, %s3185, %s3165, 128, 128, 8
        $region40: #{pct_net_forward.3} parent=35 // pred_fallthru
          _
        // Predicated region
        $region41: #{pct_net_forward.3} parent=35 // pred_check
          %p3193 = pneg %p202
        $region42: #{pct_net_forward.3} parent=35 // pred_check_branch
          %3195 = sbr.rel (%p3193) target = $region44
        $region43: #{pct_net_forward.3} parent=35 // pred_region
          %s3196 = smul.u32 4, %s29
          %s3198 = ssub.s32 6144, 6144
          %3199 = vsyncadd %s3170, %s3198
          %s3200 = sadd.s32 %s30, %s3196
          %s3201 = smul.addr %s28, 48
          %s3202 = sadd.s32 %s3200, %s3201
          %s3203 = smul.addr %s3202, 128
          %s3204 = scalar_lea.hbm %s5, %s3203
          %s3205 = sshll.u32 %s3173, 4
          %s3206 = int_to_ptr.vmem [resolvable:$true] %s3205
          %3211 = dma.vmem_to_hbm [thread:$0]  %s3206, 6144, %s3204, %s3170, 128, 128, 8
        $region44: #{pct_net_forward.3} parent=35 // pred_fallthru
          _
      $region36: #{pct_net_forward.3} parent=5 // pred_fallthru
        _
      %p3212 = scmp.le.s32.totalorder 2, %s18
      // Predicated region
      $region45: #{pct_net_forward.3} parent=5 // pred_check
        %p3213 = pneg %p3212
      $region46: #{pct_net_forward.3} parent=5 // pred_check_branch
        %3215 = sbr.rel (%p3213) target = $region48
      $region47: #{pct_net_forward.3} parent=5 // pred_region
        %s3216 = ssub.s32 %s18, 2
        // Predicated region
        $region49: #{pct_net_forward.3} parent=47 // pred_check
          %p3217 = pneg %p178
        $region50: #{pct_net_forward.3} parent=47 // pred_check_branch
          %3219 = sbr.rel (%p3217) target = $region52
        $region51: #{pct_net_forward.3} parent=47 // pred_region
          %s3220 = sand.u32 %s163, 1
          %s3221 = scalar_lea.sflag [#allocation3], %s3220
          %s3222 = sand.u32 %s163, 1
          %s3223 = smul.addr %s3222, 96
          %s3224 = scalar_lea.vmem [#allocation2], %s3223
          %3225 = dma.done %s3221, 1536
        $region52: #{pct_net_forward.3} parent=47 // pred_fallthru
          _
        // Predicated region
        $region53: #{pct_net_forward.3} parent=47 // pred_check
          %p3226 = pneg %p208
        $region54: #{pct_net_forward.3} parent=47 // pred_check_branch
          %3228 = sbr.rel (%p3226) target = $region56
        $region55: #{pct_net_forward.3} parent=47 // pred_region
          %s3229 = sand.u32 %s193, 1
          %s3230 = scalar_lea.sflag [#allocation5], %s3229
          %s3231 = sand.u32 %s193, 1
          %s3232 = smul.addr %s3231, 384
          %s3233 = scalar_lea.vmem [#allocation4], %s3232
          %3234 = dma.done %s3230, 6144
        $region56: #{pct_net_forward.3} parent=47 // pred_fallthru
          _
      $region48: #{pct_net_forward.3} parent=5 // pred_fallthru
        _
    $region6: #{pct_net_forward.3} parent=1 // loop_footer
      %s22 = sadd.s32 1, %s18
    $region7: #{pct_net_forward.3} parent=1 // loop_footer_branch
      %17 = sbr.rel target = $region3
    $region8: #{pct_net_forward.3} parent=1 // loop_exit
      _
    %3235 = vsyncpa [#allocation3], 1
    %s3236 = scalar_lea.sflag [#allocation3], 1
    %3237 = vsyncpa %s3236, 1
    %3238 = vsyncpa [#allocation5], 1
    %s3239 = scalar_lea.sflag [#allocation5], 1
    %3240 = vsyncpa %s3239, 1

</llo_original>
